<compile_context>
chip_gen: v5e
topology: v5e:2x2
jax: 0.10.0
libtpu: 0.0.40
codegen_flags: <defaults>
</compile_context>

<pallas_src>
import numpy as np
import jax
import jax.numpy as jnp
from jax.experimental import pallas as pl
from jax.experimental.pallas import tpu as pltpu

N_HEADS = 8
LN_EPS = 1e-5
W_DTYPE = jnp.bfloat16     # storage/compute dtype for matmul weights (f32 accumulation)
ACT_DTYPE = jnp.bfloat16   # trg/src are streamed into the kernel at this dtype


# ----------------------- in-kernel math helpers -----------------------

def _layer_norm(x, w, b):
    # f32 statistics, biased variance (matches PyTorch LayerNorm).
    mu = jnp.mean(x, axis=-1, keepdims=True)
    var = jnp.mean((x - mu) ** 2, axis=-1, keepdims=True)
    return (x - mu) * jax.lax.rsqrt(var + LN_EPS) * w + b


def _matmul(x, w, b):
    # x: (N, Din) -> cast to w.dtype (bf16, no-op if already bf16); w: (Din, Dout) bf16;
    # b: (1, Dout) f32; f32 accumulation on the MXU.
    y = jax.lax.dot_general(x.astype(w.dtype), w, (((1,), (0,)), ((), ())),
                            preferred_element_type=jnp.float32)
    return y + b


def _attend(q, k, v, scale):
    """Multi-head attention; q: (tb, T, D), k/v: (tb, S, D), all f32.
    Static H=8 loop of batched einsums ('bqd,bkd->bqk' is the known-good Mosaic path);
    per-head outputs are assembled in registers with ONE concatenate (no partial-lane
    VMEM stores).  Softmax is exact (max-subtract, exp, exact divide)."""
    D = q.shape[-1]
    Dh = D // N_HEADS
    outs = []
    for h in range(N_HEADS):                      # static unroll, H = 8
        sl = slice(h * Dh, (h + 1) * Dh)
        qh = q[:, :, sl].astype(W_DTYPE)
        kh = k[:, :, sl].astype(W_DTYPE)
        vh = v[:, :, sl].astype(W_DTYPE)
        s = jnp.einsum('bqd,bkd->bqk', qh, kh,
                       preferred_element_type=jnp.float32) * scale
        s = s - jnp.max(s, axis=-1, keepdims=True)
        p = jnp.exp(s)
        p = p / jnp.sum(p, axis=-1, keepdims=True)
        outs.append(jnp.einsum('bqk,bkd->bqd', p.astype(W_DTYPE), vh,
                               preferred_element_type=jnp.float32))
    return jnp.concatenate(outs, axis=-1)          # (tb, T, D) f32, single full-width value


# ----------------------- fused decoder-stack + head kernel -----------------------

def decoder_kernel(trg_ref, src_ref,
                   sa_w, sa_b, sa_ow, sa_ob,
                   caq_w, caq_b, cakv_w, cakv_b, ca_ow, ca_ob,
                   l1_w, l1_b, l2_w, l2_b,
                   n1_w, n1_b, n2_w, n2_b, n3_w, n3_b,
                   fc1_w, fc1_b, fc2_w, fc2_b,
                   out_ref, h_ref):
    """grid = (batch_tiles, n_layers).  h_ref (f32 VMEM scratch) carries the hidden state
    across layers; the classification head runs fused on the last layer."""
    l = pl.program_id(1)

    @pl.when(l == 0)                              # trg only read on the first layer
    def _():
        h_ref[...] = trg_ref[...].astype(jnp.float32)

    x = h_ref[...]                                # (tb, T, D) f32 running hidden state
    mem = src_ref[...]                            # (tb, S, D) bf16 (goes straight to the MXU)
    tb, T, D = x.shape
    S = mem.shape[1]
    scale = 1.0 / float(np.sqrt(D // N_HEADS))

    # ---- self-attention (post-norm), fused QKV projection ----
    qkv = _matmul(x.reshape(tb * T, D), sa_w[0], sa_b[0])            # (tb*T, 3D)
    q = qkv[:, :D].reshape(tb, T, D)
    k = qkv[:, D:2 * D].reshape(tb, T, D)
    v = qkv[:, 2 * D:].reshape(tb, T, D)
    att = _attend(q, k, v, scale)
    sa = _matmul(att.reshape(tb * T, D), sa_ow[0], sa_ob[0]).reshape(tb, T, D)
    x = _layer_norm(x + sa, n1_w[0], n1_b[0])

    # ---- cross-attention, fused K/V projection of the memory ----
    q = _matmul(x.reshape(tb * T, D), caq_w[0], caq_b[0]).reshape(tb, T, D)
    kv = _matmul(mem.reshape(tb * S, D), cakv_w[0], cakv_b[0])       # (tb*S, 2D)
    k = kv[:, :D].reshape(tb, S, D)
    v = kv[:, D:].reshape(tb, S, D)
    att = _attend(q, k, v, scale)
    ca = _matmul(att.reshape(tb * T, D), ca_ow[0], ca_ob[0]).reshape(tb, T, D)
    x = _layer_norm(x + ca, n2_w[0], n2_b[0])

    # ---- feed-forward (relu), dropout = identity ----
    hmid = jnp.maximum(_matmul(x.reshape(tb * T, D), l1_w[0], l1_b[0]), 0.0)
    ff = _matmul(hmid, l2_w[0], l2_b[0]).reshape(tb, T, D)
    x = _layer_norm(x + ff, n3_w[0], n3_b[0])

    h_ref[...] = x

    # ---- fused classification head on trg[:, 0, :] at the last layer ----
    @pl.when(l == pl.num_programs(1) - 1)
    def _():
        x0 = x[:, 0, :]                                              # (tb, D)
        hh = jnp.maximum(_matmul(x0, fc1_w[...], fc1_b[...]), 0.0)
        out_ref[...] = _matmul(hh, fc2_w[...], fc2_b[...])


# ----------------------- wrapper -----------------------

LAYER_PARAM_NAMES = ('sa_w', 'sa_b', 'sa_ow', 'sa_ob',
                     'caq_w', 'caq_b', 'cakv_w', 'cakv_b', 'ca_ow', 'ca_ob',
                     'l1_w', 'l1_b', 'l2_w', 'l2_b',
                     'n1_w', 'n1_b', 'n2_w', 'n2_b', 'n3_w', 'n3_b')
HEAD_PARAM_NAMES = ('fc1_w', 'fc1_b', 'fc2_w', 'fc2_b')
_BIG_WEIGHT_NAMES = frozenset({'sa_w', 'l1_w', 'l2_w'})


def _derive_vmem_limit_bytes():
    """~7/8 of per-core physical VMEM (~112 MiB on v5e/v6e, ~56 MiB on v7x), leaving headroom
    for Mosaic internal scratch.  Falls back to the Mosaic default if the query is unavailable."""
    try:
        return int(pltpu.get_tpu_info().vmem_capacity_bytes * 7) // 8
    except Exception:
        return None


def decoder_forward(trg, src, params, *, block_b=None, vmem_limit_bytes=None,
                    deep_weight_buffering=False):
    B, T, D = trg.shape
    S = src.shape[1]
    L = params['sa_w'].shape[0]
    assert D % N_HEADS == 0

    # block_b: keep M = block_b*T as large as VMEM allows.  Default = B (single batch tile;
    # weights streamed exactly L times).  On v7x megacore use block_b = B//2 exactly.
    tb = B if block_b is None else block_b
    assert B % tb == 0

    if vmem_limit_bytes is None:
        vmem_limit_bytes = _derive_vmem_limit_bytes()

    layer_params = [params[n] for n in LAYER_PARAM_NAMES]
    head_params = [params[n] for n in HEAD_PARAM_NAMES]

    # Activations streamed in bf16; hidden state / residuals / LN stay f32 inside the kernel.
    trg_in = trg.astype(ACT_DTYPE)
    src_in = src.astype(ACT_DTYPE)

    in_specs = [pl.BlockSpec((tb, T, D), lambda b, l: (b, 0, 0)),
                pl.BlockSpec((tb, S, D), lambda b, l: (b, 0, 0))]
    for name in LAYER_PARAM_NAMES:
        p = params[name]
        kwargs = {}
        if deep_weight_buffering and name in _BIG_WEIGHT_NAMES:
            # v5e/v6e only (128 MiB VMEM): hide long FFN/QKV weight DMA behind prior layer.
            kwargs['pipeline_mode'] = pl.Buffered(3)
        in_specs.append(pl.BlockSpec((1,) + p.shape[1:], lambda b, l: (l, 0, 0), **kwargs))
    in_specs += [pl.BlockSpec(p.shape, lambda b, l: (0, 0)) for p in head_params]

    return pl.pallas_call(
        decoder_kernel,
        out_shape=jax.ShapeDtypeStruct((B, 2), jnp.float32),
        grid=(B // tb, L),
        in_specs=in_specs,
        out_specs=pl.BlockSpec((tb, 2), lambda b, l: (b, 0)),
        scratch_shapes=[pltpu.VMEM((tb, T, D), jnp.float32)],   # resident hidden state
        compiler_params=pltpu.CompilerParams(
            dimension_semantics=("parallel", "arbitrary"),
            vmem_limit_bytes=vmem_limit_bytes),
    )(trg_in, src_in, *layer_params, *head_params)


# ----------------------- deterministic parameter init -----------------------
# Weights stored pre-transposed as (Din, Dout) = torch_weight.T, matmul weights in bf16.

def init_params(key, n_layers, hid_dim):
    D = hid_dim
    f32, w16 = jnp.float32, W_DTYPE
    shapes = {
        'sa_w': ((n_layers, D, 3 * D), w16),   'sa_b': ((n_layers, 1, 3 * D), f32),
        'sa_ow': ((n_layers, D, D), w16),      'sa_ob': ((n_layers, 1, D), f32),
        'caq_w': ((n_layers, D, D), w16),      'caq_b': ((n_layers, 1, D), f32),
        'cakv_w': ((n_layers, D, 2 * D), w16), 'cakv_b': ((n_layers, 1, 2 * D), f32),
        'ca_ow': ((n_layers, D, D), w16),      'ca_ob': ((n_layers, 1, D), f32),
        'l1_w': ((n_layers, D, 4 * D), w16),   'l1_b': ((n_layers, 1, 4 * D), f32),
        'l2_w': ((n_layers, 4 * D, D), w16),   'l2_b': ((n_layers, 1, D), f32),
        'n1_w': ((n_layers, 1, D), f32), 'n1_b': ((n_layers, 1, D), f32),
        'n2_w': ((n_layers, 1, D), f32), 'n2_b': ((n_layers, 1, D), f32),
        'n3_w': ((n_layers, 1, D), f32), 'n3_b': ((n_layers, 1, D), f32),
        'fc1_w': ((D, D), w16), 'fc1_b': ((1, D), f32),
        'fc2_w': ((D, 2), w16), 'fc2_b': ((1, 2), f32),
    }
    ln_ones = {'n1_w', 'n2_w', 'n3_w'}
    ln_zeros = {'n1_b', 'n2_b', 'n3_b'}
    params = {}
    keys = jax.random.split(key, len(shapes))
    for k, (name, (shape, dt)) in zip(keys, shapes.items()):
        if name in ln_ones:
            params[name] = jnp.ones(shape, dt)
        elif name in ln_zeros:
            params[name] = jnp.zeros(shape, dt)
        else:
            params[name] = (0.05 * jax.random.normal(k, shape)).astype(dt)
    return params


# ----------------------- pure-JAX reference (mirrors the module at the kernel's precision) ---

def _ref_matmul(x, w, b):
    return jnp.einsum('...d,de->...e', x.astype(w.dtype), w,
                      preferred_element_type=jnp.float32) + b


def _ref_attn(q, k, v):
    B, T, D = q.shape
    S = k.shape[1]
    H, Dh = N_HEADS, D // N_HEADS
    qh = q.reshape(B, T, H, Dh).transpose(0, 2, 1, 3).astype(W_DTYPE)
    kh = k.reshape(B, S, H, Dh).transpose(0, 2, 1, 3).astype(W_DTYPE)
    vh = v.reshape(B, S, H, Dh).transpose(0, 2, 1, 3).astype(W_DTYPE)
    s = jnp.einsum('bhqd,bhkd->bhqk', qh, kh,
                   preferred_element_type=jnp.float32) / np.sqrt(Dh).astype(np.float32)
    p = jax.nn.softmax(s, axis=-1)
    o = jnp.einsum('bhqk,bhkd->bhqd', p.astype(W_DTYPE), vh,
                   preferred_element_type=jnp.float32)
    return o.transpose(0, 2, 1, 3).reshape(B, T, D)


def ref_forward(trg, src, params):
    # mirror the kernel's bf16 ingress of trg/src
    x = trg.astype(ACT_DTYPE).astype(jnp.float32)
    src_b = src.astype(ACT_DTYPE)
    D = trg.shape[-1]
    L = params['sa_w'].shape[0]
    for l in range(L):
        qkv = _ref_matmul(x, params['sa_w'][l], params['sa_b'][l])
        sa = _ref_attn(qkv[..., :D], qkv[..., D:2 * D], qkv[..., 2 * D:])
        sa = _ref_matmul(sa, params['sa_ow'][l], params['sa_ob'][l])
        x = _layer_norm(x + sa, params['n1_w'][l], params['n1_b'][l])

        q = _ref_matmul(x, params['caq_w'][l], params['caq_b'][l])
        kv = _ref_matmul(src_b, params['cakv_w'][l], params['cakv_b'][l])
        ca = _ref_attn(q, kv[..., :D], kv[..., D:])
        ca = _ref_matmul(ca, params['ca_ow'][l], params['ca_ob'][l])
        x = _layer_norm(x + ca, params['n2_w'][l], params['n2_b'][l])

        h = jax.nn.relu(_ref_matmul(x, params['l1_w'][l], params['l1_b'][l]))
        ff = _ref_matmul(h, params['l2_w'][l], params['l2_b'][l])
        x = _layer_norm(x + ff, params['n3_w'][l], params['n3_b'][l])
    x0 = x[:, 0, :]
    h = jax.nn.relu(_ref_matmul(x0, params['fc1_w'], params['fc1_b']))
    return _ref_matmul(h, params['fc2_w'], params['fc2_b'])


if __name__ == "__main__":
    B, T, S, D, L = 2, 8, 16, 32, 2   # batch, trg seq, src seq, hid_dim, n_layers
    key = jax.random.PRNGKey(0)
    kp, kt, ks = jax.random.split(key, 3)
    params = init_params(kp, L, D)
    trg = jax.random.normal(kt, (B, T, D), jnp.float32)
    src = jax.random.normal(ks, (B, S, D), jnp.float32)

    out = jax.block_until_ready(decoder_forward(trg, src, params))
    ref = jax.block_until_ready(ref_forward(trg, src, params))

    # Tolerance covers bf16 matmul rounding / accumulation-order differences.
    np.testing.assert_allclose(np.asarray(out), np.asarray(ref), rtol=5e-3, atol=5e-3)
    assert out.shape == (B, 2)
    print("KERNEL_OK")
</pallas_src>

<mosaic_0001>
module attributes {stable_mosaic.version = 11 : i64} {
  func.func @decoder_kernel(%arg0: i32, %arg1: i32, %arg2: memref<2x8x32xbf16, #tpu.memory_space<vmem>>, %arg3: memref<2x16x32xbf16, #tpu.memory_space<vmem>>, %arg4: memref<1x32x96xbf16, #tpu.memory_space<vmem>>, %arg5: memref<1x1x96xf32, #tpu.memory_space<vmem>>, %arg6: memref<1x32x32xbf16, #tpu.memory_space<vmem>>, %arg7: memref<1x1x32xf32, #tpu.memory_space<vmem>>, %arg8: memref<1x32x32xbf16, #tpu.memory_space<vmem>>, %arg9: memref<1x1x32xf32, #tpu.memory_space<vmem>>, %arg10: memref<1x32x64xbf16, #tpu.memory_space<vmem>>, %arg11: memref<1x1x64xf32, #tpu.memory_space<vmem>>, %arg12: memref<1x32x32xbf16, #tpu.memory_space<vmem>>, %arg13: memref<1x1x32xf32, #tpu.memory_space<vmem>>, %arg14: memref<1x32x128xbf16, #tpu.memory_space<vmem>>, %arg15: memref<1x1x128xf32, #tpu.memory_space<vmem>>, %arg16: memref<1x128x32xbf16, #tpu.memory_space<vmem>>, %arg17: memref<1x1x32xf32, #tpu.memory_space<vmem>>, %arg18: memref<1x1x32xf32, #tpu.memory_space<vmem>>, %arg19: memref<1x1x32xf32, #tpu.memory_space<vmem>>, %arg20: memref<1x1x32xf32, #tpu.memory_space<vmem>>, %arg21: memref<1x1x32xf32, #tpu.memory_space<vmem>>, %arg22: memref<1x1x32xf32, #tpu.memory_space<vmem>>, %arg23: memref<1x1x32xf32, #tpu.memory_space<vmem>>, %arg24: memref<32x32xbf16, #tpu.memory_space<vmem>>, %arg25: memref<1x32xf32, #tpu.memory_space<vmem>>, %arg26: memref<32x2xbf16, #tpu.memory_space<vmem>>, %arg27: memref<1x2xf32, #tpu.memory_space<vmem>>, %arg28: memref<2x2xf32, #tpu.memory_space<vmem>>, %arg29: memref<2x8x32xf32, #tpu.memory_space<vmem>>) attributes {dimension_semantics = [#tpu.dimension_semantics<parallel>, #tpu.dimension_semantics<arbitrary>], iteration_bounds = array<i64: 1, 2>, scalar_prefetch = 0 : i64, scratch_operands = 1 : i64, tpu.core_type = #tpu.core_type<tc>, window_params = [{transform_indices = @transform_0, window_bounds = array<i64: 2, 8, 32>}, {transform_indices = @transform_1, window_bounds = array<i64: 2, 16, 32>}, {transform_indices = @transform_2, window_bounds = array<i64: 1, 32, 96>}, {transform_indices = @transform_3, window_bounds = array<i64: 1, 1, 96>}, {transform_indices = @transform_4, window_bounds = array<i64: 1, 32, 32>}, {transform_indices = @transform_5, window_bounds = array<i64: 1, 1, 32>}, {transform_indices = @transform_6, window_bounds = array<i64: 1, 32, 32>}, {transform_indices = @transform_7, window_bounds = array<i64: 1, 1, 32>}, {transform_indices = @transform_8, window_bounds = array<i64: 1, 32, 64>}, {transform_indices = @transform_9, window_bounds = array<i64: 1, 1, 64>}, {transform_indices = @transform_10, window_bounds = array<i64: 1, 32, 32>}, {transform_indices = @transform_11, window_bounds = array<i64: 1, 1, 32>}, {transform_indices = @transform_12, window_bounds = array<i64: 1, 32, 128>}, {transform_indices = @transform_13, window_bounds = array<i64: 1, 1, 128>}, {transform_indices = @transform_14, window_bounds = array<i64: 1, 128, 32>}, {transform_indices = @transform_15, window_bounds = array<i64: 1, 1, 32>}, {transform_indices = @transform_16, window_bounds = array<i64: 1, 1, 32>}, {transform_indices = @transform_17, window_bounds = array<i64: 1, 1, 32>}, {transform_indices = @transform_18, window_bounds = array<i64: 1, 1, 32>}, {transform_indices = @transform_19, window_bounds = array<i64: 1, 1, 32>}, {transform_indices = @transform_20, window_bounds = array<i64: 1, 1, 32>}, {transform_indices = @transform_21, window_bounds = array<i64: 1, 1, 32>}, {pipeline_mode = #tpu.pipeline_mode<synchronous>, transform_indices = @transform_22, window_bounds = array<i64: 32, 32>}, {pipeline_mode = #tpu.pipeline_mode<synchronous>, transform_indices = @transform_23, window_bounds = array<i64: 1, 32>}, {pipeline_mode = #tpu.pipeline_mode<synchronous>, transform_indices = @transform_24, window_bounds = array<i64: 32, 2>}, {pipeline_mode = #tpu.pipeline_mode<synchronous>, transform_indices = @transform_25, window_bounds = array<i64: 1, 2>}, {transform_indices = @transform_26, window_bounds = array<i64: 2, 2>}]} {
    %c0_i32 = arith.constant 0 : i32
    %0 = arith.cmpi eq, %arg1, %c0_i32 : i32
    %1 = arith.extui %0 : i1 to i32
    %c0_i32_0 = arith.constant 0 : i32
    %2 = arith.cmpi ne, %1, %c0_i32_0 : i32
    scf.if %2 {
      %c0_172 = arith.constant 0 : index
      %c0_173 = arith.constant 0 : index
      %c0_174 = arith.constant 0 : index
      %495 = vector.load %arg2[%c0_172, %c0_173, %c0_174] : memref<2x8x32xbf16, #tpu.memory_space<vmem>>, vector<2x8x32xbf16>
      %496 = arith.extf %495 : vector<2x8x32xbf16> to vector<2x8x32xf32>
      %c0_175 = arith.constant 0 : index
      %c0_176 = arith.constant 0 : index
      %c0_177 = arith.constant 0 : index
      %497 = vector.load %arg29[%c0_175, %c0_176, %c0_177] : memref<2x8x32xf32, #tpu.memory_space<vmem>>, vector<2x8x32xf32>
      tpu.vector_store %arg29[%c0_175, %c0_176, %c0_177], %496 {strides = array<i32>} : memref<2x8x32xf32, #tpu.memory_space<vmem>>, vector<2x8x32xf32>,
    } else {
    }
    %c0 = arith.constant 0 : index
    %c0_1 = arith.constant 0 : index
    %c0_2 = arith.constant 0 : index
    %3 = vector.load %arg29[%c0, %c0_1, %c0_2] : memref<2x8x32xf32, #tpu.memory_space<vmem>>, vector<2x8x32xf32>
    %c0_3 = arith.constant 0 : index
    %c0_4 = arith.constant 0 : index
    %c0_5 = arith.constant 0 : index
    %4 = vector.load %arg3[%c0_3, %c0_4, %c0_5] : memref<2x16x32xbf16, #tpu.memory_space<vmem>>, vector<2x16x32xbf16>
    %5 = vector.shape_cast %3 : vector<2x8x32xf32> to vector<16x32xf32>
    %c0_6 = arith.constant 0 : index
    %c0_7 = arith.constant 0 : index
    %c0_8 = arith.constant 0 : index
    %6 = vector.load %arg4[%c0_6, %c0_7, %c0_8] : memref<1x32x96xbf16, #tpu.memory_space<vmem>>, vector<1x32x96xbf16>
    %7 = vector.shape_cast %6 : vector<1x32x96xbf16> to vector<32x96xbf16>
    %c0_9 = arith.constant 0 : index
    %c0_10 = arith.constant 0 : index
    %c0_11 = arith.constant 0 : index
    %8 = vector.load %arg5[%c0_9, %c0_10, %c0_11] : memref<1x1x96xf32, #tpu.memory_space<vmem>>, vector<1x1x96xf32>
    %9 = vector.shape_cast %8 : vector<1x1x96xf32> to vector<1x96xf32>
    %10 = arith.truncf %5 : vector<16x32xf32> to vector<16x32xbf16>
    %cst = arith.constant dense<0.000000e+00> : vector<16x96xf32>
    %11 = tpu.matmul %10, %7, %cst {dimension_numbers = #tpu.dot_dimension_numbers<[1], [0], [0], [1], [0, 0, 1, 1], [], []>} : vector<16x32xbf16>, vector<32x96xbf16>, vector<16x96xf32> -> vector<16x96xf32>
    %12 = vector.broadcast %9 : vector<1x96xf32> to vector<16x96xf32>
    %13 = arith.addf %11, %12 : vector<16x96xf32>
    %14 = vector.extract_strided_slice %13 {offsets = [0, 0], sizes = [16, 32], strides = [1, 1]} : vector<16x96xf32> to vector<16x32xf32>
    %15 = vector.shape_cast %14 : vector<16x32xf32> to vector<2x8x32xf32>
    %16 = vector.extract_strided_slice %13 {offsets = [0, 32], sizes = [16, 32], strides = [1, 1]} : vector<16x96xf32> to vector<16x32xf32>
    %17 = vector.shape_cast %16 : vector<16x32xf32> to vector<2x8x32xf32>
    %18 = vector.extract_strided_slice %13 {offsets = [0, 64], sizes = [16, 32], strides = [1, 1]} : vector<16x96xf32> to vector<16x32xf32>
    %19 = vector.shape_cast %18 : vector<16x32xf32> to vector<2x8x32xf32>
    %20 = vector.extract_strided_slice %15 {offsets = [0, 0, 0], sizes = [2, 8, 4], strides = [1, 1, 1]} : vector<2x8x32xf32> to vector<2x8x4xf32>
    %21 = arith.truncf %20 : vector<2x8x4xf32> to vector<2x8x4xbf16>
    %22 = vector.extract_strided_slice %17 {offsets = [0, 0, 0], sizes = [2, 8, 4], strides = [1, 1, 1]} : vector<2x8x32xf32> to vector<2x8x4xf32>
    %23 = arith.truncf %22 : vector<2x8x4xf32> to vector<2x8x4xbf16>
    %24 = vector.extract_strided_slice %19 {offsets = [0, 0, 0], sizes = [2, 8, 4], strides = [1, 1, 1]} : vector<2x8x32xf32> to vector<2x8x4xf32>
    %25 = arith.truncf %24 : vector<2x8x4xf32> to vector<2x8x4xbf16>
    "tpu.trace_start"() <{level = 10 : i32, message = "bqd,bkd->bqk"}> : () -> ()
    %cst_12 = arith.constant dense<0.000000e+00> : vector<2x8x8xf32>
    %26 = tpu.matmul %21, %23, %cst_12 {dimension_numbers = #tpu.dot_dimension_numbers<[2], [2], [1], [1], [0, 0, 0, 1, 1, 1], [0], [0]>} : vector<2x8x4xbf16>, vector<2x8x4xbf16>, vector<2x8x8xf32> -> vector<2x8x8xf32>
    "tpu.trace_stop"() : () -> ()
    %cst_13 = arith.constant 5.000000e-01 : f32
    %27 = vector.broadcast %cst_13 : f32 to vector<2x8x8xf32>
    %28 = arith.mulf %26, %27 : vector<2x8x8xf32>
    %cst_14 = arith.constant dense<0xFF800000> : vector<2x8xf32>
    %29 = vector.multi_reduction <maximumf>, %28, %cst_14 [2] : vector<2x8x8xf32> to vector<2x8xf32>
    %30 = vector.shape_cast %29 : vector<2x8xf32> to vector<2x8x1xf32>
    %31 = vector.broadcast %30 : vector<2x8x1xf32> to vector<2x8x8xf32>
    %32 = arith.subf %28, %31 : vector<2x8x8xf32>
    %33 = math.exp %32 : vector<2x8x8xf32>
    %cst_15 = arith.constant dense<0.000000e+00> : vector<2x8xf32>
    %34 = vector.multi_reduction <add>, %33, %cst_15 [2] : vector<2x8x8xf32> to vector<2x8xf32>
    %35 = vector.shape_cast %34 : vector<2x8xf32> to vector<2x8x1xf32>
    %36 = vector.broadcast %35 : vector<2x8x1xf32> to vector<2x8x8xf32>
    %37 = arith.divf %33, %36 : vector<2x8x8xf32>
    %38 = arith.truncf %37 : vector<2x8x8xf32> to vector<2x8x8xbf16>
    "tpu.trace_start"() <{level = 10 : i32, message = "bqk,bkd->bqd"}> : () -> ()
    %cst_16 = arith.constant dense<0.000000e+00> : vector<2x8x4xf32>
    %39 = tpu.matmul %38, %25, %cst_16 {dimension_numbers = #tpu.dot_dimension_numbers<[2], [1], [1], [2], [0, 0, 0, 1, 1, 2], [0], [0]>} : vector<2x8x8xbf16>, vector<2x8x4xbf16>, vector<2x8x4xf32> -> vector<2x8x4xf32>
    "tpu.trace_stop"() : () -> ()
    %40 = vector.extract_strided_slice %15 {offsets = [0, 0, 4], sizes = [2, 8, 4], strides = [1, 1, 1]} : vector<2x8x32xf32> to vector<2x8x4xf32>
    %41 = arith.truncf %40 : vector<2x8x4xf32> to vector<2x8x4xbf16>
    %42 = vector.extract_strided_slice %17 {offsets = [0, 0, 4], sizes = [2, 8, 4], strides = [1, 1, 1]} : vector<2x8x32xf32> to vector<2x8x4xf32>
    %43 = arith.truncf %42 : vector<2x8x4xf32> to vector<2x8x4xbf16>
    %44 = vector.extract_strided_slice %19 {offsets = [0, 0, 4], sizes = [2, 8, 4], strides = [1, 1, 1]} : vector<2x8x32xf32> to vector<2x8x4xf32>
    %45 = arith.truncf %44 : vector<2x8x4xf32> to vector<2x8x4xbf16>
    "tpu.trace_start"() <{level = 10 : i32, message = "bqd,bkd->bqk"}> : () -> ()
    %cst_17 = arith.constant dense<0.000000e+00> : vector<2x8x8xf32>
    %46 = tpu.matmul %41, %43, %cst_17 {dimension_numbers = #tpu.dot_dimension_numbers<[2], [2], [1], [1], [0, 0, 0, 1, 1, 1], [0], [0]>} : vector<2x8x4xbf16>, vector<2x8x4xbf16>, vector<2x8x8xf32> -> vector<2x8x8xf32>
    "tpu.trace_stop"() : () -> ()
    %cst_18 = arith.constant 5.000000e-01 : f32
    %47 = vector.broadcast %cst_18 : f32 to vector<2x8x8xf32>
    %48 = arith.mulf %46, %47 : vector<2x8x8xf32>
    %cst_19 = arith.constant dense<0xFF800000> : vector<2x8xf32>
    %49 = vector.multi_reduction <maximumf>, %48, %cst_19 [2] : vector<2x8x8xf32> to vector<2x8xf32>
    %50 = vector.shape_cast %49 : vector<2x8xf32> to vector<2x8x1xf32>
    %51 = vector.broadcast %50 : vector<2x8x1xf32> to vector<2x8x8xf32>
    %52 = arith.subf %48, %51 : vector<2x8x8xf32>
    %53 = math.exp %52 : vector<2x8x8xf32>
    %cst_20 = arith.constant dense<0.000000e+00> : vector<2x8xf32>
    %54 = vector.multi_reduction <add>, %53, %cst_20 [2] : vector<2x8x8xf32> to vector<2x8xf32>
    %55 = vector.shape_cast %54 : vector<2x8xf32> to vector<2x8x1xf32>
    %56 = vector.broadcast %55 : vector<2x8x1xf32> to vector<2x8x8xf32>
    %57 = arith.divf %53, %56 : vector<2x8x8xf32>
    %58 = arith.truncf %57 : vector<2x8x8xf32> to vector<2x8x8xbf16>
    "tpu.trace_start"() <{level = 10 : i32, message = "bqk,bkd->bqd"}> : () -> ()
    %cst_21 = arith.constant dense<0.000000e+00> : vector<2x8x4xf32>
    %59 = tpu.matmul %58, %45, %cst_21 {dimension_numbers = #tpu.dot_dimension_numbers<[2], [1], [1], [2], [0, 0, 0, 1, 1, 2], [0], [0]>} : vector<2x8x8xbf16>, vector<2x8x4xbf16>, vector<2x8x4xf32> -> vector<2x8x4xf32>
    "tpu.trace_stop"() : () -> ()
    %60 = vector.extract_strided_slice %15 {offsets = [0, 0, 8], sizes = [2, 8, 4], strides = [1, 1, 1]} : vector<2x8x32xf32> to vector<2x8x4xf32>
    %61 = arith.truncf %60 : vector<2x8x4xf32> to vector<2x8x4xbf16>
    %62 = vector.extract_strided_slice %17 {offsets = [0, 0, 8], sizes = [2, 8, 4], strides = [1, 1, 1]} : vector<2x8x32xf32> to vector<2x8x4xf32>
    %63 = arith.truncf %62 : vector<2x8x4xf32> to vector<2x8x4xbf16>
    %64 = vector.extract_strided_slice %19 {offsets = [0, 0, 8], sizes = [2, 8, 4], strides = [1, 1, 1]} : vector<2x8x32xf32> to vector<2x8x4xf32>
    %65 = arith.truncf %64 : vector<2x8x4xf32> to vector<2x8x4xbf16>
    "tpu.trace_start"() <{level = 10 : i32, message = "bqd,bkd->bqk"}> : () -> ()
    %cst_22 = arith.constant dense<0.000000e+00> : vector<2x8x8xf32>
    %66 = tpu.matmul %61, %63, %cst_22 {dimension_numbers = #tpu.dot_dimension_numbers<[2], [2], [1], [1], [0, 0, 0, 1, 1, 1], [0], [0]>} : vector<2x8x4xbf16>, vector<2x8x4xbf16>, vector<2x8x8xf32> -> vector<2x8x8xf32>
    "tpu.trace_stop"() : () -> ()
    %cst_23 = arith.constant 5.000000e-01 : f32
    %67 = vector.broadcast %cst_23 : f32 to vector<2x8x8xf32>
    %68 = arith.mulf %66, %67 : vector<2x8x8xf32>
    %cst_24 = arith.constant dense<0xFF800000> : vector<2x8xf32>
    %69 = vector.multi_reduction <maximumf>, %68, %cst_24 [2] : vector<2x8x8xf32> to vector<2x8xf32>
    %70 = vector.shape_cast %69 : vector<2x8xf32> to vector<2x8x1xf32>
    %71 = vector.broadcast %70 : vector<2x8x1xf32> to vector<2x8x8xf32>
    %72 = arith.subf %68, %71 : vector<2x8x8xf32>
    %73 = math.exp %72 : vector<2x8x8xf32>
    %cst_25 = arith.constant dense<0.000000e+00> : vector<2x8xf32>
    %74 = vector.multi_reduction <add>, %73, %cst_25 [2] : vector<2x8x8xf32> to vector<2x8xf32>
    %75 = vector.shape_cast %74 : vector<2x8xf32> to vector<2x8x1xf32>
    %76 = vector.broadcast %75 : vector<2x8x1xf32> to vector<2x8x8xf32>
    %77 = arith.divf %73, %76 : vector<2x8x8xf32>
    %78 = arith.truncf %77 : vector<2x8x8xf32> to vector<2x8x8xbf16>
    "tpu.trace_start"() <{level = 10 : i32, message = "bqk,bkd->bqd"}> : () -> ()
    %cst_26 = arith.constant dense<0.000000e+00> : vector<2x8x4xf32>
    %79 = tpu.matmul %78, %65, %cst_26 {dimension_numbers = #tpu.dot_dimension_numbers<[2], [1], [1], [2], [0, 0, 0, 1, 1, 2], [0], [0]>} : vector<2x8x8xbf16>, vector<2x8x4xbf16>, vector<2x8x4xf32> -> vector<2x8x4xf32>
    "tpu.trace_stop"() : () -> ()
    %80 = vector.extract_strided_slice %15 {offsets = [0, 0, 12], sizes = [2, 8, 4], strides = [1, 1, 1]} : vector<2x8x32xf32> to vector<2x8x4xf32>
    %81 = arith.truncf %80 : vector<2x8x4xf32> to vector<2x8x4xbf16>
    %82 = vector.extract_strided_slice %17 {offsets = [0, 0, 12], sizes = [2, 8, 4], strides = [1, 1, 1]} : vector<2x8x32xf32> to vector<2x8x4xf32>
    %83 = arith.truncf %82 : vector<2x8x4xf32> to vector<2x8x4xbf16>
    %84 = vector.extract_strided_slice %19 {offsets = [0, 0, 12], sizes = [2, 8, 4], strides = [1, 1, 1]} : vector<2x8x32xf32> to vector<2x8x4xf32>
    %85 = arith.truncf %84 : vector<2x8x4xf32> to vector<2x8x4xbf16>
    "tpu.trace_start"() <{level = 10 : i32, message = "bqd,bkd->bqk"}> : () -> ()
    %cst_27 = arith.constant dense<0.000000e+00> : vector<2x8x8xf32>
    %86 = tpu.matmul %81, %83, %cst_27 {dimension_numbers = #tpu.dot_dimension_numbers<[2], [2], [1], [1], [0, 0, 0, 1, 1, 1], [0], [0]>} : vector<2x8x4xbf16>, vector<2x8x4xbf16>, vector<2x8x8xf32> -> vector<2x8x8xf32>
    "tpu.trace_stop"() : () -> ()
    %cst_28 = arith.constant 5.000000e-01 : f32
    %87 = vector.broadcast %cst_28 : f32 to vector<2x8x8xf32>
    %88 = arith.mulf %86, %87 : vector<2x8x8xf32>
    %cst_29 = arith.constant dense<0xFF800000> : vector<2x8xf32>
    %89 = vector.multi_reduction <maximumf>, %88, %cst_29 [2] : vector<2x8x8xf32> to vector<2x8xf32>
    %90 = vector.shape_cast %89 : vector<2x8xf32> to vector<2x8x1xf32>
    %91 = vector.broadcast %90 : vector<2x8x1xf32> to vector<2x8x8xf32>
    %92 = arith.subf %88, %91 : vector<2x8x8xf32>
    %93 = math.exp %92 : vector<2x8x8xf32>
    %cst_30 = arith.constant dense<0.000000e+00> : vector<2x8xf32>
    %94 = vector.multi_reduction <add>, %93, %cst_30 [2] : vector<2x8x8xf32> to vector<2x8xf32>
    %95 = vector.shape_cast %94 : vector<2x8xf32> to vector<2x8x1xf32>
    %96 = vector.broadcast %95 : vector<2x8x1xf32> to vector<2x8x8xf32>
    %97 = arith.divf %93, %96 : vector<2x8x8xf32>
    %98 = arith.truncf %97 : vector<2x8x8xf32> to vector<2x8x8xbf16>
    "tpu.trace_start"() <{level = 10 : i32, message = "bqk,bkd->bqd"}> : () -> ()
    %cst_31 = arith.constant dense<0.000000e+00> : vector<2x8x4xf32>
    %99 = tpu.matmul %98, %85, %cst_31 {dimension_numbers = #tpu.dot_dimension_numbers<[2], [1], [1], [2], [0, 0, 0, 1, 1, 2], [0], [0]>} : vector<2x8x8xbf16>, vector<2x8x4xbf16>, vector<2x8x4xf32> -> vector<2x8x4xf32>
    "tpu.trace_stop"() : () -> ()
    %100 = vector.extract_strided_slice %15 {offsets = [0, 0, 16], sizes = [2, 8, 4], strides = [1, 1, 1]} : vector<2x8x32xf32> to vector<2x8x4xf32>
    %101 = arith.truncf %100 : vector<2x8x4xf32> to vector<2x8x4xbf16>
    %102 = vector.extract_strided_slice %17 {offsets = [0, 0, 16], sizes = [2, 8, 4], strides = [1, 1, 1]} : vector<2x8x32xf32> to vector<2x8x4xf32>
    %103 = arith.truncf %102 : vector<2x8x4xf32> to vector<2x8x4xbf16>
    %104 = vector.extract_strided_slice %19 {offsets = [0, 0, 16], sizes = [2, 8, 4], strides = [1, 1, 1]} : vector<2x8x32xf32> to vector<2x8x4xf32>
    %105 = arith.truncf %104 : vector<2x8x4xf32> to vector<2x8x4xbf16>
    "tpu.trace_start"() <{level = 10 : i32, message = "bqd,bkd->bqk"}> : () -> ()
    %cst_32 = arith.constant dense<0.000000e+00> : vector<2x8x8xf32>
    %106 = tpu.matmul %101, %103, %cst_32 {dimension_numbers = #tpu.dot_dimension_numbers<[2], [2], [1], [1], [0, 0, 0, 1, 1, 1], [0], [0]>} : vector<2x8x4xbf16>, vector<2x8x4xbf16>, vector<2x8x8xf32> -> vector<2x8x8xf32>
    "tpu.trace_stop"() : () -> ()
    %cst_33 = arith.constant 5.000000e-01 : f32
    %107 = vector.broadcast %cst_33 : f32 to vector<2x8x8xf32>
    %108 = arith.mulf %106, %107 : vector<2x8x8xf32>
    %cst_34 = arith.constant dense<0xFF800000> : vector<2x8xf32>
    %109 = vector.multi_reduction <maximumf>, %108, %cst_34 [2] : vector<2x8x8xf32> to vector<2x8xf32>
    %110 = vector.shape_cast %109 : vector<2x8xf32> to vector<2x8x1xf32>
    %111 = vector.broadcast %110 : vector<2x8x1xf32> to vector<2x8x8xf32>
    %112 = arith.subf %108, %111 : vector<2x8x8xf32>
    %113 = math.exp %112 : vector<2x8x8xf32>
    %cst_35 = arith.constant dense<0.000000e+00> : vector<2x8xf32>
    %114 = vector.multi_reduction <add>, %113, %cst_35 [2] : vector<2x8x8xf32> to vector<2x8xf32>
    %115 = vector.shape_cast %114 : vector<2x8xf32> to vector<2x8x1xf32>
    %116 = vector.broadcast %115 : vector<2x8x1xf32> to vector<2x8x8xf32>
    %117 = arith.divf %113, %116 : vector<2x8x8xf32>
    %118 = arith.truncf %117 : vector<2x8x8xf32> to vector<2x8x8xbf16>
    "tpu.trace_start"() <{level = 10 : i32, message = "bqk,bkd->bqd"}> : () -> ()
    %cst_36 = arith.constant dense<0.000000e+00> : vector<2x8x4xf32>
    %119 = tpu.matmul %118, %105, %cst_36 {dimension_numbers = #tpu.dot_dimension_numbers<[2], [1], [1], [2], [0, 0, 0, 1, 1, 2], [0], [0]>} : vector<2x8x8xbf16>, vector<2x8x4xbf16>, vector<2x8x4xf32> -> vector<2x8x4xf32>
    "tpu.trace_stop"() : () -> ()
    %120 = vector.extract_strided_slice %15 {offsets = [0, 0, 20], sizes = [2, 8, 4], strides = [1, 1, 1]} : vector<2x8x32xf32> to vector<2x8x4xf32>
    %121 = arith.truncf %120 : vector<2x8x4xf32> to vector<2x8x4xbf16>
    %122 = vector.extract_strided_slice %17 {offsets = [0, 0, 20], sizes = [2, 8, 4], strides = [1, 1, 1]} : vector<2x8x32xf32> to vector<2x8x4xf32>
    %123 = arith.truncf %122 : vector<2x8x4xf32> to vector<2x8x4xbf16>
    %124 = vector.extract_strided_slice %19 {offsets = [0, 0, 20], sizes = [2, 8, 4], strides = [1, 1, 1]} : vector<2x8x32xf32> to vector<2x8x4xf32>
    %125 = arith.truncf %124 : vector<2x8x4xf32> to vector<2x8x4xbf16>
    "tpu.trace_start"() <{level = 10 : i32, message = "bqd,bkd->bqk"}> : () -> ()
    %cst_37 = arith.constant dense<0.000000e+00> : vector<2x8x8xf32>
    %126 = tpu.matmul %121, %123, %cst_37 {dimension_numbers = #tpu.dot_dimension_numbers<[2], [2], [1], [1], [0, 0, 0, 1, 1, 1], [0], [0]>} : vector<2x8x4xbf16>, vector<2x8x4xbf16>, vector<2x8x8xf32> -> vector<2x8x8xf32>
    "tpu.trace_stop"() : () -> ()
    %cst_38 = arith.constant 5.000000e-01 : f32
    %127 = vector.broadcast %cst_38 : f32 to vector<2x8x8xf32>
    %128 = arith.mulf %126, %127 : vector<2x8x8xf32>
    %cst_39 = arith.constant dense<0xFF800000> : vector<2x8xf32>
    %129 = vector.multi_reduction <maximumf>, %128, %cst_39 [2] : vector<2x8x8xf32> to vector<2x8xf32>
    %130 = vector.shape_cast %129 : vector<2x8xf32> to vector<2x8x1xf32>
    %131 = vector.broadcast %130 : vector<2x8x1xf32> to vector<2x8x8xf32>
    %132 = arith.subf %128, %131 : vector<2x8x8xf32>
    %133 = math.exp %132 : vector<2x8x8xf32>
    %cst_40 = arith.constant dense<0.000000e+00> : vector<2x8xf32>
    %134 = vector.multi_reduction <add>, %133, %cst_40 [2] : vector<2x8x8xf32> to vector<2x8xf32>
    %135 = vector.shape_cast %134 : vector<2x8xf32> to vector<2x8x1xf32>
    %136 = vector.broadcast %135 : vector<2x8x1xf32> to vector<2x8x8xf32>
    %137 = arith.divf %133, %136 : vector<2x8x8xf32>
    %138 = arith.truncf %137 : vector<2x8x8xf32> to vector<2x8x8xbf16>
    "tpu.trace_start"() <{level = 10 : i32, message = "bqk,bkd->bqd"}> : () -> ()
    %cst_41 = arith.constant dense<0.000000e+00> : vector<2x8x4xf32>
    %139 = tpu.matmul %138, %125, %cst_41 {dimension_numbers = #tpu.dot_dimension_numbers<[2], [1], [1], [2], [0, 0, 0, 1, 1, 2], [0], [0]>} : vector<2x8x8xbf16>, vector<2x8x4xbf16>, vector<2x8x4xf32> -> vector<2x8x4xf32>
    "tpu.trace_stop"() : () -> ()
    %140 = vector.extract_strided_slice %15 {offsets = [0, 0, 24], sizes = [2, 8, 4], strides = [1, 1, 1]} : vector<2x8x32xf32> to vector<2x8x4xf32>
    %141 = arith.truncf %140 : vector<2x8x4xf32> to vector<2x8x4xbf16>
    %142 = vector.extract_strided_slice %17 {offsets = [0, 0, 24], sizes = [2, 8, 4], strides = [1, 1, 1]} : vector<2x8x32xf32> to vector<2x8x4xf32>
    %143 = arith.truncf %142 : vector<2x8x4xf32> to vector<2x8x4xbf16>
    %144 = vector.extract_strided_slice %19 {offsets = [0, 0, 24], sizes = [2, 8, 4], strides = [1, 1, 1]} : vector<2x8x32xf32> to vector<2x8x4xf32>
    %145 = arith.truncf %144 : vector<2x8x4xf32> to vector<2x8x4xbf16>
    "tpu.trace_start"() <{level = 10 : i32, message = "bqd,bkd->bqk"}> : () -> ()
    %cst_42 = arith.constant dense<0.000000e+00> : vector<2x8x8xf32>
    %146 = tpu.matmul %141, %143, %cst_42 {dimension_numbers = #tpu.dot_dimension_numbers<[2], [2], [1], [1], [0, 0, 0, 1, 1, 1], [0], [0]>} : vector<2x8x4xbf16>, vector<2x8x4xbf16>, vector<2x8x8xf32> -> vector<2x8x8xf32>
    "tpu.trace_stop"() : () -> ()
    %cst_43 = arith.constant 5.000000e-01 : f32
    %147 = vector.broadcast %cst_43 : f32 to vector<2x8x8xf32>
    %148 = arith.mulf %146, %147 : vector<2x8x8xf32>
    %cst_44 = arith.constant dense<0xFF800000> : vector<2x8xf32>
    %149 = vector.multi_reduction <maximumf>, %148, %cst_44 [2] : vector<2x8x8xf32> to vector<2x8xf32>
    %150 = vector.shape_cast %149 : vector<2x8xf32> to vector<2x8x1xf32>
    %151 = vector.broadcast %150 : vector<2x8x1xf32> to vector<2x8x8xf32>
    %152 = arith.subf %148, %151 : vector<2x8x8xf32>
    %153 = math.exp %152 : vector<2x8x8xf32>
    %cst_45 = arith.constant dense<0.000000e+00> : vector<2x8xf32>
    %154 = vector.multi_reduction <add>, %153, %cst_45 [2] : vector<2x8x8xf32> to vector<2x8xf32>
    %155 = vector.shape_cast %154 : vector<2x8xf32> to vector<2x8x1xf32>
    %156 = vector.broadcast %155 : vector<2x8x1xf32> to vector<2x8x8xf32>
    %157 = arith.divf %153, %156 : vector<2x8x8xf32>
    %158 = arith.truncf %157 : vector<2x8x8xf32> to vector<2x8x8xbf16>
    "tpu.trace_start"() <{level = 10 : i32, message = "bqk,bkd->bqd"}> : () -> ()
    %cst_46 = arith.constant dense<0.000000e+00> : vector<2x8x4xf32>
    %159 = tpu.matmul %158, %145, %cst_46 {dimension_numbers = #tpu.dot_dimension_numbers<[2], [1], [1], [2], [0, 0, 0, 1, 1, 2], [0], [0]>} : vector<2x8x8xbf16>, vector<2x8x4xbf16>, vector<2x8x4xf32> -> vector<2x8x4xf32>
    "tpu.trace_stop"() : () -> ()
    %160 = vector.extract_strided_slice %15 {offsets = [0, 0, 28], sizes = [2, 8, 4], strides = [1, 1, 1]} : vector<2x8x32xf32> to vector<2x8x4xf32>
    %161 = arith.truncf %160 : vector<2x8x4xf32> to vector<2x8x4xbf16>
    %162 = vector.extract_strided_slice %17 {offsets = [0, 0, 28], sizes = [2, 8, 4], strides = [1, 1, 1]} : vector<2x8x32xf32> to vector<2x8x4xf32>
    %163 = arith.truncf %162 : vector<2x8x4xf32> to vector<2x8x4xbf16>
    %164 = vector.extract_strided_slice %19 {offsets = [0, 0, 28], sizes = [2, 8, 4], strides = [1, 1, 1]} : vector<2x8x32xf32> to vector<2x8x4xf32>
    %165 = arith.truncf %164 : vector<2x8x4xf32> to vector<2x8x4xbf16>
    "tpu.trace_start"() <{level = 10 : i32, message = "bqd,bkd->bqk"}> : () -> ()
    %cst_47 = arith.constant dense<0.000000e+00> : vector<2x8x8xf32>
    %166 = tpu.matmul %161, %163, %cst_47 {dimension_numbers = #tpu.dot_dimension_numbers<[2], [2], [1], [1], [0, 0, 0, 1, 1, 1], [0], [0]>} : vector<2x8x4xbf16>, vector<2x8x4xbf16>, vector<2x8x8xf32> -> vector<2x8x8xf32>
    "tpu.trace_stop"() : () -> ()
    %cst_48 = arith.constant 5.000000e-01 : f32
    %167 = vector.broadcast %cst_48 : f32 to vector<2x8x8xf32>
    %168 = arith.mulf %166, %167 : vector<2x8x8xf32>
    %cst_49 = arith.constant dense<0xFF800000> : vector<2x8xf32>
    %169 = vector.multi_reduction <maximumf>, %168, %cst_49 [2] : vector<2x8x8xf32> to vector<2x8xf32>
    %170 = vector.shape_cast %169 : vector<2x8xf32> to vector<2x8x1xf32>
    %171 = vector.broadcast %170 : vector<2x8x1xf32> to vector<2x8x8xf32>
    %172 = arith.subf %168, %171 : vector<2x8x8xf32>
    %173 = math.exp %172 : vector<2x8x8xf32>
    %cst_50 = arith.constant dense<0.000000e+00> : vector<2x8xf32>
    %174 = vector.multi_reduction <add>, %173, %cst_50 [2] : vector<2x8x8xf32> to vector<2x8xf32>
    %175 = vector.shape_cast %174 : vector<2x8xf32> to vector<2x8x1xf32>
    %176 = vector.broadcast %175 : vector<2x8x1xf32> to vector<2x8x8xf32>
    %177 = arith.divf %173, %176 : vector<2x8x8xf32>
    %178 = arith.truncf %177 : vector<2x8x8xf32> to vector<2x8x8xbf16>
    "tpu.trace_start"() <{level = 10 : i32, message = "bqk,bkd->bqd"}> : () -> ()
    %cst_51 = arith.constant dense<0.000000e+00> : vector<2x8x4xf32>
    %179 = tpu.matmul %178, %165, %cst_51 {dimension_numbers = #tpu.dot_dimension_numbers<[2], [1], [1], [2], [0, 0, 0, 1, 1, 2], [0], [0]>} : vector<2x8x8xbf16>, vector<2x8x4xbf16>, vector<2x8x4xf32> -> vector<2x8x4xf32>
    "tpu.trace_stop"() : () -> ()
    %180 = tpu.concatenate %39, %59, %79, %99, %119, %139, %159, %179 in 2 : vector<2x8x4xf32>, vector<2x8x4xf32>, vector<2x8x4xf32>, vector<2x8x4xf32>, vector<2x8x4xf32>, vector<2x8x4xf32>, vector<2x8x4xf32>, vector<2x8x4xf32> -> vector<2x8x32xf32>
    %181 = vector.shape_cast %180 : vector<2x8x32xf32> to vector<16x32xf32>
    %c0_52 = arith.constant 0 : index
    %c0_53 = arith.constant 0 : index
    %c0_54 = arith.constant 0 : index
    %182 = vector.load %arg6[%c0_52, %c0_53, %c0_54] : memref<1x32x32xbf16, #tpu.memory_space<vmem>>, vector<1x32x32xbf16>
    %183 = vector.shape_cast %182 : vector<1x32x32xbf16> to vector<32x32xbf16>
    %c0_55 = arith.constant 0 : index
    %c0_56 = arith.constant 0 : index
    %c0_57 = arith.constant 0 : index
    %184 = vector.load %arg7[%c0_55, %c0_56, %c0_57] : memref<1x1x32xf32, #tpu.memory_space<vmem>>, vector<1x1x32xf32>
    %185 = vector.shape_cast %184 : vector<1x1x32xf32> to vector<1x32xf32>
    %186 = arith.truncf %181 : vector<16x32xf32> to vector<16x32xbf16>
    %cst_58 = arith.constant dense<0.000000e+00> : vector<16x32xf32>
    %187 = tpu.matmul %186, %183, %cst_58 {dimension_numbers = #tpu.dot_dimension_numbers<[1], [0], [0], [1], [0, 0, 1, 1], [], []>} : vector<16x32xbf16>, vector<32x32xbf16>, vector<16x32xf32> -> vector<16x32xf32>
    %188 = vector.broadcast %185 : vector<1x32xf32> to vector<16x32xf32>
    %189 = arith.addf %187, %188 : vector<16x32xf32>
    %190 = vector.shape_cast %189 : vector<16x32xf32> to vector<2x8x32xf32>
    %191 = arith.addf %3, %190 : vector<2x8x32xf32>
    %c0_59 = arith.constant 0 : index
    %c0_60 = arith.constant 0 : index
    %c0_61 = arith.constant 0 : index
    %192 = vector.load %arg18[%c0_59, %c0_60, %c0_61] : memref<1x1x32xf32, #tpu.memory_space<vmem>>, vector<1x1x32xf32>
    %193 = vector.shape_cast %192 : vector<1x1x32xf32> to vector<1x32xf32>
    %c0_62 = arith.constant 0 : index
    %c0_63 = arith.constant 0 : index
    %c0_64 = arith.constant 0 : index
    %194 = vector.load %arg19[%c0_62, %c0_63, %c0_64] : memref<1x1x32xf32, #tpu.memory_space<vmem>>, vector<1x1x32xf32>
    %195 = vector.shape_cast %194 : vector<1x1x32xf32> to vector<1x32xf32>
    %cst_65 = arith.constant dense<0.000000e+00> : vector<2x8xf32>
    %196 = vector.multi_reduction <add>, %191, %cst_65 [2] : vector<2x8x32xf32> to vector<2x8xf32>
    %197 = vector.shape_cast %196 : vector<2x8xf32> to vector<2x8x1xf32>
    %cst_66 = arith.constant 3.200000e+01 : f32
    %198 = vector.broadcast %cst_66 : f32 to vector<2x8x1xf32>
    %199 = arith.divf %197, %198 : vector<2x8x1xf32>
    %200 = vector.broadcast %199 : vector<2x8x1xf32> to vector<2x8x32xf32>
    %201 = arith.subf %191, %200 : vector<2x8x32xf32>
    %202 = arith.mulf %201, %201 : vector<2x8x32xf32>
    %cst_67 = arith.constant dense<0.000000e+00> : vector<2x8xf32>
    %203 = vector.multi_reduction <add>, %202, %cst_67 [2] : vector<2x8x32xf32> to vector<2x8xf32>
    %204 = vector.shape_cast %203 : vector<2x8xf32> to vector<2x8x1xf32>
    %cst_68 = arith.constant 3.200000e+01 : f32
    %205 = vector.broadcast %cst_68 : f32 to vector<2x8x1xf32>
    %206 = arith.divf %204, %205 : vector<2x8x1xf32>
    %207 = vector.broadcast %199 : vector<2x8x1xf32> to vector<2x8x32xf32>
    %208 = arith.subf %191, %207 : vector<2x8x32xf32>
    %cst_69 = arith.constant 9.99999974E-6 : f32
    %209 = vector.broadcast %cst_69 : f32 to vector<2x8x1xf32>
    %210 = arith.addf %206, %209 : vector<2x8x1xf32>
    %211 = math.rsqrt %210 : vector<2x8x1xf32>
    %212 = vector.broadcast %211 : vector<2x8x1xf32> to vector<2x8x32xf32>
    %213 = arith.mulf %208, %212 : vector<2x8x32xf32>
    %214 = vector.shape_cast %193 : vector<1x32xf32> to vector<1x1x32xf32>
    %215 = vector.broadcast %214 : vector<1x1x32xf32> to vector<2x8x32xf32>
    %216 = arith.mulf %213, %215 : vector<2x8x32xf32>
    %217 = vector.shape_cast %195 : vector<1x32xf32> to vector<1x1x32xf32>
    %218 = vector.broadcast %217 : vector<1x1x32xf32> to vector<2x8x32xf32>
    %219 = arith.addf %216, %218 : vector<2x8x32xf32>
    %220 = vector.shape_cast %219 : vector<2x8x32xf32> to vector<16x32xf32>
    %c0_70 = arith.constant 0 : index
    %c0_71 = arith.constant 0 : index
    %c0_72 = arith.constant 0 : index
    %221 = vector.load %arg8[%c0_70, %c0_71, %c0_72] : memref<1x32x32xbf16, #tpu.memory_space<vmem>>, vector<1x32x32xbf16>
    %222 = vector.shape_cast %221 : vector<1x32x32xbf16> to vector<32x32xbf16>
    %c0_73 = arith.constant 0 : index
    %c0_74 = arith.constant 0 : index
    %c0_75 = arith.constant 0 : index
    %223 = vector.load %arg9[%c0_73, %c0_74, %c0_75] : memref<1x1x32xf32, #tpu.memory_space<vmem>>, vector<1x1x32xf32>
    %224 = vector.shape_cast %223 : vector<1x1x32xf32> to vector<1x32xf32>
    %225 = arith.truncf %220 : vector<16x32xf32> to vector<16x32xbf16>
    %cst_76 = arith.constant dense<0.000000e+00> : vector<16x32xf32>
    %226 = tpu.matmul %225, %222, %cst_76 {dimension_numbers = #tpu.dot_dimension_numbers<[1], [0], [0], [1], [0, 0, 1, 1], [], []>} : vector<16x32xbf16>, vector<32x32xbf16>, vector<16x32xf32> -> vector<16x32xf32>
    %227 = vector.broadcast %224 : vector<1x32xf32> to vector<16x32xf32>
    %228 = arith.addf %226, %227 : vector<16x32xf32>
    %229 = vector.shape_cast %228 : vector<16x32xf32> to vector<2x8x32xf32>
    %230 = vector.shape_cast %4 : vector<2x16x32xbf16> to vector<32x32xbf16>
    %c0_77 = arith.constant 0 : index
    %c0_78 = arith.constant 0 : index
    %c0_79 = arith.constant 0 : index
    %231 = vector.load %arg10[%c0_77, %c0_78, %c0_79] : memref<1x32x64xbf16, #tpu.memory_space<vmem>>, vector<1x32x64xbf16>
    %232 = vector.shape_cast %231 : vector<1x32x64xbf16> to vector<32x64xbf16>
    %c0_80 = arith.constant 0 : index
    %c0_81 = arith.constant 0 : index
    %c0_82 = arith.constant 0 : index
    %233 = vector.load %arg11[%c0_80, %c0_81, %c0_82] : memref<1x1x64xf32, #tpu.memory_space<vmem>>, vector<1x1x64xf32>
    %234 = vector.shape_cast %233 : vector<1x1x64xf32> to vector<1x64xf32>
    %cst_83 = arith.constant dense<0.000000e+00> : vector<32x64xf32>
    %235 = tpu.matmul %230, %232, %cst_83 {dimension_numbers = #tpu.dot_dimension_numbers<[1], [0], [0], [1], [0, 0, 1, 1], [], []>} : vector<32x32xbf16>, vector<32x64xbf16>, vector<32x64xf32> -> vector<32x64xf32>
    %236 = vector.broadcast %234 : vector<1x64xf32> to vector<32x64xf32>
    %237 = arith.addf %235, %236 : vector<32x64xf32>
    %238 = vector.extract_strided_slice %237 {offsets = [0, 0], sizes = [32, 32], strides = [1, 1]} : vector<32x64xf32> to vector<32x32xf32>
    %239 = vector.shape_cast %238 : vector<32x32xf32> to vector<2x16x32xf32>
    %240 = vector.extract_strided_slice %237 {offsets = [0, 32], sizes = [32, 32], strides = [1, 1]} : vector<32x64xf32> to vector<32x32xf32>
    %241 = vector.shape_cast %240 : vector<32x32xf32> to vector<2x16x32xf32>
    %242 = vector.extract_strided_slice %229 {offsets = [0, 0, 0], sizes = [2, 8, 4], strides = [1, 1, 1]} : vector<2x8x32xf32> to vector<2x8x4xf32>
    %243 = arith.truncf %242 : vector<2x8x4xf32> to vector<2x8x4xbf16>
    %244 = vector.extract_strided_slice %239 {offsets = [0, 0, 0], sizes = [2, 16, 4], strides = [1, 1, 1]} : vector<2x16x32xf32> to vector<2x16x4xf32>
    %245 = arith.truncf %244 : vector<2x16x4xf32> to vector<2x16x4xbf16>
    %246 = vector.extract_strided_slice %241 {offsets = [0, 0, 0], sizes = [2, 16, 4], strides = [1, 1, 1]} : vector<2x16x32xf32> to vector<2x16x4xf32>
    %247 = arith.truncf %246 : vector<2x16x4xf32> to vector<2x16x4xbf16>
    "tpu.trace_start"() <{level = 10 : i32, message = "bqd,bkd->bqk"}> : () -> ()
    %cst_84 = arith.constant dense<0.000000e+00> : vector<2x8x16xf32>
    %248 = tpu.matmul %243, %245, %cst_84 {dimension_numbers = #tpu.dot_dimension_numbers<[2], [2], [1], [1], [0, 0, 0, 1, 1, 1], [0], [0]>} : vector<2x8x4xbf16>, vector<2x16x4xbf16>, vector<2x8x16xf32> -> vector<2x8x16xf32>
    "tpu.trace_stop"() : () -> ()
    %cst_85 = arith.constant 5.000000e-01 : f32
    %249 = vector.broadcast %cst_85 : f32 to vector<2x8x16xf32>
    %250 = arith.mulf %248, %249 : vector<2x8x16xf32>
    %cst_86 = arith.constant dense<0xFF800000> : vector<2x8xf32>
    %251 = vector.multi_reduction <maximumf>, %250, %cst_86 [2] : vector<2x8x16xf32> to vector<2x8xf32>
    %252 = vector.shape_cast %251 : vector<2x8xf32> to vector<2x8x1xf32>
    %253 = vector.broadcast %252 : vector<2x8x1xf32> to vector<2x8x16xf32>
    %254 = arith.subf %250, %253 : vector<2x8x16xf32>
    %255 = math.exp %254 : vector<2x8x16xf32>
    %cst_87 = arith.constant dense<0.000000e+00> : vector<2x8xf32>
    %256 = vector.multi_reduction <add>, %255, %cst_87 [2] : vector<2x8x16xf32> to vector<2x8xf32>
    %257 = vector.shape_cast %256 : vector<2x8xf32> to vector<2x8x1xf32>
    %258 = vector.broadcast %257 : vector<2x8x1xf32> to vector<2x8x16xf32>
    %259 = arith.divf %255, %258 : vector<2x8x16xf32>
    %260 = arith.truncf %259 : vector<2x8x16xf32> to vector<2x8x16xbf16>
    "tpu.trace_start"() <{level = 10 : i32, message = "bqk,bkd->bqd"}> : () -> ()
    %cst_88 = arith.constant dense<0.000000e+00> : vector<2x8x4xf32>
    %261 = tpu.matmul %260, %247, %cst_88 {dimension_numbers = #tpu.dot_dimension_numbers<[2], [1], [1], [2], [0, 0, 0, 1, 1, 2], [0], [0]>} : vector<2x8x16xbf16>, vector<2x16x4xbf16>, vector<2x8x4xf32> -> vector<2x8x4xf32>
    "tpu.trace_stop"() : () -> ()
    %262 = vector.extract_strided_slice %229 {offsets = [0, 0, 4], sizes = [2, 8, 4], strides = [1, 1, 1]} : vector<2x8x32xf32> to vector<2x8x4xf32>
    %263 = arith.truncf %262 : vector<2x8x4xf32> to vector<2x8x4xbf16>
    %264 = vector.extract_strided_slice %239 {offsets = [0, 0, 4], sizes = [2, 16, 4], strides = [1, 1, 1]} : vector<2x16x32xf32> to vector<2x16x4xf32>
    %265 = arith.truncf %264 : vector<2x16x4xf32> to vector<2x16x4xbf16>
    %266 = vector.extract_strided_slice %241 {offsets = [0, 0, 4], sizes = [2, 16, 4], strides = [1, 1, 1]} : vector<2x16x32xf32> to vector<2x16x4xf32>
    %267 = arith.truncf %266 : vector<2x16x4xf32> to vector<2x16x4xbf16>
    "tpu.trace_start"() <{level = 10 : i32, message = "bqd,bkd->bqk"}> : () -> ()
    %cst_89 = arith.constant dense<0.000000e+00> : vector<2x8x16xf32>
    %268 = tpu.matmul %263, %265, %cst_89 {dimension_numbers = #tpu.dot_dimension_numbers<[2], [2], [1], [1], [0, 0, 0, 1, 1, 1], [0], [0]>} : vector<2x8x4xbf16>, vector<2x16x4xbf16>, vector<2x8x16xf32> -> vector<2x8x16xf32>
    "tpu.trace_stop"() : () -> ()
    %cst_90 = arith.constant 5.000000e-01 : f32
    %269 = vector.broadcast %cst_90 : f32 to vector<2x8x16xf32>
    %270 = arith.mulf %268, %269 : vector<2x8x16xf32>
    %cst_91 = arith.constant dense<0xFF800000> : vector<2x8xf32>
    %271 = vector.multi_reduction <maximumf>, %270, %cst_91 [2] : vector<2x8x16xf32> to vector<2x8xf32>
    %272 = vector.shape_cast %271 : vector<2x8xf32> to vector<2x8x1xf32>
    %273 = vector.broadcast %272 : vector<2x8x1xf32> to vector<2x8x16xf32>
    %274 = arith.subf %270, %273 : vector<2x8x16xf32>
    %275 = math.exp %274 : vector<2x8x16xf32>
    %cst_92 = arith.constant dense<0.000000e+00> : vector<2x8xf32>
    %276 = vector.multi_reduction <add>, %275, %cst_92 [2] : vector<2x8x16xf32> to vector<2x8xf32>
    %277 = vector.shape_cast %276 : vector<2x8xf32> to vector<2x8x1xf32>
    %278 = vector.broadcast %277 : vector<2x8x1xf32> to vector<2x8x16xf32>
    %279 = arith.divf %275, %278 : vector<2x8x16xf32>
    %280 = arith.truncf %279 : vector<2x8x16xf32> to vector<2x8x16xbf16>
    "tpu.trace_start"() <{level = 10 : i32, message = "bqk,bkd->bqd"}> : () -> ()
    %cst_93 = arith.constant dense<0.000000e+00> : vector<2x8x4xf32>
    %281 = tpu.matmul %280, %267, %cst_93 {dimension_numbers = #tpu.dot_dimension_numbers<[2], [1], [1], [2], [0, 0, 0, 1, 1, 2], [0], [0]>} : vector<2x8x16xbf16>, vector<2x16x4xbf16>, vector<2x8x4xf32> -> vector<2x8x4xf32>
    "tpu.trace_stop"() : () -> ()
    %282 = vector.extract_strided_slice %229 {offsets = [0, 0, 8], sizes = [2, 8, 4], strides = [1, 1, 1]} : vector<2x8x32xf32> to vector<2x8x4xf32>
    %283 = arith.truncf %282 : vector<2x8x4xf32> to vector<2x8x4xbf16>
    %284 = vector.extract_strided_slice %239 {offsets = [0, 0, 8], sizes = [2, 16, 4], strides = [1, 1, 1]} : vector<2x16x32xf32> to vector<2x16x4xf32>
    %285 = arith.truncf %284 : vector<2x16x4xf32> to vector<2x16x4xbf16>
    %286 = vector.extract_strided_slice %241 {offsets = [0, 0, 8], sizes = [2, 16, 4], strides = [1, 1, 1]} : vector<2x16x32xf32> to vector<2x16x4xf32>
    %287 = arith.truncf %286 : vector<2x16x4xf32> to vector<2x16x4xbf16>
    "tpu.trace_start"() <{level = 10 : i32, message = "bqd,bkd->bqk"}> : () -> ()
    %cst_94 = arith.constant dense<0.000000e+00> : vector<2x8x16xf32>
    %288 = tpu.matmul %283, %285, %cst_94 {dimension_numbers = #tpu.dot_dimension_numbers<[2], [2], [1], [1], [0, 0, 0, 1, 1, 1], [0], [0]>} : vector<2x8x4xbf16>, vector<2x16x4xbf16>, vector<2x8x16xf32> -> vector<2x8x16xf32>
    "tpu.trace_stop"() : () -> ()
    %cst_95 = arith.constant 5.000000e-01 : f32
    %289 = vector.broadcast %cst_95 : f32 to vector<2x8x16xf32>
    %290 = arith.mulf %288, %289 : vector<2x8x16xf32>
    %cst_96 = arith.constant dense<0xFF800000> : vector<2x8xf32>
    %291 = vector.multi_reduction <maximumf>, %290, %cst_96 [2] : vector<2x8x16xf32> to vector<2x8xf32>
    %292 = vector.shape_cast %291 : vector<2x8xf32> to vector<2x8x1xf32>
    %293 = vector.broadcast %292 : vector<2x8x1xf32> to vector<2x8x16xf32>
    %294 = arith.subf %290, %293 : vector<2x8x16xf32>
    %295 = math.exp %294 : vector<2x8x16xf32>
    %cst_97 = arith.constant dense<0.000000e+00> : vector<2x8xf32>
    %296 = vector.multi_reduction <add>, %295, %cst_97 [2] : vector<2x8x16xf32> to vector<2x8xf32>
    %297 = vector.shape_cast %296 : vector<2x8xf32> to vector<2x8x1xf32>
    %298 = vector.broadcast %297 : vector<2x8x1xf32> to vector<2x8x16xf32>
    %299 = arith.divf %295, %298 : vector<2x8x16xf32>
    %300 = arith.truncf %299 : vector<2x8x16xf32> to vector<2x8x16xbf16>
    "tpu.trace_start"() <{level = 10 : i32, message = "bqk,bkd->bqd"}> : () -> ()
    %cst_98 = arith.constant dense<0.000000e+00> : vector<2x8x4xf32>
    %301 = tpu.matmul %300, %287, %cst_98 {dimension_numbers = #tpu.dot_dimension_numbers<[2], [1], [1], [2], [0, 0, 0, 1, 1, 2], [0], [0]>} : vector<2x8x16xbf16>, vector<2x16x4xbf16>, vector<2x8x4xf32> -> vector<2x8x4xf32>
    "tpu.trace_stop"() : () -> ()
    %302 = vector.extract_strided_slice %229 {offsets = [0, 0, 12], sizes = [2, 8, 4], strides = [1, 1, 1]} : vector<2x8x32xf32> to vector<2x8x4xf32>
    %303 = arith.truncf %302 : vector<2x8x4xf32> to vector<2x8x4xbf16>
    %304 = vector.extract_strided_slice %239 {offsets = [0, 0, 12], sizes = [2, 16, 4], strides = [1, 1, 1]} : vector<2x16x32xf32> to vector<2x16x4xf32>
    %305 = arith.truncf %304 : vector<2x16x4xf32> to vector<2x16x4xbf16>
    %306 = vector.extract_strided_slice %241 {offsets = [0, 0, 12], sizes = [2, 16, 4], strides = [1, 1, 1]} : vector<2x16x32xf32> to vector<2x16x4xf32>
    %307 = arith.truncf %306 : vector<2x16x4xf32> to vector<2x16x4xbf16>
    "tpu.trace_start"() <{level = 10 : i32, message = "bqd,bkd->bqk"}> : () -> ()
    %cst_99 = arith.constant dense<0.000000e+00> : vector<2x8x16xf32>
    %308 = tpu.matmul %303, %305, %cst_99 {dimension_numbers = #tpu.dot_dimension_numbers<[2], [2], [1], [1], [0, 0, 0, 1, 1, 1], [0], [0]>} : vector<2x8x4xbf16>, vector<2x16x4xbf16>, vector<2x8x16xf32> -> vector<2x8x16xf32>
    "tpu.trace_stop"() : () -> ()
    %cst_100 = arith.constant 5.000000e-01 : f32
    %309 = vector.broadcast %cst_100 : f32 to vector<2x8x16xf32>
    %310 = arith.mulf %308, %309 : vector<2x8x16xf32>
    %cst_101 = arith.constant dense<0xFF800000> : vector<2x8xf32>
    %311 = vector.multi_reduction <maximumf>, %310, %cst_101 [2] : vector<2x8x16xf32> to vector<2x8xf32>
    %312 = vector.shape_cast %311 : vector<2x8xf32> to vector<2x8x1xf32>
    %313 = vector.broadcast %312 : vector<2x8x1xf32> to vector<2x8x16xf32>
    %314 = arith.subf %310, %313 : vector<2x8x16xf32>
    %315 = math.exp %314 : vector<2x8x16xf32>
    %cst_102 = arith.constant dense<0.000000e+00> : vector<2x8xf32>
    %316 = vector.multi_reduction <add>, %315, %cst_102 [2] : vector<2x8x16xf32> to vector<2x8xf32>
    %317 = vector.shape_cast %316 : vector<2x8xf32> to vector<2x8x1xf32>
    %318 = vector.broadcast %317 : vector<2x8x1xf32> to vector<2x8x16xf32>
    %319 = arith.divf %315, %318 : vector<2x8x16xf32>
    %320 = arith.truncf %319 : vector<2x8x16xf32> to vector<2x8x16xbf16>
    "tpu.trace_start"() <{level = 10 : i32, message = "bqk,bkd->bqd"}> : () -> ()
    %cst_103 = arith.constant dense<0.000000e+00> : vector<2x8x4xf32>
    %321 = tpu.matmul %320, %307, %cst_103 {dimension_numbers = #tpu.dot_dimension_numbers<[2], [1], [1], [2], [0, 0, 0, 1, 1, 2], [0], [0]>} : vector<2x8x16xbf16>, vector<2x16x4xbf16>, vector<2x8x4xf32> -> vector<2x8x4xf32>
    "tpu.trace_stop"() : () -> ()
    %322 = vector.extract_strided_slice %229 {offsets = [0, 0, 16], sizes = [2, 8, 4], strides = [1, 1, 1]} : vector<2x8x32xf32> to vector<2x8x4xf32>
    %323 = arith.truncf %322 : vector<2x8x4xf32> to vector<2x8x4xbf16>
    %324 = vector.extract_strided_slice %239 {offsets = [0, 0, 16], sizes = [2, 16, 4], strides = [1, 1, 1]} : vector<2x16x32xf32> to vector<2x16x4xf32>
    %325 = arith.truncf %324 : vector<2x16x4xf32> to vector<2x16x4xbf16>
    %326 = vector.extract_strided_slice %241 {offsets = [0, 0, 16], sizes = [2, 16, 4], strides = [1, 1, 1]} : vector<2x16x32xf32> to vector<2x16x4xf32>
    %327 = arith.truncf %326 : vector<2x16x4xf32> to vector<2x16x4xbf16>
    "tpu.trace_start"() <{level = 10 : i32, message = "bqd,bkd->bqk"}> : () -> ()
    %cst_104 = arith.constant dense<0.000000e+00> : vector<2x8x16xf32>
    %328 = tpu.matmul %323, %325, %cst_104 {dimension_numbers = #tpu.dot_dimension_numbers<[2], [2], [1], [1], [0, 0, 0, 1, 1, 1], [0], [0]>} : vector<2x8x4xbf16>, vector<2x16x4xbf16>, vector<2x8x16xf32> -> vector<2x8x16xf32>
    "tpu.trace_stop"() : () -> ()
    %cst_105 = arith.constant 5.000000e-01 : f32
    %329 = vector.broadcast %cst_105 : f32 to vector<2x8x16xf32>
    %330 = arith.mulf %328, %329 : vector<2x8x16xf32>
    %cst_106 = arith.constant dense<0xFF800000> : vector<2x8xf32>
    %331 = vector.multi_reduction <maximumf>, %330, %cst_106 [2] : vector<2x8x16xf32> to vector<2x8xf32>
    %332 = vector.shape_cast %331 : vector<2x8xf32> to vector<2x8x1xf32>
    %333 = vector.broadcast %332 : vector<2x8x1xf32> to vector<2x8x16xf32>
    %334 = arith.subf %330, %333 : vector<2x8x16xf32>
    %335 = math.exp %334 : vector<2x8x16xf32>
    %cst_107 = arith.constant dense<0.000000e+00> : vector<2x8xf32>
    %336 = vector.multi_reduction <add>, %335, %cst_107 [2] : vector<2x8x16xf32> to vector<2x8xf32>
    %337 = vector.shape_cast %336 : vector<2x8xf32> to vector<2x8x1xf32>
    %338 = vector.broadcast %337 : vector<2x8x1xf32> to vector<2x8x16xf32>
    %339 = arith.divf %335, %338 : vector<2x8x16xf32>
    %340 = arith.truncf %339 : vector<2x8x16xf32> to vector<2x8x16xbf16>
    "tpu.trace_start"() <{level = 10 : i32, message = "bqk,bkd->bqd"}> : () -> ()
    %cst_108 = arith.constant dense<0.000000e+00> : vector<2x8x4xf32>
    %341 = tpu.matmul %340, %327, %cst_108 {dimension_numbers = #tpu.dot_dimension_numbers<[2], [1], [1], [2], [0, 0, 0, 1, 1, 2], [0], [0]>} : vector<2x8x16xbf16>, vector<2x16x4xbf16>, vector<2x8x4xf32> -> vector<2x8x4xf32>
    "tpu.trace_stop"() : () -> ()
    %342 = vector.extract_strided_slice %229 {offsets = [0, 0, 20], sizes = [2, 8, 4], strides = [1, 1, 1]} : vector<2x8x32xf32> to vector<2x8x4xf32>
    %343 = arith.truncf %342 : vector<2x8x4xf32> to vector<2x8x4xbf16>
    %344 = vector.extract_strided_slice %239 {offsets = [0, 0, 20], sizes = [2, 16, 4], strides = [1, 1, 1]} : vector<2x16x32xf32> to vector<2x16x4xf32>
    %345 = arith.truncf %344 : vector<2x16x4xf32> to vector<2x16x4xbf16>
    %346 = vector.extract_strided_slice %241 {offsets = [0, 0, 20], sizes = [2, 16, 4], strides = [1, 1, 1]} : vector<2x16x32xf32> to vector<2x16x4xf32>
    %347 = arith.truncf %346 : vector<2x16x4xf32> to vector<2x16x4xbf16>
    "tpu.trace_start"() <{level = 10 : i32, message = "bqd,bkd->bqk"}> : () -> ()
    %cst_109 = arith.constant dense<0.000000e+00> : vector<2x8x16xf32>
    %348 = tpu.matmul %343, %345, %cst_109 {dimension_numbers = #tpu.dot_dimension_numbers<[2], [2], [1], [1], [0, 0, 0, 1, 1, 1], [0], [0]>} : vector<2x8x4xbf16>, vector<2x16x4xbf16>, vector<2x8x16xf32> -> vector<2x8x16xf32>
    "tpu.trace_stop"() : () -> ()
    %cst_110 = arith.constant 5.000000e-01 : f32
    %349 = vector.broadcast %cst_110 : f32 to vector<2x8x16xf32>
    %350 = arith.mulf %348, %349 : vector<2x8x16xf32>
    %cst_111 = arith.constant dense<0xFF800000> : vector<2x8xf32>
    %351 = vector.multi_reduction <maximumf>, %350, %cst_111 [2] : vector<2x8x16xf32> to vector<2x8xf32>
    %352 = vector.shape_cast %351 : vector<2x8xf32> to vector<2x8x1xf32>
    %353 = vector.broadcast %352 : vector<2x8x1xf32> to vector<2x8x16xf32>
    %354 = arith.subf %350, %353 : vector<2x8x16xf32>
    %355 = math.exp %354 : vector<2x8x16xf32>
    %cst_112 = arith.constant dense<0.000000e+00> : vector<2x8xf32>
    %356 = vector.multi_reduction <add>, %355, %cst_112 [2] : vector<2x8x16xf32> to vector<2x8xf32>
    %357 = vector.shape_cast %356 : vector<2x8xf32> to vector<2x8x1xf32>
    %358 = vector.broadcast %357 : vector<2x8x1xf32> to vector<2x8x16xf32>
    %359 = arith.divf %355, %358 : vector<2x8x16xf32>
    %360 = arith.truncf %359 : vector<2x8x16xf32> to vector<2x8x16xbf16>
    "tpu.trace_start"() <{level = 10 : i32, message = "bqk,bkd->bqd"}> : () -> ()
    %cst_113 = arith.constant dense<0.000000e+00> : vector<2x8x4xf32>
    %361 = tpu.matmul %360, %347, %cst_113 {dimension_numbers = #tpu.dot_dimension_numbers<[2], [1], [1], [2], [0, 0, 0, 1, 1, 2], [0], [0]>} : vector<2x8x16xbf16>, vector<2x16x4xbf16>, vector<2x8x4xf32> -> vector<2x8x4xf32>
    "tpu.trace_stop"() : () -> ()
    %362 = vector.extract_strided_slice %229 {offsets = [0, 0, 24], sizes = [2, 8, 4], strides = [1, 1, 1]} : vector<2x8x32xf32> to vector<2x8x4xf32>
    %363 = arith.truncf %362 : vector<2x8x4xf32> to vector<2x8x4xbf16>
    %364 = vector.extract_strided_slice %239 {offsets = [0, 0, 24], sizes = [2, 16, 4], strides = [1, 1, 1]} : vector<2x16x32xf32> to vector<2x16x4xf32>
    %365 = arith.truncf %364 : vector<2x16x4xf32> to vector<2x16x4xbf16>
    %366 = vector.extract_strided_slice %241 {offsets = [0, 0, 24], sizes = [2, 16, 4], strides = [1, 1, 1]} : vector<2x16x32xf32> to vector<2x16x4xf32>
    %367 = arith.truncf %366 : vector<2x16x4xf32> to vector<2x16x4xbf16>
    "tpu.trace_start"() <{level = 10 : i32, message = "bqd,bkd->bqk"}> : () -> ()
    %cst_114 = arith.constant dense<0.000000e+00> : vector<2x8x16xf32>
    %368 = tpu.matmul %363, %365, %cst_114 {dimension_numbers = #tpu.dot_dimension_numbers<[2], [2], [1], [1], [0, 0, 0, 1, 1, 1], [0], [0]>} : vector<2x8x4xbf16>, vector<2x16x4xbf16>, vector<2x8x16xf32> -> vector<2x8x16xf32>
    "tpu.trace_stop"() : () -> ()
    %cst_115 = arith.constant 5.000000e-01 : f32
    %369 = vector.broadcast %cst_115 : f32 to vector<2x8x16xf32>
    %370 = arith.mulf %368, %369 : vector<2x8x16xf32>
    %cst_116 = arith.constant dense<0xFF800000> : vector<2x8xf32>
    %371 = vector.multi_reduction <maximumf>, %370, %cst_116 [2] : vector<2x8x16xf32> to vector<2x8xf32>
    %372 = vector.shape_cast %371 : vector<2x8xf32> to vector<2x8x1xf32>
    %373 = vector.broadcast %372 : vector<2x8x1xf32> to vector<2x8x16xf32>
    %374 = arith.subf %370, %373 : vector<2x8x16xf32>
    %375 = math.exp %374 : vector<2x8x16xf32>
    %cst_117 = arith.constant dense<0.000000e+00> : vector<2x8xf32>
    %376 = vector.multi_reduction <add>, %375, %cst_117 [2] : vector<2x8x16xf32> to vector<2x8xf32>
    %377 = vector.shape_cast %376 : vector<2x8xf32> to vector<2x8x1xf32>
    %378 = vector.broadcast %377 : vector<2x8x1xf32> to vector<2x8x16xf32>
    %379 = arith.divf %375, %378 : vector<2x8x16xf32>
    %380 = arith.truncf %379 : vector<2x8x16xf32> to vector<2x8x16xbf16>
    "tpu.trace_start"() <{level = 10 : i32, message = "bqk,bkd->bqd"}> : () -> ()
    %cst_118 = arith.constant dense<0.000000e+00> : vector<2x8x4xf32>
    %381 = tpu.matmul %380, %367, %cst_118 {dimension_numbers = #tpu.dot_dimension_numbers<[2], [1], [1], [2], [0, 0, 0, 1, 1, 2], [0], [0]>} : vector<2x8x16xbf16>, vector<2x16x4xbf16>, vector<2x8x4xf32> -> vector<2x8x4xf32>
    "tpu.trace_stop"() : () -> ()
    %382 = vector.extract_strided_slice %229 {offsets = [0, 0, 28], sizes = [2, 8, 4], strides = [1, 1, 1]} : vector<2x8x32xf32> to vector<2x8x4xf32>
    %383 = arith.truncf %382 : vector<2x8x4xf32> to vector<2x8x4xbf16>
    %384 = vector.extract_strided_slice %239 {offsets = [0, 0, 28], sizes = [2, 16, 4], strides = [1, 1, 1]} : vector<2x16x32xf32> to vector<2x16x4xf32>
    %385 = arith.truncf %384 : vector<2x16x4xf32> to vector<2x16x4xbf16>
    %386 = vector.extract_strided_slice %241 {offsets = [0, 0, 28], sizes = [2, 16, 4], strides = [1, 1, 1]} : vector<2x16x32xf32> to vector<2x16x4xf32>
    %387 = arith.truncf %386 : vector<2x16x4xf32> to vector<2x16x4xbf16>
    "tpu.trace_start"() <{level = 10 : i32, message = "bqd,bkd->bqk"}> : () -> ()
    %cst_119 = arith.constant dense<0.000000e+00> : vector<2x8x16xf32>
    %388 = tpu.matmul %383, %385, %cst_119 {dimension_numbers = #tpu.dot_dimension_numbers<[2], [2], [1], [1], [0, 0, 0, 1, 1, 1], [0], [0]>} : vector<2x8x4xbf16>, vector<2x16x4xbf16>, vector<2x8x16xf32> -> vector<2x8x16xf32>
    "tpu.trace_stop"() : () -> ()
    %cst_120 = arith.constant 5.000000e-01 : f32
    %389 = vector.broadcast %cst_120 : f32 to vector<2x8x16xf32>
    %390 = arith.mulf %388, %389 : vector<2x8x16xf32>
    %cst_121 = arith.constant dense<0xFF800000> : vector<2x8xf32>
    %391 = vector.multi_reduction <maximumf>, %390, %cst_121 [2] : vector<2x8x16xf32> to vector<2x8xf32>
    %392 = vector.shape_cast %391 : vector<2x8xf32> to vector<2x8x1xf32>
    %393 = vector.broadcast %392 : vector<2x8x1xf32> to vector<2x8x16xf32>
    %394 = arith.subf %390, %393 : vector<2x8x16xf32>
    %395 = math.exp %394 : vector<2x8x16xf32>
    %cst_122 = arith.constant dense<0.000000e+00> : vector<2x8xf32>
    %396 = vector.multi_reduction <add>, %395, %cst_122 [2] : vector<2x8x16xf32> to vector<2x8xf32>
    %397 = vector.shape_cast %396 : vector<2x8xf32> to vector<2x8x1xf32>
    %398 = vector.broadcast %397 : vector<2x8x1xf32> to vector<2x8x16xf32>
    %399 = arith.divf %395, %398 : vector<2x8x16xf32>
    %400 = arith.truncf %399 : vector<2x8x16xf32> to vector<2x8x16xbf16>
    "tpu.trace_start"() <{level = 10 : i32, message = "bqk,bkd->bqd"}> : () -> ()
    %cst_123 = arith.constant dense<0.000000e+00> : vector<2x8x4xf32>
    %401 = tpu.matmul %400, %387, %cst_123 {dimension_numbers = #tpu.dot_dimension_numbers<[2], [1], [1], [2], [0, 0, 0, 1, 1, 2], [0], [0]>} : vector<2x8x16xbf16>, vector<2x16x4xbf16>, vector<2x8x4xf32> -> vector<2x8x4xf32>
    "tpu.trace_stop"() : () -> ()
    %402 = tpu.concatenate %261, %281, %301, %321, %341, %361, %381, %401 in 2 : vector<2x8x4xf32>, vector<2x8x4xf32>, vector<2x8x4xf32>, vector<2x8x4xf32>, vector<2x8x4xf32>, vector<2x8x4xf32>, vector<2x8x4xf32>, vector<2x8x4xf32> -> vector<2x8x32xf32>
    %403 = vector.shape_cast %402 : vector<2x8x32xf32> to vector<16x32xf32>
    %c0_124 = arith.constant 0 : index
    %c0_125 = arith.constant 0 : index
    %c0_126 = arith.constant 0 : index
    %404 = vector.load %arg12[%c0_124, %c0_125, %c0_126] : memref<1x32x32xbf16, #tpu.memory_space<vmem>>, vector<1x32x32xbf16>
    %405 = vector.shape_cast %404 : vector<1x32x32xbf16> to vector<32x32xbf16>
    %c0_127 = arith.constant 0 : index
    %c0_128 = arith.constant 0 : index
    %c0_129 = arith.constant 0 : index
    %406 = vector.load %arg13[%c0_127, %c0_128, %c0_129] : memref<1x1x32xf32, #tpu.memory_space<vmem>>, vector<1x1x32xf32>
    %407 = vector.shape_cast %406 : vector<1x1x32xf32> to vector<1x32xf32>
    %408 = arith.truncf %403 : vector<16x32xf32> to vector<16x32xbf16>
    %cst_130 = arith.constant dense<0.000000e+00> : vector<16x32xf32>
    %409 = tpu.matmul %408, %405, %cst_130 {dimension_numbers = #tpu.dot_dimension_numbers<[1], [0], [0], [1], [0, 0, 1, 1], [], []>} : vector<16x32xbf16>, vector<32x32xbf16>, vector<16x32xf32> -> vector<16x32xf32>
    %410 = vector.broadcast %407 : vector<1x32xf32> to vector<16x32xf32>
    %411 = arith.addf %409, %410 : vector<16x32xf32>
    %412 = vector.shape_cast %411 : vector<16x32xf32> to vector<2x8x32xf32>
    %413 = arith.addf %219, %412 : vector<2x8x32xf32>
    %c0_131 = arith.constant 0 : index
    %c0_132 = arith.constant 0 : index
    %c0_133 = arith.constant 0 : index
    %414 = vector.load %arg20[%c0_131, %c0_132, %c0_133] : memref<1x1x32xf32, #tpu.memory_space<vmem>>, vector<1x1x32xf32>
    %415 = vector.shape_cast %414 : vector<1x1x32xf32> to vector<1x32xf32>
    %c0_134 = arith.constant 0 : index
    %c0_135 = arith.constant 0 : index
    %c0_136 = arith.constant 0 : index
    %416 = vector.load %arg21[%c0_134, %c0_135, %c0_136] : memref<1x1x32xf32, #tpu.memory_space<vmem>>, vector<1x1x32xf32>
    %417 = vector.shape_cast %416 : vector<1x1x32xf32> to vector<1x32xf32>
    %cst_137 = arith.constant dense<0.000000e+00> : vector<2x8xf32>
    %418 = vector.multi_reduction <add>, %413, %cst_137 [2] : vector<2x8x32xf32> to vector<2x8xf32>
    %419 = vector.shape_cast %418 : vector<2x8xf32> to vector<2x8x1xf32>
    %cst_138 = arith.constant 3.200000e+01 : f32
    %420 = vector.broadcast %cst_138 : f32 to vector<2x8x1xf32>
    %421 = arith.divf %419, %420 : vector<2x8x1xf32>
    %422 = vector.broadcast %421 : vector<2x8x1xf32> to vector<2x8x32xf32>
    %423 = arith.subf %413, %422 : vector<2x8x32xf32>
    %424 = arith.mulf %423, %423 : vector<2x8x32xf32>
    %cst_139 = arith.constant dense<0.000000e+00> : vector<2x8xf32>
    %425 = vector.multi_reduction <add>, %424, %cst_139 [2] : vector<2x8x32xf32> to vector<2x8xf32>
    %426 = vector.shape_cast %425 : vector<2x8xf32> to vector<2x8x1xf32>
    %cst_140 = arith.constant 3.200000e+01 : f32
    %427 = vector.broadcast %cst_140 : f32 to vector<2x8x1xf32>
    %428 = arith.divf %426, %427 : vector<2x8x1xf32>
    %429 = vector.broadcast %421 : vector<2x8x1xf32> to vector<2x8x32xf32>
    %430 = arith.subf %413, %429 : vector<2x8x32xf32>
    %cst_141 = arith.constant 9.99999974E-6 : f32
    %431 = vector.broadcast %cst_141 : f32 to vector<2x8x1xf32>
    %432 = arith.addf %428, %431 : vector<2x8x1xf32>
    %433 = math.rsqrt %432 : vector<2x8x1xf32>
    %434 = vector.broadcast %433 : vector<2x8x1xf32> to vector<2x8x32xf32>
    %435 = arith.mulf %430, %434 : vector<2x8x32xf32>
    %436 = vector.shape_cast %415 : vector<1x32xf32> to vector<1x1x32xf32>
    %437 = vector.broadcast %436 : vector<1x1x32xf32> to vector<2x8x32xf32>
    %438 = arith.mulf %435, %437 : vector<2x8x32xf32>
    %439 = vector.shape_cast %417 : vector<1x32xf32> to vector<1x1x32xf32>
    %440 = vector.broadcast %439 : vector<1x1x32xf32> to vector<2x8x32xf32>
    %441 = arith.addf %438, %440 : vector<2x8x32xf32>
    %442 = vector.shape_cast %441 : vector<2x8x32xf32> to vector<16x32xf32>
    %c0_142 = arith.constant 0 : index
    %c0_143 = arith.constant 0 : index
    %c0_144 = arith.constant 0 : index
    %443 = vector.load %arg14[%c0_142, %c0_143, %c0_144] : memref<1x32x128xbf16, #tpu.memory_space<vmem>>, vector<1x32x128xbf16>
    %444 = vector.shape_cast %443 : vector<1x32x128xbf16> to vector<32x128xbf16>
    %c0_145 = arith.constant 0 : index
    %c0_146 = arith.constant 0 : index
    %c0_147 = arith.constant 0 : index
    %445 = vector.load %arg15[%c0_145, %c0_146, %c0_147] : memref<1x1x128xf32, #tpu.memory_space<vmem>>, vector<1x1x128xf32>
    %446 = vector.shape_cast %445 : vector<1x1x128xf32> to vector<1x128xf32>
    %447 = arith.truncf %442 : vector<16x32xf32> to vector<16x32xbf16>
    %cst_148 = arith.constant dense<0.000000e+00> : vector<16x128xf32>
    %448 = tpu.matmul %447, %444, %cst_148 {dimension_numbers = #tpu.dot_dimension_numbers<[1], [0], [0], [1], [0, 0, 1, 1], [], []>} : vector<16x32xbf16>, vector<32x128xbf16>, vector<16x128xf32> -> vector<16x128xf32>
    %449 = vector.broadcast %446 : vector<1x128xf32> to vector<16x128xf32>
    %450 = arith.addf %448, %449 : vector<16x128xf32>
    %cst_149 = arith.constant 0.000000e+00 : f32
    %451 = vector.broadcast %cst_149 : f32 to vector<16x128xf32>
    %452 = arith.maximumf %450, %451 : vector<16x128xf32>
    %c0_150 = arith.constant 0 : index
    %c0_151 = arith.constant 0 : index
    %c0_152 = arith.constant 0 : index
    %453 = vector.load %arg16[%c0_150, %c0_151, %c0_152] : memref<1x128x32xbf16, #tpu.memory_space<vmem>>, vector<1x128x32xbf16>
    %454 = vector.shape_cast %453 : vector<1x128x32xbf16> to vector<128x32xbf16>
    %c0_153 = arith.constant 0 : index
    %c0_154 = arith.constant 0 : index
    %c0_155 = arith.constant 0 : index
    %455 = vector.load %arg17[%c0_153, %c0_154, %c0_155] : memref<1x1x32xf32, #tpu.memory_space<vmem>>, vector<1x1x32xf32>
    %456 = vector.shape_cast %455 : vector<1x1x32xf32> to vector<1x32xf32>
    %457 = arith.truncf %452 : vector<16x128xf32> to vector<16x128xbf16>
    %cst_156 = arith.constant dense<0.000000e+00> : vector<16x32xf32>
    %458 = tpu.matmul %457, %454, %cst_156 {dimension_numbers = #tpu.dot_dimension_numbers<[1], [0], [0], [1], [0, 0, 1, 1], [], []>} : vector<16x128xbf16>, vector<128x32xbf16>, vector<16x32xf32> -> vector<16x32xf32>
    %459 = vector.broadcast %456 : vector<1x32xf32> to vector<16x32xf32>
    %460 = arith.addf %458, %459 : vector<16x32xf32>
    %461 = vector.shape_cast %460 : vector<16x32xf32> to vector<2x8x32xf32>
    %462 = arith.addf %441, %461 : vector<2x8x32xf32>
    %c0_157 = arith.constant 0 : index
    %c0_158 = arith.constant 0 : index
    %c0_159 = arith.constant 0 : index
    %463 = vector.load %arg22[%c0_157, %c0_158, %c0_159] : memref<1x1x32xf32, #tpu.memory_space<vmem>>, vector<1x1x32xf32>
    %464 = vector.shape_cast %463 : vector<1x1x32xf32> to vector<1x32xf32>
    %c0_160 = arith.constant 0 : index
    %c0_161 = arith.constant 0 : index
    %c0_162 = arith.constant 0 : index
    %465 = vector.load %arg23[%c0_160, %c0_161, %c0_162] : memref<1x1x32xf32, #tpu.memory_space<vmem>>, vector<1x1x32xf32>
    %466 = vector.shape_cast %465 : vector<1x1x32xf32> to vector<1x32xf32>
    %cst_163 = arith.constant dense<0.000000e+00> : vector<2x8xf32>
    %467 = vector.multi_reduction <add>, %462, %cst_163 [2] : vector<2x8x32xf32> to vector<2x8xf32>
    %468 = vector.shape_cast %467 : vector<2x8xf32> to vector<2x8x1xf32>
    %cst_164 = arith.constant 3.200000e+01 : f32
    %469 = vector.broadcast %cst_164 : f32 to vector<2x8x1xf32>
    %470 = arith.divf %468, %469 : vector<2x8x1xf32>
    %471 = vector.broadcast %470 : vector<2x8x1xf32> to vector<2x8x32xf32>
    %472 = arith.subf %462, %471 : vector<2x8x32xf32>
    %473 = arith.mulf %472, %472 : vector<2x8x32xf32>
    %cst_165 = arith.constant dense<0.000000e+00> : vector<2x8xf32>
    %474 = vector.multi_reduction <add>, %473, %cst_165 [2] : vector<2x8x32xf32> to vector<2x8xf32>
    %475 = vector.shape_cast %474 : vector<2x8xf32> to vector<2x8x1xf32>
    %cst_166 = arith.constant 3.200000e+01 : f32
    %476 = vector.broadcast %cst_166 : f32 to vector<2x8x1xf32>
    %477 = arith.divf %475, %476 : vector<2x8x1xf32>
    %478 = vector.broadcast %470 : vector<2x8x1xf32> to vector<2x8x32xf32>
    %479 = arith.subf %462, %478 : vector<2x8x32xf32>
    %cst_167 = arith.constant 9.99999974E-6 : f32
    %480 = vector.broadcast %cst_167 : f32 to vector<2x8x1xf32>
    %481 = arith.addf %477, %480 : vector<2x8x1xf32>
    %482 = math.rsqrt %481 : vector<2x8x1xf32>
    %483 = vector.broadcast %482 : vector<2x8x1xf32> to vector<2x8x32xf32>
    %484 = arith.mulf %479, %483 : vector<2x8x32xf32>
    %485 = vector.shape_cast %464 : vector<1x32xf32> to vector<1x1x32xf32>
    %486 = vector.broadcast %485 : vector<1x1x32xf32> to vector<2x8x32xf32>
    %487 = arith.mulf %484, %486 : vector<2x8x32xf32>
    %488 = vector.shape_cast %466 : vector<1x32xf32> to vector<1x1x32xf32>
    %489 = vector.broadcast %488 : vector<1x1x32xf32> to vector<2x8x32xf32>
    %490 = arith.addf %487, %489 : vector<2x8x32xf32>
    %c0_168 = arith.constant 0 : index
    %c0_169 = arith.constant 0 : index
    %c0_170 = arith.constant 0 : index
    %491 = vector.load %arg29[%c0_168, %c0_169, %c0_170] : memref<2x8x32xf32, #tpu.memory_space<vmem>>, vector<2x8x32xf32>
    tpu.vector_store %arg29[%c0_168, %c0_169, %c0_170], %490 {strides = array<i32>} : memref<2x8x32xf32, #tpu.memory_space<vmem>>, vector<2x8x32xf32>,
    %c1_i32 = arith.constant 1 : i32
    %492 = arith.cmpi eq, %arg1, %c1_i32 : i32
    %493 = arith.extui %492 : i1 to i32
    %c0_i32_171 = arith.constant 0 : i32
    %494 = arith.cmpi ne, %493, %c0_i32_171 : i32
    scf.if %494 {
      %495 = vector.extract_strided_slice %490 {offsets = [0, 0, 0], sizes = [2, 1, 32], strides = [1, 1, 1]} : vector<2x8x32xf32> to vector<2x1x32xf32>
      %496 = vector.shape_cast %495 : vector<2x1x32xf32> to vector<2x32xf32>
      %c0_172 = arith.constant 0 : index
      %c0_173 = arith.constant 0 : index
      %497 = vector.load %arg24[%c0_172, %c0_173] : memref<32x32xbf16, #tpu.memory_space<vmem>>, vector<32x32xbf16>
      %c0_174 = arith.constant 0 : index
      %c0_175 = arith.constant 0 : index
      %498 = vector.load %arg25[%c0_174, %c0_175] : memref<1x32xf32, #tpu.memory_space<vmem>>, vector<1x32xf32>
      %499 = arith.truncf %496 : vector<2x32xf32> to vector<2x32xbf16>
      %cst_176 = arith.constant dense<0.000000e+00> : vector<2x32xf32>
      %500 = tpu.matmul %499, %497, %cst_176 {dimension_numbers = #tpu.dot_dimension_numbers<[1], [0], [0], [1], [0, 0, 1, 1], [], []>} : vector<2x32xbf16>, vector<32x32xbf16>, vector<2x32xf32> -> vector<2x32xf32>
      %501 = vector.broadcast %498 : vector<1x32xf32> to vector<2x32xf32>
      %502 = arith.addf %500, %501 : vector<2x32xf32>
      %cst_177 = arith.constant 0.000000e+00 : f32
      %503 = vector.broadcast %cst_177 : f32 to vector<2x32xf32>
      %504 = arith.maximumf %502, %503 : vector<2x32xf32>
      %c0_178 = arith.constant 0 : index
      %c0_179 = arith.constant 0 : index
      %505 = vector.load %arg26[%c0_178, %c0_179] : memref<32x2xbf16, #tpu.memory_space<vmem>>, vector<32x2xbf16>
      %c0_180 = arith.constant 0 : index
      %c0_181 = arith.constant 0 : index
      %506 = vector.load %arg27[%c0_180, %c0_181] : memref<1x2xf32, #tpu.memory_space<vmem>>, vector<1x2xf32>
      %507 = arith.truncf %504 : vector<2x32xf32> to vector<2x32xbf16>
      %cst_182 = arith.constant dense<0.000000e+00> : vector<2x2xf32>
      %508 = tpu.matmul %507, %505, %cst_182 {dimension_numbers = #tpu.dot_dimension_numbers<[1], [0], [0], [1], [0, 0, 1, 1], [], []>} : vector<2x32xbf16>, vector<32x2xbf16>, vector<2x2xf32> -> vector<2x2xf32>
      %509 = vector.broadcast %506 : vector<1x2xf32> to vector<2x2xf32>
      %510 = arith.addf %508, %509 : vector<2x2xf32>
      %c0_183 = arith.constant 0 : index
      %c0_184 = arith.constant 0 : index
      %511 = vector.load %arg28[%c0_183, %c0_184] : memref<2x2xf32, #tpu.memory_space<vmem>>, vector<2x2xf32>
      tpu.vector_store %arg28[%c0_183, %c0_184], %510 {strides = array<i32>} : memref<2x2xf32, #tpu.memory_space<vmem>>, vector<2x2xf32>,
    } else {
    }
    return
  }
  func.func @transform_0(%arg0: i32, %arg1: i32) -> (i32, i32, i32) {
    %c0_i32 = arith.constant 0 : i32
    %c0_i32_0 = arith.constant 0 : i32
    %c0_i32_1 = arith.constant 0 : i32
    return %arg0, %c0_i32, %c0_i32_0 : i32, i32, i32
  }
  func.func @transform_1(%arg0: i32, %arg1: i32) -> (i32, i32, i32) {
    %c0_i32 = arith.constant 0 : i32
    %c0_i32_0 = arith.constant 0 : i32
    %c0_i32_1 = arith.constant 0 : i32
    return %arg0, %c0_i32, %c0_i32_0 : i32, i32, i32
  }
  func.func @transform_2(%arg0: i32, %arg1: i32) -> (i32, i32, i32) {
    %c0_i32 = arith.constant 0 : i32
    %c0_i32_0 = arith.constant 0 : i32
    %c0_i32_1 = arith.constant 0 : i32
    return %arg1, %c0_i32, %c0_i32_0 : i32, i32, i32
  }
  func.func @transform_3(%arg0: i32, %arg1: i32) -> (i32, i32, i32) {
    %c0_i32 = arith.constant 0 : i32
    %c0_i32_0 = arith.constant 0 : i32
    %c0_i32_1 = arith.constant 0 : i32
    return %arg1, %c0_i32, %c0_i32_0 : i32, i32, i32
  }
  func.func @transform_4(%arg0: i32, %arg1: i32) -> (i32, i32, i32) {
    %c0_i32 = arith.constant 0 : i32
    %c0_i32_0 = arith.constant 0 : i32
    %c0_i32_1 = arith.constant 0 : i32
    return %arg1, %c0_i32, %c0_i32_0 : i32, i32, i32
  }
  func.func @transform_5(%arg0: i32, %arg1: i32) -> (i32, i32, i32) {
    %c0_i32 = arith.constant 0 : i32
    %c0_i32_0 = arith.constant 0 : i32
    %c0_i32_1 = arith.constant 0 : i32
    return %arg1, %c0_i32, %c0_i32_0 : i32, i32, i32
  }
  func.func @transform_6(%arg0: i32, %arg1: i32) -> (i32, i32, i32) {
    %c0_i32 = arith.constant 0 : i32
    %c0_i32_0 = arith.constant 0 : i32
    %c0_i32_1 = arith.constant 0 : i32
    return %arg1, %c0_i32, %c0_i32_0 : i32, i32, i32
  }
  func.func @transform_7(%arg0: i32, %arg1: i32) -> (i32, i32, i32) {
    %c0_i32 = arith.constant 0 : i32
    %c0_i32_0 = arith.constant 0 : i32
    %c0_i32_1 = arith.constant 0 : i32
    return %arg1, %c0_i32, %c0_i32_0 : i32, i32, i32
  }
  func.func @transform_8(%arg0: i32, %arg1: i32) -> (i32, i32, i32) {
    %c0_i32 = arith.constant 0 : i32
    %c0_i32_0 = arith.constant 0 : i32
    %c0_i32_1 = arith.constant 0 : i32
    return %arg1, %c0_i32, %c0_i32_0 : i32, i32, i32
  }
  func.func @transform_9(%arg0: i32, %arg1: i32) -> (i32, i32, i32) {
    %c0_i32 = arith.constant 0 : i32
    %c0_i32_0 = arith.constant 0 : i32
    %c0_i32_1 = arith.constant 0 : i32
    return %arg1, %c0_i32, %c0_i32_0 : i32, i32, i32
  }
  func.func @transform_10(%arg0: i32, %arg1: i32) -> (i32, i32, i32) {
    %c0_i32 = arith.constant 0 : i32
    %c0_i32_0 = arith.constant 0 : i32
    %c0_i32_1 = arith.constant 0 : i32
    return %arg1, %c0_i32, %c0_i32_0 : i32, i32, i32
  }
  func.func @transform_11(%arg0: i32, %arg1: i32) -> (i32, i32, i32) {
    %c0_i32 = arith.constant 0 : i32
    %c0_i32_0 = arith.constant 0 : i32
    %c0_i32_1 = arith.constant 0 : i32
    return %arg1, %c0_i32, %c0_i32_0 : i32, i32, i32
  }
  func.func @transform_12(%arg0: i32, %arg1: i32) -> (i32, i32, i32) {
    %c0_i32 = arith.constant 0 : i32
    %c0_i32_0 = arith.constant 0 : i32
    %c0_i32_1 = arith.constant 0 : i32
    return %arg1, %c0_i32, %c0_i32_0 : i32, i32, i32
  }
  func.func @transform_13(%arg0: i32, %arg1: i32) -> (i32, i32, i32) {
    %c0_i32 = arith.constant 0 : i32
    %c0_i32_0 = arith.constant 0 : i32
    %c0_i32_1 = arith.constant 0 : i32
    return %arg1, %c0_i32, %c0_i32_0 : i32, i32, i32
  }
  func.func @transform_14(%arg0: i32, %arg1: i32) -> (i32, i32, i32) {
    %c0_i32 = arith.constant 0 : i32
    %c0_i32_0 = arith.constant 0 : i32
    %c0_i32_1 = arith.constant 0 : i32
    return %arg1, %c0_i32, %c0_i32_0 : i32, i32, i32
  }
  func.func @transform_15(%arg0: i32, %arg1: i32) -> (i32, i32, i32) {
    %c0_i32 = arith.constant 0 : i32
    %c0_i32_0 = arith.constant 0 : i32
    %c0_i32_1 = arith.constant 0 : i32
    return %arg1, %c0_i32, %c0_i32_0 : i32, i32, i32
  }
  func.func @transform_16(%arg0: i32, %arg1: i32) -> (i32, i32, i32) {
    %c0_i32 = arith.constant 0 : i32
    %c0_i32_0 = arith.constant 0 : i32
    %c0_i32_1 = arith.constant 0 : i32
    return %arg1, %c0_i32, %c0_i32_0 : i32, i32, i32
  }
  func.func @transform_17(%arg0: i32, %arg1: i32) -> (i32, i32, i32) {
    %c0_i32 = arith.constant 0 : i32
    %c0_i32_0 = arith.constant 0 : i32
    %c0_i32_1 = arith.constant 0 : i32
    return %arg1, %c0_i32, %c0_i32_0 : i32, i32, i32
  }
  func.func @transform_18(%arg0: i32, %arg1: i32) -> (i32, i32, i32) {
    %c0_i32 = arith.constant 0 : i32
    %c0_i32_0 = arith.constant 0 : i32
    %c0_i32_1 = arith.constant 0 : i32
    return %arg1, %c0_i32, %c0_i32_0 : i32, i32, i32
  }
  func.func @transform_19(%arg0: i32, %arg1: i32) -> (i32, i32, i32) {
    %c0_i32 = arith.constant 0 : i32
    %c0_i32_0 = arith.constant 0 : i32
    %c0_i32_1 = arith.constant 0 : i32
    return %arg1, %c0_i32, %c0_i32_0 : i32, i32, i32
  }
  func.func @transform_20(%arg0: i32, %arg1: i32) -> (i32, i32, i32) {
    %c0_i32 = arith.constant 0 : i32
    %c0_i32_0 = arith.constant 0 : i32
    %c0_i32_1 = arith.constant 0 : i32
    return %arg1, %c0_i32, %c0_i32_0 : i32, i32, i32
  }
  func.func @transform_21(%arg0: i32, %arg1: i32) -> (i32, i32, i32) {
    %c0_i32 = arith.constant 0 : i32
    %c0_i32_0 = arith.constant 0 : i32
    %c0_i32_1 = arith.constant 0 : i32
    return %arg1, %c0_i32, %c0_i32_0 : i32, i32, i32
  }
  func.func @transform_22(%arg0: i32, %arg1: i32) -> (i32, i32) {
    %c0_i32 = arith.constant 0 : i32
    %c0_i32_0 = arith.constant 0 : i32
    %c0_i32_1 = arith.constant 0 : i32
    return %c0_i32, %c0_i32_0 : i32, i32
  }
  func.func @transform_23(%arg0: i32, %arg1: i32) -> (i32, i32) {
    %c0_i32 = arith.constant 0 : i32
    %c0_i32_0 = arith.constant 0 : i32
    %c0_i32_1 = arith.constant 0 : i32
    return %c0_i32, %c0_i32_0 : i32, i32
  }
  func.func @transform_24(%arg0: i32, %arg1: i32) -> (i32, i32) {
    %c0_i32 = arith.constant 0 : i32
    %c0_i32_0 = arith.constant 0 : i32
    %c0_i32_1 = arith.constant 0 : i32
    return %c0_i32, %c0_i32_0 : i32, i32
  }
  func.func @transform_25(%arg0: i32, %arg1: i32) -> (i32, i32) {
    %c0_i32 = arith.constant 0 : i32
    %c0_i32_0 = arith.constant 0 : i32
    %c0_i32_1 = arith.constant 0 : i32
    return %c0_i32, %c0_i32_0 : i32, i32
  }
  func.func @transform_26(%arg0: i32, %arg1: i32) -> (i32, i32) {
    %c0_i32 = arith.constant 0 : i32
    %c0_i32_0 = arith.constant 0 : i32
    return %arg0, %c0_i32 : i32, i32
  }
}

</mosaic_0001>

<llo_original>
// kernel: tpu_custom_call.1
$region0: #{tpu_custom_call.1}
  #allocation0 [shape = 'u32[]', space=smem, size = 0x4, offset = 0x4, fixed_abs, tag = 'smem constant byte address 0x4 - core index']
  #allocation1 [shape = 'u32[72,128]{1,0:T(1,128)}', space=vmem, size = 0x9000, scoped, tag = 'internal scratch']
  #allocation2 [shape = 'f32[2,8,32]{2,1,0:T(8,128)}', space=vmem, size = 0x2000, scoped, tag = 'scratch operand']
  %s0 = inlined_call_operand.hbm [shape: bf16[2,8,32], index: 0, kind: input, shape index: {}]
  %s1 = inlined_call_operand.vmem [shape: bf16[2,16,32], index: 1, kind: input, shape index: {}]
  %s2 = inlined_call_operand.vmem [shape: bf16[2,32,96], index: 2, kind: input, shape index: {}]
  %s3 = inlined_call_operand.hbm [shape: f32[2,1,96], index: 3, kind: input, shape index: {}]
  %s4 = inlined_call_operand.vmem [shape: bf16[2,32,32], index: 4, kind: input, shape index: {}]
  %s5 = inlined_call_operand.hbm [shape: f32[2,1,32], index: 5, kind: input, shape index: {}]
  %s6 = inlined_call_operand.vmem [shape: bf16[2,32,32], index: 6, kind: input, shape index: {}]
  %s7 = inlined_call_operand.hbm [shape: f32[2,1,32], index: 7, kind: input, shape index: {}]
  %s8 = inlined_call_operand.vmem [shape: bf16[2,32,64], index: 8, kind: input, shape index: {}]
  %s9 = inlined_call_operand.hbm [shape: f32[2,1,64], index: 9, kind: input, shape index: {}]
  %s10 = inlined_call_operand.vmem [shape: bf16[2,32,32], index: 10, kind: input, shape index: {}]
  %s11 = inlined_call_operand.hbm [shape: f32[2,1,32], index: 11, kind: input, shape index: {}]
  %s12 = inlined_call_operand.hbm [shape: bf16[2,32,128], index: 12, kind: input, shape index: {}]
  %s13 = inlined_call_operand.hbm [shape: f32[2,1,128], index: 13, kind: input, shape index: {}]
  %s14 = inlined_call_operand.vmem [shape: bf16[2,128,32], index: 14, kind: input, shape index: {}]
  %s15 = inlined_call_operand.hbm [shape: f32[2,1,32], index: 15, kind: input, shape index: {}]
  %s16 = inlined_call_operand.hbm [shape: f32[2,1,32], index: 16, kind: input, shape index: {}]
  %s17 = inlined_call_operand.hbm [shape: f32[2,1,32], index: 17, kind: input, shape index: {}]
  %s18 = inlined_call_operand.hbm [shape: f32[2,1,32], index: 18, kind: input, shape index: {}]
  %s19 = inlined_call_operand.hbm [shape: f32[2,1,32], index: 19, kind: input, shape index: {}]
  %s20 = inlined_call_operand.hbm [shape: f32[2,1,32], index: 20, kind: input, shape index: {}]
  %s21 = inlined_call_operand.vmem [shape: f32[2,1,32], index: 21, kind: input, shape index: {}]
  %s22 = inlined_call_operand.vmem [shape: bf16[32,32], index: 22, kind: input, shape index: {}]
  %s23 = inlined_call_operand.vmem [shape: f32[1,32], index: 23, kind: input, shape index: {}]
  %s24 = inlined_call_operand.vmem [shape: bf16[32,2], index: 24, kind: input, shape index: {}]
  %s25 = inlined_call_operand.vmem [shape: f32[1,2], index: 25, kind: input, shape index: {}]
  %s26 = inlined_call_operand.hbm [shape: f32[2,2], index: 26, kind: output, shape index: {}]
  %s27 = sld [smem:[#allocation0]]
  $region201: #{tpu_custom_call.1} parent=0
    _
  %s29 = ssub.s32 1, %s27
  %s30 = scalar_select 0, %s29, %s27
  $region1: #{tpu_custom_call.1} parent=0
    #allocation3 [shape = 'u8[4096]{0}', space=vmem, size = 0x1000, scoped, tag = 'input window, operand 0, single buffered']
    #allocation4 [shape = 's32[2]{0}', space=sflag, size = 0x8, scoped, tag = 'scoped memory for tpu_custom_call.1']
    #allocation5 [shape = 's32[2]{0}', space=sflag, size = 0x8, scoped, tag = 'scoped memory for tpu_custom_call.1']
    #allocation6 [shape = 'u8[1024]{0}', space=vmem, size = 0x400, scoped, tag = 'input window, operand 3']
    #allocation7 [shape = 's32[2]{0}', space=sflag, size = 0x8, scoped, tag = 'scoped memory for tpu_custom_call.1']
    #allocation8 [shape = 'u8[1024]{0}', space=vmem, size = 0x400, scoped, tag = 'input window, operand 5']
    #allocation9 [shape = 'u8[1024]{0}', space=vmem, size = 0x400, scoped, tag = 'input window, operand 7']
    #allocation10 [shape = 's32[2]{0}', space=sflag, size = 0x8, scoped, tag = 'scoped memory for tpu_custom_call.1']
    #allocation11 [shape = 'u8[1024]{0}', space=vmem, size = 0x400, scoped, tag = 'input window, operand 9']
    #allocation12 [shape = 'u8[1024]{0}', space=vmem, size = 0x400, scoped, tag = 'input window, operand 11']
    #allocation13 [shape = 's32[2]{0}', space=sflag, size = 0x8, scoped, tag = 'scoped memory for tpu_custom_call.1']
    #allocation14 [shape = 'u8[16384]{0}', space=vmem, size = 0x4000, scoped, tag = 'input window, operand 12']
    #allocation15 [shape = 'u8[1024]{0}', space=vmem, size = 0x400, scoped, tag = 'input window, operand 13']
    #allocation16 [shape = 's32[2]{0}', space=sflag, size = 0x8, scoped, tag = 'scoped memory for tpu_custom_call.1']
    #allocation17 [shape = 'u8[1024]{0}', space=vmem, size = 0x400, scoped, tag = 'input window, operand 15']
    #allocation18 [shape = 'u8[1024]{0}', space=vmem, size = 0x400, scoped, tag = 'input window, operand 16']
    #allocation19 [shape = 's32[2]{0}', space=sflag, size = 0x8, scoped, tag = 'scoped memory for tpu_custom_call.1']
    #allocation20 [shape = 'u8[1024]{0}', space=vmem, size = 0x400, scoped, tag = 'input window, operand 17']
    #allocation21 [shape = 'u8[1024]{0}', space=vmem, size = 0x400, scoped, tag = 'input window, operand 18']
    #allocation22 [shape = 's32[2]{0}', space=sflag, size = 0x8, scoped, tag = 'scoped memory for tpu_custom_call.1']
    #allocation23 [shape = 'u8[1024]{0}', space=vmem, size = 0x400, scoped, tag = 'input window, operand 19']
    #allocation24 [shape = 'u8[1024]{0}', space=vmem, size = 0x400, scoped, tag = 'input window, operand 20']
    #allocation25 [shape = 's32[2]{0}', space=sflag, size = 0x8, scoped, tag = 'scoped memory for tpu_custom_call.1']
    #allocation26 [shape = 'u8[1024]{0}', space=vmem, size = 0x400, scoped, tag = 'output window, operand 0, single buffered']
    %31 = vsyncpa [#allocation4], 0
    %32 = vsyncpa [#allocation7], 0
    %s33 = scalar_lea.sflag [#allocation7], 1
    %34 = vsyncpa %s33, 0
    %35 = vsyncpa [#allocation10], 0
    %s36 = scalar_lea.sflag [#allocation10], 1
    %37 = vsyncpa %s36, 0
    %38 = vsyncpa [#allocation13], 0
    %s39 = scalar_lea.sflag [#allocation13], 1
    %40 = vsyncpa %s39, 0
    %41 = vsyncpa [#allocation16], 0
    %s42 = scalar_lea.sflag [#allocation16], 1
    %43 = vsyncpa %s42, 0
    %44 = vsyncpa [#allocation19], 0
    %s45 = scalar_lea.sflag [#allocation19], 1
    %46 = vsyncpa %s45, 0
    %47 = vsyncpa [#allocation22], 0
    %s48 = scalar_lea.sflag [#allocation22], 1
    %49 = vsyncpa %s48, 0
    %50 = vsyncpa [#allocation25], 0
    %s51 = scalar_lea.sflag [#allocation25], 1
    %52 = vsyncpa %s51, 0
    %53 = vsyncpa [#allocation5], 0
    loop: start=0, step=1, limit=4
    $region2: #{tpu_custom_call.1} parent=1 // loop_pre_header
      _
    $region3: #{tpu_custom_call.1} parent=1 // loop_header
      %s55 = sphi 0, %s59
      %p56 = scmp.ge.s32.totalorder %s55, 4
      %s62 = sphi 0, %s74
      %s63 = sphi 0, %s70
      %s64 = sphi 0, %s62
      %s65 = sphi 0, %s63
      %s66 = sphi 0, %s64
      %s67 = sphi 0, %s65
      %s77 = sphi 0, %s79
      %s80 = sphi 0, %s77
      %s81 = sphi 0, %s80
      %s97 = sphi 0, %s81
      %s103 = sphi 0, %s105
      %s106 = sphi 0, %s103
      %s107 = sphi 0, %s106
      %s123 = sphi 0, %s107
      %s129 = sphi 0, %s131
      %s132 = sphi 0, %s129
      %s133 = sphi 0, %s132
      %s149 = sphi 0, %s133
      %s155 = sphi 0, %s157
      %s158 = sphi 0, %s155
      %s159 = sphi 0, %s158
      %s175 = sphi 0, %s159
      %s181 = sphi 0, %s183
      %s184 = sphi 0, %s181
      %s185 = sphi 0, %s184
      %s201 = sphi 0, %s185
      %s207 = sphi 0, %s209
      %s210 = sphi 0, %s207
      %s211 = sphi 0, %s210
      %s227 = sphi 0, %s211
      %s233 = sphi 0, %s235
      %s236 = sphi 0, %s233
      %s237 = sphi 0, %s236
      %s253 = sphi 0, %s237
      %s259 = sphi 0, %s261
      %s262 = sphi 0, %s259
      %s263 = sphi 0, %s262
      %s279 = sphi 0, %s263
      %s285 = sphi 0, %s287
      %s288 = sphi 0, %s285
      %s289 = sphi 0, %s288
      %s305 = sphi 0, %s289
      %s311 = sphi 0, %s313
      %s314 = sphi 0, %s311
      %s315 = sphi 0, %s314
      %s331 = sphi 0, %s315
      %s337 = sphi 0, %s339
      %s340 = sphi 0, %s337
      %s341 = sphi 0, %s340
      %s357 = sphi 0, %s341
      %s363 = sphi 0, %s365
      %s366 = sphi 0, %s363
      %s367 = sphi 0, %s366
      %s383 = sphi 0, %s367
      %s389 = sphi 0, %s391
      %s392 = sphi 0, %s389
      %s393 = sphi 0, %s392
      %s409 = sphi 0, %s393
      %s415 = sphi 0, %s417
      %s418 = sphi 0, %s415
      %s419 = sphi 0, %s418
      %s435 = sphi 0, %s419
      %s441 = sphi 0, %s443
      %s444 = sphi 0, %s441
      %s445 = sphi 0, %s444
      %s461 = sphi 0, %s445
      %s467 = sphi 0, %s469
      %s470 = sphi 0, %s467
      %s471 = sphi 0, %s470
      %s487 = sphi 0, %s471
      %s493 = sphi 0, %s495
      %s496 = sphi 0, %s493
      %s497 = sphi 0, %s496
      %s513 = sphi 0, %s497
      %s519 = sphi 0, %s521
      %s522 = sphi 0, %s519
      %s523 = sphi 0, %s522
      %s539 = sphi 0, %s523
      %s545 = sphi 0, %s547
      %s548 = sphi 0, %s545
      %s549 = sphi 0, %s548
      %s565 = sphi 0, %s549
      %s571 = sphi 0, %s573
      %s574 = sphi 0, %s571
      %s575 = sphi 0, %s574
      %s591 = sphi 0, %s575
      %s597 = sphi 0, %s599
      %s600 = sphi 0, %s597
      %s601 = sphi 0, %s600
      %s617 = sphi 0, %s601
      %s623 = sphi 0, %s625
      %s626 = sphi 0, %s623
      %s627 = sphi 0, %s626
      %s643 = sphi 0, %s627
      %s647 = sphi 0, %s647
      %s649 = sphi 0, %s647
      %s650 = sphi 0, %s649
      %s664 = sphi 0, %s650
      %s668 = sphi 0, %s668
      %s670 = sphi 0, %s668
      %s671 = sphi 0, %s670
      %s685 = sphi 0, %s671
      %s689 = sphi 0, %s689
      %s691 = sphi 0, %s689
      %s692 = sphi 0, %s691
      %s706 = sphi 0, %s692
      %s710 = sphi 0, %s710
      %s712 = sphi 0, %s710
      %s713 = sphi 0, %s712
      %s727 = sphi 0, %s713
      %s733 = sphi 0, %s735
      %s736 = sphi 0, %s733
      %s737 = sphi 0, %s736
      %s753 = sphi 0, %s737
    $region4: #{tpu_custom_call.1} parent=1 // loop_header_branch
      %58 = sbr.rel (%p56) target = $region8
    $region5: #{tpu_custom_call.1} parent=1 // loop_body
      %s60 = ssub.s32 %s55, 1
      %s61 = ssub.s32 %s55, 2
      %s68 = sadd.s32 1, %s63
      %p69 = scmp.ge.s32.totalorder %s68, 2
      %s70 = scalar_select %p69, 0, %s68
      %s71 = sadd.s32 1, %s62
      %s72 = scalar_select %p69, %s71, %s62
      %p73 = scmp.ge.s32.totalorder %s72, 1
      %s74 = scalar_select %p73, 0, %s72
      %s75 = ssub.s32 %s62, %s74
      %p76 = scmp.eq.s32.totalorder %s75, 0
      %s78 = sadd.s32 %s77, 1
      %s79 = scalar_select %p76, %s77, %s78
      %p82 = pneg %p76
      %p83 = scmp.eq.s32.totalorder %s55, 1
      %p84 = por %p82, %p83
      %p85 = scmp.ne.s32.totalorder %s77, %s80
      %p86 = scmp.eq.s32.totalorder %s55, 0
      %p87 = por %p85, %p86
      %p88 = scmp.ne.s32.totalorder %s77, %s80
      %p89 = scmp.eq.s32.totalorder %s60, 1
      %p90 = por %p88, %p89
      %p91 = scmp.ne.s32.totalorder %s80, %s81
      %p92 = scmp.eq.s32.totalorder %s60, 0
      %p93 = por %p91, %p92
      %p94 = scmp.ne.s32.totalorder %s80, %s81
      %p95 = scmp.eq.s32.totalorder %s61, 1
      %p96 = por %p94, %p95
      %p98 = scmp.ne.s32.totalorder %s81, %s97
      %p99 = scmp.eq.s32.totalorder %s61, 0
      %p100 = por %p98, %p99
      %s101 = ssub.s32 %s62, %s74
      %p102 = scmp.eq.s32.totalorder %s101, 0
      %s104 = sadd.s32 %s103, 1
      %s105 = scalar_select %p102, %s103, %s104
      %p108 = pneg %p102
      %p109 = scmp.eq.s32.totalorder %s55, 1
      %p110 = por %p108, %p109
      %p111 = scmp.ne.s32.totalorder %s103, %s106
      %p112 = scmp.eq.s32.totalorder %s55, 0
      %p113 = por %p111, %p112
      %p114 = scmp.ne.s32.totalorder %s103, %s106
      %p115 = scmp.eq.s32.totalorder %s60, 1
      %p116 = por %p114, %p115
      %p117 = scmp.ne.s32.totalorder %s106, %s107
      %p118 = scmp.eq.s32.totalorder %s60, 0
      %p119 = por %p117, %p118
      %p120 = scmp.ne.s32.totalorder %s106, %s107
      %p121 = scmp.eq.s32.totalorder %s61, 1
      %p122 = por %p120, %p121
      %p124 = scmp.ne.s32.totalorder %s107, %s123
      %p125 = scmp.eq.s32.totalorder %s61, 0
      %p126 = por %p124, %p125
      %s127 = ssub.s32 %s63, %s70
      %p128 = scmp.eq.s32.totalorder %s127, 0
      %s130 = sadd.s32 %s129, 1
      %s131 = scalar_select %p128, %s129, %s130
      %p134 = pneg %p128
      %p135 = scmp.eq.s32.totalorder %s55, 1
      %p136 = por %p134, %p135
      %p137 = scmp.ne.s32.totalorder %s129, %s132
      %p138 = scmp.eq.s32.totalorder %s55, 0
      %p139 = por %p137, %p138
      %p140 = scmp.ne.s32.totalorder %s129, %s132
      %p141 = scmp.eq.s32.totalorder %s60, 1
      %p142 = por %p140, %p141
      %p143 = scmp.ne.s32.totalorder %s132, %s133
      %p144 = scmp.eq.s32.totalorder %s60, 0
      %p145 = por %p143, %p144
      %p146 = scmp.ne.s32.totalorder %s132, %s133
      %p147 = scmp.eq.s32.totalorder %s61, 1
      %p148 = por %p146, %p147
      %p150 = scmp.ne.s32.totalorder %s133, %s149
      %p151 = scmp.eq.s32.totalorder %s61, 0
      %p152 = por %p150, %p151
      %s153 = ssub.s32 %s63, %s70
      %p154 = scmp.eq.s32.totalorder %s153, 0
      %s156 = sadd.s32 %s155, 1
      %s157 = scalar_select %p154, %s155, %s156
      %p160 = pneg %p154
      %p161 = scmp.eq.s32.totalorder %s55, 1
      %p162 = por %p160, %p161
      %p163 = scmp.ne.s32.totalorder %s155, %s158
      %p164 = scmp.eq.s32.totalorder %s55, 0
      %p165 = por %p163, %p164
      %p166 = scmp.ne.s32.totalorder %s155, %s158
      %p167 = scmp.eq.s32.totalorder %s60, 1
      %p168 = por %p166, %p167
      %p169 = scmp.ne.s32.totalorder %s158, %s159
      %p170 = scmp.eq.s32.totalorder %s60, 0
      %p171 = por %p169, %p170
      %p172 = scmp.ne.s32.totalorder %s158, %s159
      %p173 = scmp.eq.s32.totalorder %s61, 1
      %p174 = por %p172, %p173
      %p176 = scmp.ne.s32.totalorder %s159, %s175
      %p177 = scmp.eq.s32.totalorder %s61, 0
      %p178 = por %p176, %p177
      %s179 = ssub.s32 %s63, %s70
      %p180 = scmp.eq.s32.totalorder %s179, 0
      %s182 = sadd.s32 %s181, 1
      %s183 = scalar_select %p180, %s181, %s182
      %p186 = pneg %p180
      %p187 = scmp.eq.s32.totalorder %s55, 1
      %p188 = por %p186, %p187
      %p189 = scmp.ne.s32.totalorder %s181, %s184
      %p190 = scmp.eq.s32.totalorder %s55, 0
      %p191 = por %p189, %p190
      %p192 = scmp.ne.s32.totalorder %s181, %s184
      %p193 = scmp.eq.s32.totalorder %s60, 1
      %p194 = por %p192, %p193
      %p195 = scmp.ne.s32.totalorder %s184, %s185
      %p196 = scmp.eq.s32.totalorder %s60, 0
      %p197 = por %p195, %p196
      %p198 = scmp.ne.s32.totalorder %s184, %s185
      %p199 = scmp.eq.s32.totalorder %s61, 1
      %p200 = por %p198, %p199
      %p202 = scmp.ne.s32.totalorder %s185, %s201
      %p203 = scmp.eq.s32.totalorder %s61, 0
      %p204 = por %p202, %p203
      %s205 = ssub.s32 %s63, %s70
      %p206 = scmp.eq.s32.totalorder %s205, 0
      %s208 = sadd.s32 %s207, 1
      %s209 = scalar_select %p206, %s207, %s208
      %p212 = pneg %p206
      %p213 = scmp.eq.s32.totalorder %s55, 1
      %p214 = por %p212, %p213
      %p215 = scmp.ne.s32.totalorder %s207, %s210
      %p216 = scmp.eq.s32.totalorder %s55, 0
      %p217 = por %p215, %p216
      %p218 = scmp.ne.s32.totalorder %s207, %s210
      %p219 = scmp.eq.s32.totalorder %s60, 1
      %p220 = por %p218, %p219
      %p221 = scmp.ne.s32.totalorder %s210, %s211
      %p222 = scmp.eq.s32.totalorder %s60, 0
      %p223 = por %p221, %p222
      %p224 = scmp.ne.s32.totalorder %s210, %s211
      %p225 = scmp.eq.s32.totalorder %s61, 1
      %p226 = por %p224, %p225
      %p228 = scmp.ne.s32.totalorder %s211, %s227
      %p229 = scmp.eq.s32.totalorder %s61, 0
      %p230 = por %p228, %p229
      %s231 = ssub.s32 %s63, %s70
      %p232 = scmp.eq.s32.totalorder %s231, 0
      %s234 = sadd.s32 %s233, 1
      %s235 = scalar_select %p232, %s233, %s234
      %p238 = pneg %p232
      %p239 = scmp.eq.s32.totalorder %s55, 1
      %p240 = por %p238, %p239
      %p241 = scmp.ne.s32.totalorder %s233, %s236
      %p242 = scmp.eq.s32.totalorder %s55, 0
      %p243 = por %p241, %p242
      %p244 = scmp.ne.s32.totalorder %s233, %s236
      %p245 = scmp.eq.s32.totalorder %s60, 1
      %p246 = por %p244, %p245
      %p247 = scmp.ne.s32.totalorder %s236, %s237
      %p248 = scmp.eq.s32.totalorder %s60, 0
      %p249 = por %p247, %p248
      %p250 = scmp.ne.s32.totalorder %s236, %s237
      %p251 = scmp.eq.s32.totalorder %s61, 1
      %p252 = por %p250, %p251
      %p254 = scmp.ne.s32.totalorder %s237, %s253
      %p255 = scmp.eq.s32.totalorder %s61, 0
      %p256 = por %p254, %p255
      %s257 = ssub.s32 %s63, %s70
      %p258 = scmp.eq.s32.totalorder %s257, 0
      %s260 = sadd.s32 %s259, 1
      %s261 = scalar_select %p258, %s259, %s260
      %p264 = pneg %p258
      %p265 = scmp.eq.s32.totalorder %s55, 1
      %p266 = por %p264, %p265
      %p267 = scmp.ne.s32.totalorder %s259, %s262
      %p268 = scmp.eq.s32.totalorder %s55, 0
      %p269 = por %p267, %p268
      %p270 = scmp.ne.s32.totalorder %s259, %s262
      %p271 = scmp.eq.s32.totalorder %s60, 1
      %p272 = por %p270, %p271
      %p273 = scmp.ne.s32.totalorder %s262, %s263
      %p274 = scmp.eq.s32.totalorder %s60, 0
      %p275 = por %p273, %p274
      %p276 = scmp.ne.s32.totalorder %s262, %s263
      %p277 = scmp.eq.s32.totalorder %s61, 1
      %p278 = por %p276, %p277
      %p280 = scmp.ne.s32.totalorder %s263, %s279
      %p281 = scmp.eq.s32.totalorder %s61, 0
      %p282 = por %p280, %p281
      %s283 = ssub.s32 %s63, %s70
      %p284 = scmp.eq.s32.totalorder %s283, 0
      %s286 = sadd.s32 %s285, 1
      %s287 = scalar_select %p284, %s285, %s286
      %p290 = pneg %p284
      %p291 = scmp.eq.s32.totalorder %s55, 1
      %p292 = por %p290, %p291
      %p293 = scmp.ne.s32.totalorder %s285, %s288
      %p294 = scmp.eq.s32.totalorder %s55, 0
      %p295 = por %p293, %p294
      %p296 = scmp.ne.s32.totalorder %s285, %s288
      %p297 = scmp.eq.s32.totalorder %s60, 1
      %p298 = por %p296, %p297
      %p299 = scmp.ne.s32.totalorder %s288, %s289
      %p300 = scmp.eq.s32.totalorder %s60, 0
      %p301 = por %p299, %p300
      %p302 = scmp.ne.s32.totalorder %s288, %s289
      %p303 = scmp.eq.s32.totalorder %s61, 1
      %p304 = por %p302, %p303
      %p306 = scmp.ne.s32.totalorder %s289, %s305
      %p307 = scmp.eq.s32.totalorder %s61, 0
      %p308 = por %p306, %p307
      %s309 = ssub.s32 %s63, %s70
      %p310 = scmp.eq.s32.totalorder %s309, 0
      %s312 = sadd.s32 %s311, 1
      %s313 = scalar_select %p310, %s311, %s312
      %p316 = pneg %p310
      %p317 = scmp.eq.s32.totalorder %s55, 1
      %p318 = por %p316, %p317
      %p319 = scmp.ne.s32.totalorder %s311, %s314
      %p320 = scmp.eq.s32.totalorder %s55, 0
      %p321 = por %p319, %p320
      %p322 = scmp.ne.s32.totalorder %s311, %s314
      %p323 = scmp.eq.s32.totalorder %s60, 1
      %p324 = por %p322, %p323
      %p325 = scmp.ne.s32.totalorder %s314, %s315
      %p326 = scmp.eq.s32.totalorder %s60, 0
      %p327 = por %p325, %p326
      %p328 = scmp.ne.s32.totalorder %s314, %s315
      %p329 = scmp.eq.s32.totalorder %s61, 1
      %p330 = por %p328, %p329
      %p332 = scmp.ne.s32.totalorder %s315, %s331
      %p333 = scmp.eq.s32.totalorder %s61, 0
      %p334 = por %p332, %p333
      %s335 = ssub.s32 %s63, %s70
      %p336 = scmp.eq.s32.totalorder %s335, 0
      %s338 = sadd.s32 %s337, 1
      %s339 = scalar_select %p336, %s337, %s338
      %p342 = pneg %p336
      %p343 = scmp.eq.s32.totalorder %s55, 1
      %p344 = por %p342, %p343
      %p345 = scmp.ne.s32.totalorder %s337, %s340
      %p346 = scmp.eq.s32.totalorder %s55, 0
      %p347 = por %p345, %p346
      %p348 = scmp.ne.s32.totalorder %s337, %s340
      %p349 = scmp.eq.s32.totalorder %s60, 1
      %p350 = por %p348, %p349
      %p351 = scmp.ne.s32.totalorder %s340, %s341
      %p352 = scmp.eq.s32.totalorder %s60, 0
      %p353 = por %p351, %p352
      %p354 = scmp.ne.s32.totalorder %s340, %s341
      %p355 = scmp.eq.s32.totalorder %s61, 1
      %p356 = por %p354, %p355
      %p358 = scmp.ne.s32.totalorder %s341, %s357
      %p359 = scmp.eq.s32.totalorder %s61, 0
      %p360 = por %p358, %p359
      %s361 = ssub.s32 %s63, %s70
      %p362 = scmp.eq.s32.totalorder %s361, 0
      %s364 = sadd.s32 %s363, 1
      %s365 = scalar_select %p362, %s363, %s364
      %p368 = pneg %p362
      %p369 = scmp.eq.s32.totalorder %s55, 1
      %p370 = por %p368, %p369
      %p371 = scmp.ne.s32.totalorder %s363, %s366
      %p372 = scmp.eq.s32.totalorder %s55, 0
      %p373 = por %p371, %p372
      %p374 = scmp.ne.s32.totalorder %s363, %s366
      %p375 = scmp.eq.s32.totalorder %s60, 1
      %p376 = por %p374, %p375
      %p377 = scmp.ne.s32.totalorder %s366, %s367
      %p378 = scmp.eq.s32.totalorder %s60, 0
      %p379 = por %p377, %p378
      %p380 = scmp.ne.s32.totalorder %s366, %s367
      %p381 = scmp.eq.s32.totalorder %s61, 1
      %p382 = por %p380, %p381
      %p384 = scmp.ne.s32.totalorder %s367, %s383
      %p385 = scmp.eq.s32.totalorder %s61, 0
      %p386 = por %p384, %p385
      %s387 = ssub.s32 %s63, %s70
      %p388 = scmp.eq.s32.totalorder %s387, 0
      %s390 = sadd.s32 %s389, 1
      %s391 = scalar_select %p388, %s389, %s390
      %p394 = pneg %p388
      %p395 = scmp.eq.s32.totalorder %s55, 1
      %p396 = por %p394, %p395
      %p397 = scmp.ne.s32.totalorder %s389, %s392
      %p398 = scmp.eq.s32.totalorder %s55, 0
      %p399 = por %p397, %p398
      %p400 = scmp.ne.s32.totalorder %s389, %s392
      %p401 = scmp.eq.s32.totalorder %s60, 1
      %p402 = por %p400, %p401
      %p403 = scmp.ne.s32.totalorder %s392, %s393
      %p404 = scmp.eq.s32.totalorder %s60, 0
      %p405 = por %p403, %p404
      %p406 = scmp.ne.s32.totalorder %s392, %s393
      %p407 = scmp.eq.s32.totalorder %s61, 1
      %p408 = por %p406, %p407
      %p410 = scmp.ne.s32.totalorder %s393, %s409
      %p411 = scmp.eq.s32.totalorder %s61, 0
      %p412 = por %p410, %p411
      %s413 = ssub.s32 %s63, %s70
      %p414 = scmp.eq.s32.totalorder %s413, 0
      %s416 = sadd.s32 %s415, 1
      %s417 = scalar_select %p414, %s415, %s416
      %p420 = pneg %p414
      %p421 = scmp.eq.s32.totalorder %s55, 1
      %p422 = por %p420, %p421
      %p423 = scmp.ne.s32.totalorder %s415, %s418
      %p424 = scmp.eq.s32.totalorder %s55, 0
      %p425 = por %p423, %p424
      %p426 = scmp.ne.s32.totalorder %s415, %s418
      %p427 = scmp.eq.s32.totalorder %s60, 1
      %p428 = por %p426, %p427
      %p429 = scmp.ne.s32.totalorder %s418, %s419
      %p430 = scmp.eq.s32.totalorder %s60, 0
      %p431 = por %p429, %p430
      %p432 = scmp.ne.s32.totalorder %s418, %s419
      %p433 = scmp.eq.s32.totalorder %s61, 1
      %p434 = por %p432, %p433
      %p436 = scmp.ne.s32.totalorder %s419, %s435
      %p437 = scmp.eq.s32.totalorder %s61, 0
      %p438 = por %p436, %p437
      %s439 = ssub.s32 %s63, %s70
      %p440 = scmp.eq.s32.totalorder %s439, 0
      %s442 = sadd.s32 %s441, 1
      %s443 = scalar_select %p440, %s441, %s442
      %p446 = pneg %p440
      %p447 = scmp.eq.s32.totalorder %s55, 1
      %p448 = por %p446, %p447
      %p449 = scmp.ne.s32.totalorder %s441, %s444
      %p450 = scmp.eq.s32.totalorder %s55, 0
      %p451 = por %p449, %p450
      %p452 = scmp.ne.s32.totalorder %s441, %s444
      %p453 = scmp.eq.s32.totalorder %s60, 1
      %p454 = por %p452, %p453
      %p455 = scmp.ne.s32.totalorder %s444, %s445
      %p456 = scmp.eq.s32.totalorder %s60, 0
      %p457 = por %p455, %p456
      %p458 = scmp.ne.s32.totalorder %s444, %s445
      %p459 = scmp.eq.s32.totalorder %s61, 1
      %p460 = por %p458, %p459
      %p462 = scmp.ne.s32.totalorder %s445, %s461
      %p463 = scmp.eq.s32.totalorder %s61, 0
      %p464 = por %p462, %p463
      %s465 = ssub.s32 %s63, %s70
      %p466 = scmp.eq.s32.totalorder %s465, 0
      %s468 = sadd.s32 %s467, 1
      %s469 = scalar_select %p466, %s467, %s468
      %p472 = pneg %p466
      %p473 = scmp.eq.s32.totalorder %s55, 1
      %p474 = por %p472, %p473
      %p475 = scmp.ne.s32.totalorder %s467, %s470
      %p476 = scmp.eq.s32.totalorder %s55, 0
      %p477 = por %p475, %p476
      %p478 = scmp.ne.s32.totalorder %s467, %s470
      %p479 = scmp.eq.s32.totalorder %s60, 1
      %p480 = por %p478, %p479
      %p481 = scmp.ne.s32.totalorder %s470, %s471
      %p482 = scmp.eq.s32.totalorder %s60, 0
      %p483 = por %p481, %p482
      %p484 = scmp.ne.s32.totalorder %s470, %s471
      %p485 = scmp.eq.s32.totalorder %s61, 1
      %p486 = por %p484, %p485
      %p488 = scmp.ne.s32.totalorder %s471, %s487
      %p489 = scmp.eq.s32.totalorder %s61, 0
      %p490 = por %p488, %p489
      %s491 = ssub.s32 %s63, %s70
      %p492 = scmp.eq.s32.totalorder %s491, 0
      %s494 = sadd.s32 %s493, 1
      %s495 = scalar_select %p492, %s493, %s494
      %p498 = pneg %p492
      %p499 = scmp.eq.s32.totalorder %s55, 1
      %p500 = por %p498, %p499
      %p501 = scmp.ne.s32.totalorder %s493, %s496
      %p502 = scmp.eq.s32.totalorder %s55, 0
      %p503 = por %p501, %p502
      %p504 = scmp.ne.s32.totalorder %s493, %s496
      %p505 = scmp.eq.s32.totalorder %s60, 1
      %p506 = por %p504, %p505
      %p507 = scmp.ne.s32.totalorder %s496, %s497
      %p508 = scmp.eq.s32.totalorder %s60, 0
      %p509 = por %p507, %p508
      %p510 = scmp.ne.s32.totalorder %s496, %s497
      %p511 = scmp.eq.s32.totalorder %s61, 1
      %p512 = por %p510, %p511
      %p514 = scmp.ne.s32.totalorder %s497, %s513
      %p515 = scmp.eq.s32.totalorder %s61, 0
      %p516 = por %p514, %p515
      %s517 = ssub.s32 %s63, %s70
      %p518 = scmp.eq.s32.totalorder %s517, 0
      %s520 = sadd.s32 %s519, 1
      %s521 = scalar_select %p518, %s519, %s520
      %p524 = pneg %p518
      %p525 = scmp.eq.s32.totalorder %s55, 1
      %p526 = por %p524, %p525
      %p527 = scmp.ne.s32.totalorder %s519, %s522
      %p528 = scmp.eq.s32.totalorder %s55, 0
      %p529 = por %p527, %p528
      %p530 = scmp.ne.s32.totalorder %s519, %s522
      %p531 = scmp.eq.s32.totalorder %s60, 1
      %p532 = por %p530, %p531
      %p533 = scmp.ne.s32.totalorder %s522, %s523
      %p534 = scmp.eq.s32.totalorder %s60, 0
      %p535 = por %p533, %p534
      %p536 = scmp.ne.s32.totalorder %s522, %s523
      %p537 = scmp.eq.s32.totalorder %s61, 1
      %p538 = por %p536, %p537
      %p540 = scmp.ne.s32.totalorder %s523, %s539
      %p541 = scmp.eq.s32.totalorder %s61, 0
      %p542 = por %p540, %p541
      %s543 = ssub.s32 %s63, %s70
      %p544 = scmp.eq.s32.totalorder %s543, 0
      %s546 = sadd.s32 %s545, 1
      %s547 = scalar_select %p544, %s545, %s546
      %p550 = pneg %p544
      %p551 = scmp.eq.s32.totalorder %s55, 1
      %p552 = por %p550, %p551
      %p553 = scmp.ne.s32.totalorder %s545, %s548
      %p554 = scmp.eq.s32.totalorder %s55, 0
      %p555 = por %p553, %p554
      %p556 = scmp.ne.s32.totalorder %s545, %s548
      %p557 = scmp.eq.s32.totalorder %s60, 1
      %p558 = por %p556, %p557
      %p559 = scmp.ne.s32.totalorder %s548, %s549
      %p560 = scmp.eq.s32.totalorder %s60, 0
      %p561 = por %p559, %p560
      %p562 = scmp.ne.s32.totalorder %s548, %s549
      %p563 = scmp.eq.s32.totalorder %s61, 1
      %p564 = por %p562, %p563
      %p566 = scmp.ne.s32.totalorder %s549, %s565
      %p567 = scmp.eq.s32.totalorder %s61, 0
      %p568 = por %p566, %p567
      %s569 = ssub.s32 %s63, %s70
      %p570 = scmp.eq.s32.totalorder %s569, 0
      %s572 = sadd.s32 %s571, 1
      %s573 = scalar_select %p570, %s571, %s572
      %p576 = pneg %p570
      %p577 = scmp.eq.s32.totalorder %s55, 1
      %p578 = por %p576, %p577
      %p579 = scmp.ne.s32.totalorder %s571, %s574
      %p580 = scmp.eq.s32.totalorder %s55, 0
      %p581 = por %p579, %p580
      %p582 = scmp.ne.s32.totalorder %s571, %s574
      %p583 = scmp.eq.s32.totalorder %s60, 1
      %p584 = por %p582, %p583
      %p585 = scmp.ne.s32.totalorder %s574, %s575
      %p586 = scmp.eq.s32.totalorder %s60, 0
      %p587 = por %p585, %p586
      %p588 = scmp.ne.s32.totalorder %s574, %s575
      %p589 = scmp.eq.s32.totalorder %s61, 1
      %p590 = por %p588, %p589
      %p592 = scmp.ne.s32.totalorder %s575, %s591
      %p593 = scmp.eq.s32.totalorder %s61, 0
      %p594 = por %p592, %p593
      %s595 = ssub.s32 %s63, %s70
      %p596 = scmp.eq.s32.totalorder %s595, 0
      %s598 = sadd.s32 %s597, 1
      %s599 = scalar_select %p596, %s597, %s598
      %p602 = pneg %p596
      %p603 = scmp.eq.s32.totalorder %s55, 1
      %p604 = por %p602, %p603
      %p605 = scmp.ne.s32.totalorder %s597, %s600
      %p606 = scmp.eq.s32.totalorder %s55, 0
      %p607 = por %p605, %p606
      %p608 = scmp.ne.s32.totalorder %s597, %s600
      %p609 = scmp.eq.s32.totalorder %s60, 1
      %p610 = por %p608, %p609
      %p611 = scmp.ne.s32.totalorder %s600, %s601
      %p612 = scmp.eq.s32.totalorder %s60, 0
      %p613 = por %p611, %p612
      %p614 = scmp.ne.s32.totalorder %s600, %s601
      %p615 = scmp.eq.s32.totalorder %s61, 1
      %p616 = por %p614, %p615
      %p618 = scmp.ne.s32.totalorder %s601, %s617
      %p619 = scmp.eq.s32.totalorder %s61, 0
      %p620 = por %p618, %p619
      %s621 = ssub.s32 %s63, %s70
      %p622 = scmp.eq.s32.totalorder %s621, 0
      %s624 = sadd.s32 %s623, 1
      %s625 = scalar_select %p622, %s623, %s624
      %p628 = pneg %p622
      %p629 = scmp.eq.s32.totalorder %s55, 1
      %p630 = por %p628, %p629
      %p631 = scmp.ne.s32.totalorder %s623, %s626
      %p632 = scmp.eq.s32.totalorder %s55, 0
      %p633 = por %p631, %p632
      %p634 = scmp.ne.s32.totalorder %s623, %s626
      %p635 = scmp.eq.s32.totalorder %s60, 1
      %p636 = por %p634, %p635
      %p637 = scmp.ne.s32.totalorder %s626, %s627
      %p638 = scmp.eq.s32.totalorder %s60, 0
      %p639 = por %p637, %p638
      %p640 = scmp.ne.s32.totalorder %s626, %s627
      %p641 = scmp.eq.s32.totalorder %s61, 1
      %p642 = por %p640, %p641
      %p644 = scmp.ne.s32.totalorder %s627, %s643
      %p645 = scmp.eq.s32.totalorder %s61, 0
      %p646 = por %p644, %p645
      %s648 = sadd.s32 %s647, 1
      %p651 = scmp.eq.s32.totalorder %s55, 1
      %p652 = scmp.ne.s32.totalorder %s647, %s649
      %p653 = scmp.eq.s32.totalorder %s55, 0
      %p654 = por %p652, %p653
      %p655 = scmp.ne.s32.totalorder %s647, %s649
      %p656 = scmp.eq.s32.totalorder %s60, 1
      %p657 = por %p655, %p656
      %p658 = scmp.ne.s32.totalorder %s649, %s650
      %p659 = scmp.eq.s32.totalorder %s60, 0
      %p660 = por %p658, %p659
      %p661 = scmp.ne.s32.totalorder %s649, %s650
      %p662 = scmp.eq.s32.totalorder %s61, 1
      %p663 = por %p661, %p662
      %p665 = scmp.ne.s32.totalorder %s650, %s664
      %p666 = scmp.eq.s32.totalorder %s61, 0
      %p667 = por %p665, %p666
      %s669 = sadd.s32 %s668, 1
      %p672 = scmp.eq.s32.totalorder %s55, 1
      %p673 = scmp.ne.s32.totalorder %s668, %s670
      %p674 = scmp.eq.s32.totalorder %s55, 0
      %p675 = por %p673, %p674
      %p676 = scmp.ne.s32.totalorder %s668, %s670
      %p677 = scmp.eq.s32.totalorder %s60, 1
      %p678 = por %p676, %p677
      %p679 = scmp.ne.s32.totalorder %s670, %s671
      %p680 = scmp.eq.s32.totalorder %s60, 0
      %p681 = por %p679, %p680
      %p682 = scmp.ne.s32.totalorder %s670, %s671
      %p683 = scmp.eq.s32.totalorder %s61, 1
      %p684 = por %p682, %p683
      %p686 = scmp.ne.s32.totalorder %s671, %s685
      %p687 = scmp.eq.s32.totalorder %s61, 0
      %p688 = por %p686, %p687
      %s690 = sadd.s32 %s689, 1
      %p693 = scmp.eq.s32.totalorder %s55, 1
      %p694 = scmp.ne.s32.totalorder %s689, %s691
      %p695 = scmp.eq.s32.totalorder %s55, 0
      %p696 = por %p694, %p695
      %p697 = scmp.ne.s32.totalorder %s689, %s691
      %p698 = scmp.eq.s32.totalorder %s60, 1
      %p699 = por %p697, %p698
      %p700 = scmp.ne.s32.totalorder %s691, %s692
      %p701 = scmp.eq.s32.totalorder %s60, 0
      %p702 = por %p700, %p701
      %p703 = scmp.ne.s32.totalorder %s691, %s692
      %p704 = scmp.eq.s32.totalorder %s61, 1
      %p705 = por %p703, %p704
      %p707 = scmp.ne.s32.totalorder %s692, %s706
      %p708 = scmp.eq.s32.totalorder %s61, 0
      %p709 = por %p707, %p708
      %s711 = sadd.s32 %s710, 1
      %p714 = scmp.eq.s32.totalorder %s55, 1
      %p715 = scmp.ne.s32.totalorder %s710, %s712
      %p716 = scmp.eq.s32.totalorder %s55, 0
      %p717 = por %p715, %p716
      %p718 = scmp.ne.s32.totalorder %s710, %s712
      %p719 = scmp.eq.s32.totalorder %s60, 1
      %p720 = por %p718, %p719
      %p721 = scmp.ne.s32.totalorder %s712, %s713
      %p722 = scmp.eq.s32.totalorder %s60, 0
      %p723 = por %p721, %p722
      %p724 = scmp.ne.s32.totalorder %s712, %s713
      %p725 = scmp.eq.s32.totalorder %s61, 1
      %p726 = por %p724, %p725
      %p728 = scmp.ne.s32.totalorder %s713, %s727
      %p729 = scmp.eq.s32.totalorder %s61, 0
      %p730 = por %p728, %p729
      %s731 = ssub.s32 %s62, %s74
      %p732 = scmp.eq.s32.totalorder %s731, 0
      %s734 = sadd.s32 %s733, 1
      %s735 = scalar_select %p732, %s733, %s734
      %p738 = pneg %p732
      %p739 = scmp.eq.s32.totalorder %s55, 1
      %p740 = por %p738, %p739
      %p741 = scmp.ne.s32.totalorder %s733, %s736
      %p742 = scmp.eq.s32.totalorder %s55, 0
      %p743 = por %p741, %p742
      %p744 = scmp.ne.s32.totalorder %s733, %s736
      %p745 = scmp.eq.s32.totalorder %s60, 1
      %p746 = por %p744, %p745
      %p747 = scmp.ne.s32.totalorder %s736, %s737
      %p748 = scmp.eq.s32.totalorder %s60, 0
      %p749 = por %p747, %p748
      %p750 = scmp.ne.s32.totalorder %s736, %s737
      %p751 = scmp.eq.s32.totalorder %s61, 1
      %p752 = por %p750, %p751
      %p754 = scmp.ne.s32.totalorder %s737, %s753
      %p755 = scmp.eq.s32.totalorder %s61, 0
      %p756 = por %p754, %p755
      %p757 = scmp.le.s32.totalorder 1, %s55
      %p758 = scmp.lt.s32.totalorder %s55, 3
      %p759 = pnand %p757, %p758
      %p760 = pneg %p759
      // Predicated region
      $region9: #{tpu_custom_call.1} parent=5 // pred_check
        _
      $region10: #{tpu_custom_call.1} parent=5 // pred_check_branch
        %762 = sbr.rel (%p759) target = $region12
      $region11: #{tpu_custom_call.1} parent=5 // pred_region
        %s763 = ssub.s32 %s55, 1
        // Predicated region
        $region13: #{tpu_custom_call.1} parent=11 // pred_check
          %p764 = pneg %p93
        $region14: #{tpu_custom_call.1} parent=11 // pred_check_branch
          %766 = sbr.rel (%p764) target = $region16
        $region15: #{tpu_custom_call.1} parent=11 // pred_region
          %s767 = smul.u32 2, %s64
          %769 = vsyncadd [#allocation4], 0
          %s770 = smul.addr %s767, 4
          %s771 = scalar_lea.hbm %s0, %s770
          %s772 = sshll.u32 %s771, 4
          %s773 = int_to_ptr.hbm [resolvable:$true] %s772
          %s774 = sshll.u32 [#allocation3], 4
          %s775 = int_to_ptr.vmem [resolvable:$true] %s774
          %780 = dma.hbm_to_vmem [thread:$0]  %s773, 128, %s775, [#allocation4], 64, 64, 4
        $region16: #{tpu_custom_call.1} parent=11 // pred_fallthru
          _
        // Predicated region
        $region17: #{tpu_custom_call.1} parent=11 // pred_check
          %p781 = pneg %p119
        $region18: #{tpu_custom_call.1} parent=11 // pred_check_branch
          %783 = sbr.rel (%p781) target = $region20
        $region19: #{tpu_custom_call.1} parent=11 // pred_region
          %s784 = smul.u32 2, %s64
          %p785 = scmp.lt.s32.totalorder %s784, 1
          %s786 = scalar_select %p785, %s784, 1
          %s787 = smul.addr %s786, 2
          %s788 = smul.addr %s787, 4
          %s789 = scalar_lea.vmem %s1, %s788
          %s790 = smul.u32 2, %s64
        $region20: #{tpu_custom_call.1} parent=11 // pred_fallthru
          _
        // Predicated region
        $region21: #{tpu_custom_call.1} parent=11 // pred_check
          %p791 = pneg %p660
        $region22: #{tpu_custom_call.1} parent=11 // pred_check_branch
          %793 = sbr.rel (%p791) target = $region24
        $region23: #{tpu_custom_call.1} parent=11 // pred_region
          _
        $region24: #{tpu_custom_call.1} parent=11 // pred_fallthru
          _
        // Predicated region
        $region25: #{tpu_custom_call.1} parent=11 // pred_check
          %p794 = pneg %p681
        $region26: #{tpu_custom_call.1} parent=11 // pred_check_branch
          %796 = sbr.rel (%p794) target = $region28
        $region27: #{tpu_custom_call.1} parent=11 // pred_region
          _
        $region28: #{tpu_custom_call.1} parent=11 // pred_fallthru
          _
        // Predicated region
        $region29: #{tpu_custom_call.1} parent=11 // pred_check
          %p797 = pneg %p702
        $region30: #{tpu_custom_call.1} parent=11 // pred_check_branch
          %799 = sbr.rel (%p797) target = $region32
        $region31: #{tpu_custom_call.1} parent=11 // pred_region
          _
        $region32: #{tpu_custom_call.1} parent=11 // pred_fallthru
          _
        // Predicated region
        $region33: #{tpu_custom_call.1} parent=11 // pred_check
          %p800 = pneg %p723
        $region34: #{tpu_custom_call.1} parent=11 // pred_check_branch
          %802 = sbr.rel (%p800) target = $region36
        $region35: #{tpu_custom_call.1} parent=11 // pred_region
          _
        $region36: #{tpu_custom_call.1} parent=11 // pred_fallthru
          _
      $region12: #{tpu_custom_call.1} parent=5 // pred_fallthru
        _
      %p803 = scmp.lt.s32.totalorder %s55, 2
      // Predicated region
      $region37: #{tpu_custom_call.1} parent=5 // pred_check
        %p804 = pneg %p803
      $region38: #{tpu_custom_call.1} parent=5 // pred_check_branch
        %806 = sbr.rel (%p804) target = $region40
      $region39: #{tpu_custom_call.1} parent=5 // pred_region
        // Predicated region
        $region41: #{tpu_custom_call.1} parent=39 // pred_check
          %p807 = pneg %p139
        $region42: #{tpu_custom_call.1} parent=39 // pred_check_branch
          %809 = sbr.rel (%p807) target = $region44
        $region43: #{tpu_custom_call.1} parent=39 // pred_region
          %p810 = scmp.lt.s32.totalorder %s63, 1
          %s811 = scalar_select %p810, %s63, 1
          %s812 = smul.addr %s811, 4
          %s813 = smul.addr %s812, 4
          %s814 = scalar_lea.vmem %s2, %s813
        $region44: #{tpu_custom_call.1} parent=39 // pred_fallthru
          _
        // Predicated region
        $region45: #{tpu_custom_call.1} parent=39 // pred_check
          %p815 = pneg %p165
        $region46: #{tpu_custom_call.1} parent=39 // pred_check_branch
          %817 = sbr.rel (%p815) target = $region48
        $region47: #{tpu_custom_call.1} parent=39 // pred_region
          %s818 = sand.u32 %s55, 1
          %s819 = scalar_lea.sflag [#allocation7], %s818
          %s820 = sand.u32 %s155, 1
          %s821 = scalar_lea.vmem [#allocation6], %s820
          %823 = vsyncadd %s819, 0
          %s824 = scalar_lea.hbm %s3, %s63
          %s826 = sshll.u32 %s824, 4
          %s827 = int_to_ptr.hbm [resolvable:$true] %s826
          %s828 = sshll.u32 %s821, 4
          %s829 = int_to_ptr.vmem [resolvable:$true] %s828
          %831 = dma.hbm_to_vmem [thread:$0]  %s827, 16, %s829, %s819
        $region48: #{tpu_custom_call.1} parent=39 // pred_fallthru
          _
        // Predicated region
        $region49: #{tpu_custom_call.1} parent=39 // pred_check
          %p832 = pneg %p191
        $region50: #{tpu_custom_call.1} parent=39 // pred_check_branch
          %834 = sbr.rel (%p832) target = $region52
        $region51: #{tpu_custom_call.1} parent=39 // pred_region
          %p835 = scmp.lt.s32.totalorder %s63, 1
          %s836 = scalar_select %p835, %s63, 1
          %s837 = smul.addr %s836, 4
          %s838 = smul.addr %s837, 4
          %s839 = scalar_lea.vmem %s4, %s838
        $region52: #{tpu_custom_call.1} parent=39 // pred_fallthru
          _
        // Predicated region
        $region53: #{tpu_custom_call.1} parent=39 // pred_check
          %p840 = pneg %p217
        $region54: #{tpu_custom_call.1} parent=39 // pred_check_branch
          %842 = sbr.rel (%p840) target = $region56
        $region55: #{tpu_custom_call.1} parent=39 // pred_region
          %s843 = sand.u32 %s55, 1
          %s844 = scalar_lea.sflag [#allocation7], %s843
          %s845 = sand.u32 %s207, 1
          %s846 = scalar_lea.vmem [#allocation8], %s845
          %848 = vsyncadd %s844, 0
          %s849 = scalar_lea.hbm %s5, %s63
          %s851 = sshll.u32 %s849, 4
          %s852 = int_to_ptr.hbm [resolvable:$true] %s851
          %s853 = sshll.u32 %s846, 4
          %s854 = int_to_ptr.vmem [resolvable:$true] %s853
          %856 = dma.hbm_to_vmem [thread:$0]  %s852, 16, %s854, %s844
        $region56: #{tpu_custom_call.1} parent=39 // pred_fallthru
          _
        // Predicated region
        $region57: #{tpu_custom_call.1} parent=39 // pred_check
          %p857 = pneg %p243
        $region58: #{tpu_custom_call.1} parent=39 // pred_check_branch
          %859 = sbr.rel (%p857) target = $region60
        $region59: #{tpu_custom_call.1} parent=39 // pred_region
          %p860 = scmp.lt.s32.totalorder %s63, 1
          %s861 = scalar_select %p860, %s63, 1
          %s862 = smul.addr %s861, 4
          %s863 = smul.addr %s862, 4
          %s864 = scalar_lea.vmem %s6, %s863
        $region60: #{tpu_custom_call.1} parent=39 // pred_fallthru
          _
        // Predicated region
        $region61: #{tpu_custom_call.1} parent=39 // pred_check
          %p865 = pneg %p269
        $region62: #{tpu_custom_call.1} parent=39 // pred_check_branch
          %867 = sbr.rel (%p865) target = $region64
        $region63: #{tpu_custom_call.1} parent=39 // pred_region
          %s868 = sand.u32 %s55, 1
          %s869 = scalar_lea.sflag [#allocation10], %s868
          %s870 = sand.u32 %s259, 1
          %s871 = scalar_lea.vmem [#allocation9], %s870
          %873 = vsyncadd %s869, 0
          %s874 = scalar_lea.hbm %s7, %s63
          %s876 = sshll.u32 %s874, 4
          %s877 = int_to_ptr.hbm [resolvable:$true] %s876
          %s878 = sshll.u32 %s871, 4
          %s879 = int_to_ptr.vmem [resolvable:$true] %s878
          %881 = dma.hbm_to_vmem [thread:$0]  %s877, 16, %s879, %s869
        $region64: #{tpu_custom_call.1} parent=39 // pred_fallthru
          _
        // Predicated region
        $region65: #{tpu_custom_call.1} parent=39 // pred_check
          %p882 = pneg %p295
        $region66: #{tpu_custom_call.1} parent=39 // pred_check_branch
          %884 = sbr.rel (%p882) target = $region68
        $region67: #{tpu_custom_call.1} parent=39 // pred_region
          %p885 = scmp.lt.s32.totalorder %s63, 1
          %s886 = scalar_select %p885, %s63, 1
          %s887 = smul.addr %s886, 4
          %s888 = smul.addr %s887, 4
          %s889 = scalar_lea.vmem %s8, %s888
        $region68: #{tpu_custom_call.1} parent=39 // pred_fallthru
          _
        // Predicated region
        $region69: #{tpu_custom_call.1} parent=39 // pred_check
          %p890 = pneg %p321
        $region70: #{tpu_custom_call.1} parent=39 // pred_check_branch
          %892 = sbr.rel (%p890) target = $region72
        $region71: #{tpu_custom_call.1} parent=39 // pred_region
          %s893 = sand.u32 %s55, 1
          %s894 = scalar_lea.sflag [#allocation10], %s893
          %s895 = sand.u32 %s311, 1
          %s896 = scalar_lea.vmem [#allocation11], %s895
          %898 = vsyncadd %s894, 0
          %s899 = scalar_lea.hbm %s9, %s63
          %s901 = sshll.u32 %s899, 4
          %s902 = int_to_ptr.hbm [resolvable:$true] %s901
          %s903 = sshll.u32 %s896, 4
          %s904 = int_to_ptr.vmem [resolvable:$true] %s903
          %906 = dma.hbm_to_vmem [thread:$0]  %s902, 16, %s904, %s894
        $region72: #{tpu_custom_call.1} parent=39 // pred_fallthru
          _
        // Predicated region
        $region73: #{tpu_custom_call.1} parent=39 // pred_check
          %p907 = pneg %p347
        $region74: #{tpu_custom_call.1} parent=39 // pred_check_branch
          %909 = sbr.rel (%p907) target = $region76
        $region75: #{tpu_custom_call.1} parent=39 // pred_region
          %p910 = scmp.lt.s32.totalorder %s63, 1
          %s911 = scalar_select %p910, %s63, 1
          %s912 = smul.addr %s911, 4
          %s913 = smul.addr %s912, 4
          %s914 = scalar_lea.vmem %s10, %s913
        $region76: #{tpu_custom_call.1} parent=39 // pred_fallthru
          _
        // Predicated region
        $region77: #{tpu_custom_call.1} parent=39 // pred_check
          %p915 = pneg %p373
        $region78: #{tpu_custom_call.1} parent=39 // pred_check_branch
          %917 = sbr.rel (%p915) target = $region80
        $region79: #{tpu_custom_call.1} parent=39 // pred_region
          %s918 = sand.u32 %s55, 1
          %s919 = scalar_lea.sflag [#allocation13], %s918
          %s920 = sand.u32 %s363, 1
          %s921 = scalar_lea.vmem [#allocation12], %s920
          %923 = vsyncadd %s919, 0
          %s924 = scalar_lea.hbm %s11, %s63
          %s926 = sshll.u32 %s924, 4
          %s927 = int_to_ptr.hbm [resolvable:$true] %s926
          %s928 = sshll.u32 %s921, 4
          %s929 = int_to_ptr.vmem [resolvable:$true] %s928
          %931 = dma.hbm_to_vmem [thread:$0]  %s927, 16, %s929, %s919
        $region80: #{tpu_custom_call.1} parent=39 // pred_fallthru
          _
        // Predicated region
        $region81: #{tpu_custom_call.1} parent=39 // pred_check
          %p932 = pneg %p399
        $region82: #{tpu_custom_call.1} parent=39 // pred_check_branch
          %934 = sbr.rel (%p932) target = $region84
        $region83: #{tpu_custom_call.1} parent=39 // pred_region
          %s935 = sand.u32 %s55, 1
          %s936 = scalar_lea.sflag [#allocation13], %s935
          %s937 = sand.u32 %s389, 1
          %s938 = smul.addr %s937, 16
          %s939 = scalar_lea.vmem [#allocation14], %s938
          %941 = vsyncadd %s936, 0
          %s942 = smul.addr %s63, 4
          %s943 = smul.addr %s942, 4
          %s944 = scalar_lea.hbm %s12, %s943
          %s945 = sshll.u32 %s944, 4
          %s946 = int_to_ptr.hbm [resolvable:$true] %s945
          %s947 = sshll.u32 %s939, 4
          %s948 = int_to_ptr.vmem [resolvable:$true] %s947
          %953 = dma.hbm_to_vmem [thread:$0]  %s946, 256, %s948, %s936, 64, 64, 4
        $region84: #{tpu_custom_call.1} parent=39 // pred_fallthru
          _
        // Predicated region
        $region85: #{tpu_custom_call.1} parent=39 // pred_check
          %p954 = pneg %p425
        $region86: #{tpu_custom_call.1} parent=39 // pred_check_branch
          %956 = sbr.rel (%p954) target = $region88
        $region87: #{tpu_custom_call.1} parent=39 // pred_region
          %s957 = sand.u32 %s55, 1
          %s958 = scalar_lea.sflag [#allocation16], %s957
          %s959 = sand.u32 %s415, 1
          %s960 = scalar_lea.vmem [#allocation15], %s959
          %962 = vsyncadd %s958, 0
          %s963 = scalar_lea.hbm %s13, %s63
          %s965 = sshll.u32 %s963, 4
          %s966 = int_to_ptr.hbm [resolvable:$true] %s965
          %s967 = sshll.u32 %s960, 4
          %s968 = int_to_ptr.vmem [resolvable:$true] %s967
          %970 = dma.hbm_to_vmem [thread:$0]  %s966, 16, %s968, %s958
        $region88: #{tpu_custom_call.1} parent=39 // pred_fallthru
          _
        // Predicated region
        $region89: #{tpu_custom_call.1} parent=39 // pred_check
          %p971 = pneg %p451
        $region90: #{tpu_custom_call.1} parent=39 // pred_check_branch
          %973 = sbr.rel (%p971) target = $region92
        $region91: #{tpu_custom_call.1} parent=39 // pred_region
          %p974 = scmp.lt.s32.totalorder %s63, 1
          %s975 = scalar_select %p974, %s63, 1
          %s976 = smul.addr %s975, 16
          %s977 = smul.addr %s976, 4
          %s978 = scalar_lea.vmem %s14, %s977
        $region92: #{tpu_custom_call.1} parent=39 // pred_fallthru
          _
        // Predicated region
        $region93: #{tpu_custom_call.1} parent=39 // pred_check
          %p979 = pneg %p477
        $region94: #{tpu_custom_call.1} parent=39 // pred_check_branch
          %981 = sbr.rel (%p979) target = $region96
        $region95: #{tpu_custom_call.1} parent=39 // pred_region
          %s982 = sand.u32 %s55, 1
          %s983 = scalar_lea.sflag [#allocation16], %s982
          %s984 = sand.u32 %s467, 1
          %s985 = scalar_lea.vmem [#allocation17], %s984
          %987 = vsyncadd %s983, 0
          %s988 = scalar_lea.hbm %s15, %s63
          %s990 = sshll.u32 %s988, 4
          %s991 = int_to_ptr.hbm [resolvable:$true] %s990
          %s992 = sshll.u32 %s985, 4
          %s993 = int_to_ptr.vmem [resolvable:$true] %s992
          %995 = dma.hbm_to_vmem [thread:$0]  %s991, 16, %s993, %s983
        $region96: #{tpu_custom_call.1} parent=39 // pred_fallthru
          _
        // Predicated region
        $region97: #{tpu_custom_call.1} parent=39 // pred_check
          %p996 = pneg %p503
        $region98: #{tpu_custom_call.1} parent=39 // pred_check_branch
          %998 = sbr.rel (%p996) target = $region100
        $region99: #{tpu_custom_call.1} parent=39 // pred_region
          %s999 = sand.u32 %s55, 1
          %s1000 = scalar_lea.sflag [#allocation19], %s999
          %s1001 = sand.u32 %s493, 1
          %s1002 = scalar_lea.vmem [#allocation18], %s1001
          %1004 = vsyncadd %s1000, 0
          %s1005 = scalar_lea.hbm %s16, %s63
          %s1007 = sshll.u32 %s1005, 4
          %s1008 = int_to_ptr.hbm [resolvable:$true] %s1007
          %s1009 = sshll.u32 %s1002, 4
          %s1010 = int_to_ptr.vmem [resolvable:$true] %s1009
          %1012 = dma.hbm_to_vmem [thread:$0]  %s1008, 16, %s1010, %s1000
        $region100: #{tpu_custom_call.1} parent=39 // pred_fallthru
          _
        // Predicated region
        $region101: #{tpu_custom_call.1} parent=39 // pred_check
          %p1013 = pneg %p529
        $region102: #{tpu_custom_call.1} parent=39 // pred_check_branch
          %1015 = sbr.rel (%p1013) target = $region104
        $region103: #{tpu_custom_call.1} parent=39 // pred_region
          %s1016 = sand.u32 %s55, 1
          %s1017 = scalar_lea.sflag [#allocation19], %s1016
          %s1018 = sand.u32 %s519, 1
          %s1019 = scalar_lea.vmem [#allocation20], %s1018
          %1021 = vsyncadd %s1017, 0
          %s1022 = scalar_lea.hbm %s17, %s63
          %s1024 = sshll.u32 %s1022, 4
          %s1025 = int_to_ptr.hbm [resolvable:$true] %s1024
          %s1026 = sshll.u32 %s1019, 4
          %s1027 = int_to_ptr.vmem [resolvable:$true] %s1026
          %1029 = dma.hbm_to_vmem [thread:$0]  %s1025, 16, %s1027, %s1017
        $region104: #{tpu_custom_call.1} parent=39 // pred_fallthru
          _
        // Predicated region
        $region105: #{tpu_custom_call.1} parent=39 // pred_check
          %p1030 = pneg %p555
        $region106: #{tpu_custom_call.1} parent=39 // pred_check_branch
          %1032 = sbr.rel (%p1030) target = $region108
        $region107: #{tpu_custom_call.1} parent=39 // pred_region
          %s1033 = sand.u32 %s55, 1
          %s1034 = scalar_lea.sflag [#allocation22], %s1033
          %s1035 = sand.u32 %s545, 1
          %s1036 = scalar_lea.vmem [#allocation21], %s1035
          %1038 = vsyncadd %s1034, 0
          %s1039 = scalar_lea.hbm %s18, %s63
          %s1041 = sshll.u32 %s1039, 4
          %s1042 = int_to_ptr.hbm [resolvable:$true] %s1041
          %s1043 = sshll.u32 %s1036, 4
          %s1044 = int_to_ptr.vmem [resolvable:$true] %s1043
          %1046 = dma.hbm_to_vmem [thread:$0]  %s1042, 16, %s1044, %s1034
        $region108: #{tpu_custom_call.1} parent=39 // pred_fallthru
          _
        // Predicated region
        $region109: #{tpu_custom_call.1} parent=39 // pred_check
          %p1047 = pneg %p581
        $region110: #{tpu_custom_call.1} parent=39 // pred_check_branch
          %1049 = sbr.rel (%p1047) target = $region112
        $region111: #{tpu_custom_call.1} parent=39 // pred_region
          %s1050 = sand.u32 %s55, 1
          %s1051 = scalar_lea.sflag [#allocation22], %s1050
          %s1052 = sand.u32 %s571, 1
          %s1053 = scalar_lea.vmem [#allocation23], %s1052
          %1055 = vsyncadd %s1051, 0
          %s1056 = scalar_lea.hbm %s19, %s63
          %s1058 = sshll.u32 %s1056, 4
          %s1059 = int_to_ptr.hbm [resolvable:$true] %s1058
          %s1060 = sshll.u32 %s1053, 4
          %s1061 = int_to_ptr.vmem [resolvable:$true] %s1060
          %1063 = dma.hbm_to_vmem [thread:$0]  %s1059, 16, %s1061, %s1051
        $region112: #{tpu_custom_call.1} parent=39 // pred_fallthru
          _
        // Predicated region
        $region113: #{tpu_custom_call.1} parent=39 // pred_check
          %p1064 = pneg %p607
        $region114: #{tpu_custom_call.1} parent=39 // pred_check_branch
          %1066 = sbr.rel (%p1064) target = $region116
        $region115: #{tpu_custom_call.1} parent=39 // pred_region
          %s1067 = sand.u32 %s597, 1
          %s1068 = scalar_lea.sflag [#allocation25], %s1067
          %s1069 = sand.u32 %s597, 1
          %s1070 = scalar_lea.vmem [#allocation24], %s1069
          %1072 = vsyncadd %s1068, 0
          %s1073 = scalar_lea.hbm %s20, %s63
          %s1075 = sshll.u32 %s1073, 4
          %s1076 = int_to_ptr.hbm [resolvable:$true] %s1075
          %s1077 = sshll.u32 %s1070, 4
          %s1078 = int_to_ptr.vmem [resolvable:$true] %s1077
          %1080 = dma.hbm_to_vmem [thread:$0]  %s1076, 16, %s1078, %s1068
        $region116: #{tpu_custom_call.1} parent=39 // pred_fallthru
          _
        // Predicated region
        $region117: #{tpu_custom_call.1} parent=39 // pred_check
          %p1081 = pneg %p633
        $region118: #{tpu_custom_call.1} parent=39 // pred_check_branch
          %1083 = sbr.rel (%p1081) target = $region120
        $region119: #{tpu_custom_call.1} parent=39 // pred_region
          %p1084 = scmp.lt.s32.totalorder %s63, 1
          %s1085 = scalar_select %p1084, %s63, 1
          %s1086 = scalar_lea.vmem %s21, %s1085
        $region120: #{tpu_custom_call.1} parent=39 // pred_fallthru
          _
      $region40: #{tpu_custom_call.1} parent=5 // pred_fallthru
        _
      %p1087 = scmp.le.s32.totalorder 1, %s55
      %p1088 = scmp.lt.s32.totalorder %s55, 3
      %p1089 = pnand %p1087, %p1088
      %p1090 = pneg %p1089
      // Predicated region
      $region121: #{tpu_custom_call.1} parent=5 // pred_check
        _
      $region122: #{tpu_custom_call.1} parent=5 // pred_check_branch
        %1092 = sbr.rel (%p1089) target = $region124
      $region123: #{tpu_custom_call.1} parent=5 // pred_region
        %s1093 = ssub.s32 %s55, 1
        // Predicated region
        $region125: #{tpu_custom_call.1} parent=123 // pred_check
          %p1094 = pneg %p93
        $region126: #{tpu_custom_call.1} parent=123 // pred_check_branch
          %1096 = sbr.rel (%p1094) target = $region128
        $region127: #{tpu_custom_call.1} parent=123 // pred_region
          %1098 = dma.done [#allocation4], 128
        $region128: #{tpu_custom_call.1} parent=123 // pred_fallthru
          _
        %s1099 = sand.u32 %s60, 1
        %s1100 = scalar_lea.sflag [#allocation7], %s1099
        %s1101 = sand.u32 %s158, 1
        %s1102 = scalar_lea.vmem [#allocation6], %s1101
        // Predicated region
        $region129: #{tpu_custom_call.1} parent=123 // pred_check
          %p1103 = pneg %p171
        $region130: #{tpu_custom_call.1} parent=123 // pred_check_branch
          %1105 = sbr.rel (%p1103) target = $region132
        $region131: #{tpu_custom_call.1} parent=123 // pred_region
          %1107 = dma.done %s1100, 16
        $region132: #{tpu_custom_call.1} parent=123 // pred_fallthru
          _
        %s1108 = sand.u32 %s60, 1
        %s1109 = scalar_lea.sflag [#allocation7], %s1108
        %s1110 = sand.u32 %s210, 1
        %s1111 = scalar_lea.vmem [#allocation8], %s1110
        // Predicated region
        $region133: #{tpu_custom_call.1} parent=123 // pred_check
          %p1112 = pneg %p223
        $region134: #{tpu_custom_call.1} parent=123 // pred_check_branch
          %1114 = sbr.rel (%p1112) target = $region136
        $region135: #{tpu_custom_call.1} parent=123 // pred_region
          %1116 = dma.done %s1109, 16
        $region136: #{tpu_custom_call.1} parent=123 // pred_fallthru
          _
        %s1117 = sand.u32 %s60, 1
        %s1118 = scalar_lea.sflag [#allocation10], %s1117
        %s1119 = sand.u32 %s262, 1
        %s1120 = scalar_lea.vmem [#allocation9], %s1119
        // Predicated region
        $region137: #{tpu_custom_call.1} parent=123 // pred_check
          %p1121 = pneg %p275
        $region138: #{tpu_custom_call.1} parent=123 // pred_check_branch
          %1123 = sbr.rel (%p1121) target = $region140
        $region139: #{tpu_custom_call.1} parent=123 // pred_region
          %1125 = dma.done %s1118, 16
        $region140: #{tpu_custom_call.1} parent=123 // pred_fallthru
          _
        %s1126 = sand.u32 %s60, 1
        %s1127 = scalar_lea.sflag [#allocation10], %s1126
        %s1128 = sand.u32 %s314, 1
        %s1129 = scalar_lea.vmem [#allocation11], %s1128
        // Predicated region
        $region141: #{tpu_custom_call.1} parent=123 // pred_check
          %p1130 = pneg %p327
        $region142: #{tpu_custom_call.1} parent=123 // pred_check_branch
          %1132 = sbr.rel (%p1130) target = $region144
        $region143: #{tpu_custom_call.1} parent=123 // pred_region
          %1134 = dma.done %s1127, 16
        $region144: #{tpu_custom_call.1} parent=123 // pred_fallthru
          _
        %s1135 = sand.u32 %s60, 1
        %s1136 = scalar_lea.sflag [#allocation13], %s1135
        %s1137 = sand.u32 %s366, 1
        %s1138 = scalar_lea.vmem [#allocation12], %s1137
        // Predicated region
        $region145: #{tpu_custom_call.1} parent=123 // pred_check
          %p1139 = pneg %p379
        $region146: #{tpu_custom_call.1} parent=123 // pred_check_branch
          %1141 = sbr.rel (%p1139) target = $region148
        $region147: #{tpu_custom_call.1} parent=123 // pred_region
          %1143 = dma.done %s1136, 16
        $region148: #{tpu_custom_call.1} parent=123 // pred_fallthru
          _
        %s1144 = sand.u32 %s60, 1
        %s1145 = scalar_lea.sflag [#allocation13], %s1144
        %s1146 = sand.u32 %s392, 1
        %s1147 = smul.addr %s1146, 16
        %s1148 = scalar_lea.vmem [#allocation14], %s1147
        // Predicated region
        $region149: #{tpu_custom_call.1} parent=123 // pred_check
          %p1149 = pneg %p405
        $region150: #{tpu_custom_call.1} parent=123 // pred_check_branch
          %1151 = sbr.rel (%p1149) target = $region152
        $region151: #{tpu_custom_call.1} parent=123 // pred_region
          %1153 = dma.done %s1145, 256
        $region152: #{tpu_custom_call.1} parent=123 // pred_fallthru
          _
        %s1154 = sand.u32 %s60, 1
        %s1155 = scalar_lea.sflag [#allocation16], %s1154
        %s1156 = sand.u32 %s418, 1
        %s1157 = scalar_lea.vmem [#allocation15], %s1156
        // Predicated region
        $region153: #{tpu_custom_call.1} parent=123 // pred_check
          %p1158 = pneg %p431
        $region154: #{tpu_custom_call.1} parent=123 // pred_check_branch
          %1160 = sbr.rel (%p1158) target = $region156
        $region155: #{tpu_custom_call.1} parent=123 // pred_region
          %1162 = dma.done %s1155, 16
        $region156: #{tpu_custom_call.1} parent=123 // pred_fallthru
          _
        %s1163 = sand.u32 %s60, 1
        %s1164 = scalar_lea.sflag [#allocation16], %s1163
        %s1165 = sand.u32 %s470, 1
        %s1166 = scalar_lea.vmem [#allocation17], %s1165
        // Predicated region
        $region157: #{tpu_custom_call.1} parent=123 // pred_check
          %p1167 = pneg %p483
        $region158: #{tpu_custom_call.1} parent=123 // pred_check_branch
          %1169 = sbr.rel (%p1167) target = $region160
        $region159: #{tpu_custom_call.1} parent=123 // pred_region
          %1171 = dma.done %s1164, 16
        $region160: #{tpu_custom_call.1} parent=123 // pred_fallthru
          _
        %s1172 = sand.u32 %s60, 1
        %s1173 = scalar_lea.sflag [#allocation19], %s1172
        %s1174 = sand.u32 %s496, 1
        %s1175 = scalar_lea.vmem [#allocation18], %s1174
        // Predicated region
        $region161: #{tpu_custom_call.1} parent=123 // pred_check
          %p1176 = pneg %p509
        $region162: #{tpu_custom_call.1} parent=123 // pred_check_branch
          %1178 = sbr.rel (%p1176) target = $region164
        $region163: #{tpu_custom_call.1} parent=123 // pred_region
          %1180 = dma.done %s1173, 16
        $region164: #{tpu_custom_call.1} parent=123 // pred_fallthru
          _
        %s1181 = sand.u32 %s60, 1
        %s1182 = scalar_lea.sflag [#allocation19], %s1181
        %s1183 = sand.u32 %s522, 1
        %s1184 = scalar_lea.vmem [#allocation20], %s1183
        // Predicated region
        $region165: #{tpu_custom_call.1} parent=123 // pred_check
          %p1185 = pneg %p535
        $region166: #{tpu_custom_call.1} parent=123 // pred_check_branch
          %1187 = sbr.rel (%p1185) target = $region168
        $region167: #{tpu_custom_call.1} parent=123 // pred_region
          %1189 = dma.done %s1182, 16
        $region168: #{tpu_custom_call.1} parent=123 // pred_fallthru
          _
        %s1190 = sand.u32 %s60, 1
        %s1191 = scalar_lea.sflag [#allocation22], %s1190
        %s1192 = sand.u32 %s548, 1
        %s1193 = scalar_lea.vmem [#allocation21], %s1192
        // Predicated region
        $region169: #{tpu_custom_call.1} parent=123 // pred_check
          %p1194 = pneg %p561
        $region170: #{tpu_custom_call.1} parent=123 // pred_check_branch
          %1196 = sbr.rel (%p1194) target = $region172
        $region171: #{tpu_custom_call.1} parent=123 // pred_region
          %1198 = dma.done %s1191, 16
        $region172: #{tpu_custom_call.1} parent=123 // pred_fallthru
          _
        %s1199 = sand.u32 %s60, 1
        %s1200 = scalar_lea.sflag [#allocation22], %s1199
        %s1201 = sand.u32 %s574, 1
        %s1202 = scalar_lea.vmem [#allocation23], %s1201
        // Predicated region
        $region173: #{tpu_custom_call.1} parent=123 // pred_check
          %p1203 = pneg %p587
        $region174: #{tpu_custom_call.1} parent=123 // pred_check_branch
          %1205 = sbr.rel (%p1203) target = $region176
        $region175: #{tpu_custom_call.1} parent=123 // pred_region
          %1207 = dma.done %s1200, 16
        $region176: #{tpu_custom_call.1} parent=123 // pred_fallthru
          _
        %s1208 = sand.u32 %s600, 1
        %s1209 = scalar_lea.sflag [#allocation25], %s1208
        %s1210 = sand.u32 %s600, 1
        %s1211 = scalar_lea.vmem [#allocation24], %s1210
        // Predicated region
        $region177: #{tpu_custom_call.1} parent=123 // pred_check
          %p1212 = pneg %p613
        $region178: #{tpu_custom_call.1} parent=123 // pred_check_branch
          %1214 = sbr.rel (%p1212) target = $region180
        $region179: #{tpu_custom_call.1} parent=123 // pred_region
          %1216 = dma.done %s1209, 16
        $region180: #{tpu_custom_call.1} parent=123 // pred_fallthru
          _
        %p1217 = pneg %p93
        %p1218 = pneg %p90
        %s1219 = smul.u32 2, %s64
        %p1220 = scmp.lt.s32.totalorder %s1219, 1
        %s1221 = scalar_select %p1220, %s1219, 1
        %s1222 = smul.addr %s1221, 2
        %s1223 = smul.addr %s1222, 4
        %s1224 = scalar_lea.vmem %s1, %s1223
        %p1225 = pneg %p119
        %p1226 = pneg %p116
        %p1227 = scmp.lt.s32.totalorder %s65, 1
        %s1228 = scalar_select %p1227, %s65, 1
        %s1229 = smul.addr %s1228, 4
        %s1230 = smul.addr %s1229, 4
        %s1231 = scalar_lea.vmem %s2, %s1230
        %p1232 = pneg %p145
        %p1233 = pneg %p142
        %s1234 = sand.u32 %s60, 1
        %s1235 = scalar_lea.sflag [#allocation7], %s1234
        %s1236 = sand.u32 %s158, 1
        %s1237 = scalar_lea.vmem [#allocation6], %s1236
        %p1238 = pneg %p171
        %p1239 = pneg %p168
        %p1240 = scmp.lt.s32.totalorder %s65, 1
        %s1241 = scalar_select %p1240, %s65, 1
        %s1242 = smul.addr %s1241, 4
        %s1243 = smul.addr %s1242, 4
        %s1244 = scalar_lea.vmem %s4, %s1243
        %p1245 = pneg %p197
        %p1246 = pneg %p194
        %s1247 = sand.u32 %s60, 1
        %s1248 = scalar_lea.sflag [#allocation7], %s1247
        %s1249 = sand.u32 %s210, 1
        %s1250 = scalar_lea.vmem [#allocation8], %s1249
        %p1251 = pneg %p223
        %p1252 = pneg %p220
        %p1253 = scmp.lt.s32.totalorder %s65, 1
        %s1254 = scalar_select %p1253, %s65, 1
        %s1255 = smul.addr %s1254, 4
        %s1256 = smul.addr %s1255, 4
        %s1257 = scalar_lea.vmem %s6, %s1256
        %p1258 = pneg %p249
        %p1259 = pneg %p246
        %s1260 = sand.u32 %s60, 1
        %s1261 = scalar_lea.sflag [#allocation10], %s1260
        %s1262 = sand.u32 %s262, 1
        %s1263 = scalar_lea.vmem [#allocation9], %s1262
        %p1264 = pneg %p275
        %p1265 = pneg %p272
        %p1266 = scmp.lt.s32.totalorder %s65, 1
        %s1267 = scalar_select %p1266, %s65, 1
        %s1268 = smul.addr %s1267, 4
        %s1269 = smul.addr %s1268, 4
        %s1270 = scalar_lea.vmem %s8, %s1269
        %p1271 = pneg %p301
        %p1272 = pneg %p298
        %s1273 = sand.u32 %s60, 1
        %s1274 = scalar_lea.sflag [#allocation10], %s1273
        %s1275 = sand.u32 %s314, 1
        %s1276 = scalar_lea.vmem [#allocation11], %s1275
        %p1277 = pneg %p327
        %p1278 = pneg %p324
        %p1279 = scmp.lt.s32.totalorder %s65, 1
        %s1280 = scalar_select %p1279, %s65, 1
        %s1281 = smul.addr %s1280, 4
        %s1282 = smul.addr %s1281, 4
        %s1283 = scalar_lea.vmem %s10, %s1282
        %p1284 = pneg %p353
        %p1285 = pneg %p350
        %s1286 = sand.u32 %s60, 1
        %s1287 = scalar_lea.sflag [#allocation13], %s1286
        %s1288 = sand.u32 %s366, 1
        %s1289 = scalar_lea.vmem [#allocation12], %s1288
        %p1290 = pneg %p379
        %p1291 = pneg %p376
        %s1292 = sand.u32 %s60, 1
        %s1293 = scalar_lea.sflag [#allocation13], %s1292
        %s1294 = sand.u32 %s392, 1
        %s1295 = smul.addr %s1294, 16
        %s1296 = scalar_lea.vmem [#allocation14], %s1295
        %p1297 = pneg %p405
        %p1298 = pneg %p402
        %s1299 = sand.u32 %s60, 1
        %s1300 = scalar_lea.sflag [#allocation16], %s1299
        %s1301 = sand.u32 %s418, 1
        %s1302 = scalar_lea.vmem [#allocation15], %s1301
        %p1303 = pneg %p431
        %p1304 = pneg %p428
        %p1305 = scmp.lt.s32.totalorder %s65, 1
        %s1306 = scalar_select %p1305, %s65, 1
        %s1307 = smul.addr %s1306, 16
        %s1308 = smul.addr %s1307, 4
        %s1309 = scalar_lea.vmem %s14, %s1308
        %p1310 = pneg %p457
        %p1311 = pneg %p454
        %s1312 = sand.u32 %s60, 1
        %s1313 = scalar_lea.sflag [#allocation16], %s1312
        %s1314 = sand.u32 %s470, 1
        %s1315 = scalar_lea.vmem [#allocation17], %s1314
        %p1316 = pneg %p483
        %p1317 = pneg %p480
        %s1318 = sand.u32 %s60, 1
        %s1319 = scalar_lea.sflag [#allocation19], %s1318
        %s1320 = sand.u32 %s496, 1
        %s1321 = scalar_lea.vmem [#allocation18], %s1320
        %p1322 = pneg %p509
        %p1323 = pneg %p506
        %s1324 = sand.u32 %s60, 1
        %s1325 = scalar_lea.sflag [#allocation19], %s1324
        %s1326 = sand.u32 %s522, 1
        %s1327 = scalar_lea.vmem [#allocation20], %s1326
        %p1328 = pneg %p535
        %p1329 = pneg %p532
        %s1330 = sand.u32 %s60, 1
        %s1331 = scalar_lea.sflag [#allocation22], %s1330
        %s1332 = sand.u32 %s548, 1
        %s1333 = scalar_lea.vmem [#allocation21], %s1332
        %p1334 = pneg %p561
        %p1335 = pneg %p558
        %s1336 = sand.u32 %s60, 1
        %s1337 = scalar_lea.sflag [#allocation22], %s1336
        %s1338 = sand.u32 %s574, 1
        %s1339 = scalar_lea.vmem [#allocation23], %s1338
        %p1340 = pneg %p587
        %p1341 = pneg %p584
        %s1342 = sand.u32 %s600, 1
        %s1343 = scalar_lea.sflag [#allocation25], %s1342
        %s1344 = sand.u32 %s600, 1
        %s1345 = scalar_lea.vmem [#allocation24], %s1344
        %p1346 = pneg %p613
        %p1347 = pneg %p610
        %p1348 = scmp.lt.s32.totalorder %s65, 1
        %s1349 = scalar_select %p1348, %s65, 1
        %s1350 = scalar_lea.vmem %s21, %s1349
        %p1351 = pneg %p639
        %p1352 = pneg %p636
        %p1353 = pneg %p660
        %p1354 = pneg %p657
        %p1355 = pneg %p681
        %p1356 = pneg %p678
        %p1357 = pneg %p702
        %p1358 = pneg %p699
        %p1359 = pneg %p723
        %p1360 = pneg %p720
        %p1361 = pneg %p749
        %p1362 = pneg %p746
        %s1363 = smul.u32 2, %s64
        %s1364 = smul.u32 2, %s64
        %p1365 = scmp.lt.s32.totalorder %s1364, 1
        %s1366 = scalar_select %p1365, %s1364, 1
        %s1367 = smul.addr %s1366, 2
        %s1368 = smul.addr %s1367, 4
        %s1369 = scalar_lea.vmem %s1, %s1368
        %s1370 = smul.u32 2, %s64
        %p1371 = scmp.lt.s32.totalorder %s65, 1
        %s1372 = scalar_select %p1371, %s65, 1
        %s1373 = smul.addr %s1372, 4
        %s1374 = smul.addr %s1373, 4
        %s1375 = scalar_lea.vmem %s2, %s1374
        %p1376 = scmp.lt.s32.totalorder %s65, 1
        %s1377 = scalar_select %p1376, %s65, 1
        %s1378 = smul.addr %s1377, 4
        %s1379 = smul.addr %s1378, 4
        %s1380 = scalar_lea.vmem %s4, %s1379
        %p1381 = scmp.lt.s32.totalorder %s65, 1
        %s1382 = scalar_select %p1381, %s65, 1
        %s1383 = smul.addr %s1382, 4
        %s1384 = smul.addr %s1383, 4
        %s1385 = scalar_lea.vmem %s6, %s1384
        %p1386 = scmp.lt.s32.totalorder %s65, 1
        %s1387 = scalar_select %p1386, %s65, 1
        %s1388 = smul.addr %s1387, 4
        %s1389 = smul.addr %s1388, 4
        %s1390 = scalar_lea.vmem %s8, %s1389
        %p1391 = scmp.lt.s32.totalorder %s65, 1
        %s1392 = scalar_select %p1391, %s65, 1
        %s1393 = smul.addr %s1392, 4
        %s1394 = smul.addr %s1393, 4
        %s1395 = scalar_lea.vmem %s10, %s1394
        %p1396 = scmp.lt.s32.totalorder %s65, 1
        %s1397 = scalar_select %p1396, %s65, 1
        %s1398 = smul.addr %s1397, 16
        %s1399 = smul.addr %s1398, 4
        %s1400 = scalar_lea.vmem %s14, %s1399
        %p1401 = scmp.lt.s32.totalorder %s65, 1
        %s1402 = scalar_select %p1401, %s65, 1
        %s1403 = scalar_lea.vmem %s21, %s1402
        %p1405 = scmp.eq.s32.totalorder %s65, 0
        // Predicated region
        $region181: #{tpu_custom_call.1} parent=123 // pred_check
          %p1406 = pneg %p1405
        $region182: #{tpu_custom_call.1} parent=123 // pred_check_branch
          %1408 = sbr.rel (%p1406) target = $region184
        $region183: #{tpu_custom_call.1} parent=123 // pred_region
          %v1409 = vld [vmem:[#allocation3] sm:$0xf]
          %v1410 = vld [vmem:[#allocation3 + $0x4] sm:$0xf]
          %v1411 = vunpack.c.l.bf16 %v1409
          %v1412 = vunpack.c.l.bf16 %v1410
          %vm1413 = vcmask 261120
          %1414 = vst.msk [vmem:[#allocation2] sm:$0xff] %vm1413, %v1411
          %1415 = vst.msk [vmem:[#allocation2 + $0x8] sm:$0xff] %vm1413, %v1412
        $region184: #{tpu_custom_call.1} parent=123 // pred_fallthru
          _
        %v1416 = vld [vmem:[#allocation2] sm:$0xff]
        %v1417 = vld [vmem:[#allocation2 + $0x8] sm:$0xff]
        %v1418 = vld [vmem:[%s1369] sm:$0xf]
        %v1419 = vld [vmem:[%s1369 + $0x4] sm:$0xf]
        %v1420 = vld [vmem:[%s1369 + $0x8] sm:$0xf]
        %v1421 = vld [vmem:[%s1369 + $0xc] sm:$0xf]
        %v1422 = vld [vmem:[%s1375] sm:$0xf]
        %v1423 = vld [vmem:[%s1375 + $0x4] sm:$0xf]
        %v1424 = vld [vmem:[%s1375 + $0x8] sm:$0xf]
        %v1425 = vld [vmem:[%s1375 + $0xc] sm:$0xf]
        %v1426 = vld [vmem:[%s1102] sm:$0x1]
        %v1427 = vpack.c.bf16 %v1417, %v1416
        %v1429 = vperm.slane %v1426, 0
        %v1435 = vunpack.c.l.b16 %v1422
        %v1436 = vunpack.c.l.b16 %v1423
        %v1437 = vunpack.c.l.b16 %v1424
        %v1438 = vunpack.c.l.b16 %v1425
        %v1439 = vpack.c.b16 %v1436, %v1435
        %v1440 = vpack.c.b16 %v1438, %v1437
        %vm1443 = vcmask 261120
        %v1445 = vsel %vm1443, %v1427, 0
        %1447 = vmatpush.bf16.msra.mxu0 0
        %1448 = vmatpush.bf16.msra.mxu0 0
        %1449 = vmatpush.bf16.msra.mxu0 0
        %1450 = vmatpush.bf16.msra.mxu0 0
        %1451 = vmatpush.bf16.msra.mxu0 0
        %1452 = vmatpush.bf16.msra.mxu0 0
        %1453 = vmatpush.bf16.msra.mxu0 %v1440
        %1454 = vmatpush.bf16.msra.mxu0 %v1439
        %1455 = vmatmul.bf16.gmra.mxu0 %v1445
        %v1456 = vpop.f32.mrf.mxu0
        %v1457 = vadd.f32 %v1429, %v1456
        %v1458 = vpop.f32.mrf.mxu0
        %v1459 = vadd.f32 %v1429, %v1458
        %1460 = vdwg.mxu0
        %v1461 = vpack.c.bf16 %v1457, %v1457
        %v1462 = vpack.c.bf16 %v1459, %v1459
        %v1464 = vunpack.c.l.b16 %v1461
        %v1465 = vpack.c.b16 %v1464, %v1464
        %1466 = vrot.lane.b32.xlu0 %v1465, 96
        %v1467 = vpop.permute.xlu0 %1466
        %vm1468 = vcmask 31744
        %v1470 = vsel %vm1468, %v1461, 0
        %v1473 = vsel %vm1468, %v1467, 0
        %1475 = vmatpush.bf16.xpose.msra.mxu0 0
        %1476 = vmatpush.bf16.xpose.msra.mxu0 0
        %1477 = vmatpush.bf16.xpose.msra.mxu0 0
        %1478 = vmatpush.bf16.xpose.msra.mxu0 0
        %1479 = vmatpush.bf16.xpose.msra.mxu0 0
        %1480 = vmatpush.bf16.xpose.msra.mxu0 0
        %1481 = vmatpush.bf16.xpose.msra.mxu0 0
        %1482 = vmatpush.bf16.xpose.msra.mxu0 %v1473
        %1483 = vmatmul.bf16.gmra.mxu0 %v1470
        %v1484 = vpop.f32.mrf.mxu0
        %v1485 = vadd.f32 0.0, %v1484
        %v1486 = vpop.f32.mrf.mxu0
        %1487 = vdwg.mxu0
        %v1489 = vunpack.c.l.b16 %v1462
        %v1490 = vpack.c.b16 %v1489, %v1489
        %1491 = vrot.lane.b32.xlu0 %v1490, 96
        %v1492 = vpop.permute.xlu0 %1491
        %v1494 = vsel %vm1468, %v1462, 0
        %v1497 = vsel %vm1468, %v1492, 0
        %1499 = vmatpush.bf16.xpose.msra.mxu0 0
        %1500 = vmatpush.bf16.xpose.msra.mxu0 0
        %1501 = vmatpush.bf16.xpose.msra.mxu0 0
        %1502 = vmatpush.bf16.xpose.msra.mxu0 0
        %1503 = vmatpush.bf16.xpose.msra.mxu0 0
        %1504 = vmatpush.bf16.xpose.msra.mxu0 0
        %1505 = vmatpush.bf16.xpose.msra.mxu0 0
        %1506 = vmatpush.bf16.xpose.msra.mxu0 %v1497
        %1507 = vmatmul.bf16.gmra.mxu0 %v1494
        %v1508 = vpop.f32.mrf.mxu0
        %v1509 = vadd.f32 0.0, %v1508
        %v1510 = vpop.f32.mrf.mxu0
        %1511 = vdwg.mxu0
        %v1512 = vmul.f32 %v1485, 0.5
        %v1513 = vmul.f32 %v1509, 0.5
        %vm1514 = vcmask 64512
        %v1515 = vsel %vm1514, %v1512, -inf
        %1516 = vmax.xlane.f32.xlu0 %v1515
        %v1517 = vpop.xlane.xlu0 %1516
        %v1518 = vsel %vm1514, %v1513, -inf
        %1519 = vmax.xlane.f32.xlu0 %v1518
        %v1520 = vpop.xlane.xlu0 %1519
        %v1521 = vsub.f32 %v1512, %v1517
        %v1522 = vsub.f32 %v1513, %v1520
        %v1523 = vmul.f32 %v1521, 1.442695
        %v1524 = vpow.pop %v1523
        %v1525 = vmul.f32 %v1522, 1.442695
        %v1526 = vpow.pop %v1525
        %v1527 = vsel %vm1514, %v1524, 0.0
        %1528 = vadd.xlane.f32.xlu0 %v1527
        %v1529 = vpop.xlane.xlu0 %1528
        %v1530 = vsel %vm1514, %v1526, 0.0
        %1531 = vadd.xlane.f32.xlu0 %v1530
        %v1532 = vpop.xlane.xlu0 %1531
        %v1533 = vrcp.pop %v1529
        %v1534 = vmul.f32 %v1529, %v1533
        %v1535 = vsub.f32 1.0, %v1534
        %v1536 = vmul.f32 %v1533, %v1535
        %v1537 = vadd.f32 %v1533, %v1536
        %vm1538 = vweird.f32 %v1529
        %vm1539 = vweird.f32 %v1533
        %vm1540 = vmor %vm1538, %vm1539
        %v1541 = vsel %vm1540, %v1533, %v1537
        %v1542 = vand.u32 2147483647, %v1529
        %vm1543 = vcmp.eq.f32.partialorder %v1542, 8.507059e+37
        %v1544 = vand.u32 %v1529, 2147483648
        %v1545 = vor.u32 1.1754944e-38, %v1544
        %v1546 = vsel %vm1543, %v1545, %v1541
        %v1547 = vmul.f32 %v1524, %v1546
        %v1548 = vrcp.pop %v1532
        %v1549 = vmul.f32 %v1532, %v1548
        %v1550 = vsub.f32 1.0, %v1549
        %v1551 = vmul.f32 %v1548, %v1550
        %v1552 = vadd.f32 %v1548, %v1551
        %vm1553 = vweird.f32 %v1532
        %vm1554 = vweird.f32 %v1548
        %vm1555 = vmor %vm1553, %vm1554
        %v1556 = vsel %vm1555, %v1548, %v1552
        %v1557 = vand.u32 2147483647, %v1532
        %vm1558 = vcmp.eq.f32.partialorder %v1557, 8.507059e+37
        %v1559 = vand.u32 %v1532, 2147483648
        %v1560 = vor.u32 1.1754944e-38, %v1559
        %v1561 = vsel %vm1558, %v1560, %v1556
        %v1562 = vmul.f32 %v1526, %v1561
        %v1563 = vpack.c.bf16 %v1547, %v1547
        %v1564 = vpack.c.bf16 %v1562, %v1562
        %1565 = vrot.lane.b32.xlu0 %v1465, 64
        %v1566 = vpop.permute.xlu0 %1565
        %v1568 = vsel %vm1514, %v1563, 0
        %vm1570 = vcmask 1043456
        %v1572 = vsel %vm1570, %v1566, 0
        %1574 = vmatpush.bf16.msra.mxu0 0
        %1575 = vmatpush.bf16.msra.mxu0 0
        %1576 = vmatpush.bf16.msra.mxu0 0
        %1577 = vmatpush.bf16.msra.mxu0 0
        %1578 = vmatpush.bf16.msra.mxu0 0
        %1579 = vmatpush.bf16.msra.mxu0 0
        %1580 = vmatpush.bf16.msra.mxu0 0
        %1581 = vmatpush.bf16.msra.mxu0 %v1572
        %1582 = vmatmul.bf16.gmra.mxu0 %v1568
        %v1583 = vpop.f32.mrf.mxu0
        %v1584 = vadd.f32 0.0, %v1583
        %v1585 = vpop.f32.mrf.mxu0
        %1586 = vdwg.mxu0
        %1587 = vrot.lane.b32.xlu0 %v1490, 64
        %v1588 = vpop.permute.xlu0 %1587
        %v1590 = vsel %vm1514, %v1564, 0
        %v1593 = vsel %vm1570, %v1588, 0
        %1595 = vmatpush.bf16.msra.mxu0 0
        %1596 = vmatpush.bf16.msra.mxu0 0
        %1597 = vmatpush.bf16.msra.mxu0 0
        %1598 = vmatpush.bf16.msra.mxu0 0
        %1599 = vmatpush.bf16.msra.mxu0 0
        %1600 = vmatpush.bf16.msra.mxu0 0
        %1601 = vmatpush.bf16.msra.mxu0 0
        %1602 = vmatpush.bf16.msra.mxu0 %v1593
        %1603 = vmatmul.bf16.gmra.mxu0 %v1590
        %v1604 = vpop.f32.mrf.mxu0
        %v1605 = vadd.f32 0.0, %v1604
        %v1606 = vpop.f32.mrf.mxu0
        %1607 = vdwg.mxu0
        %1608 = vrot.lane.b32.xlu0 %v1465, 124
        %v1609 = vpop.permute.xlu0 %1608
        %1610 = vrot.lane.b32.xlu0 %v1465, 92
        %v1611 = vpop.permute.xlu0 %1610
        %v1613 = vsel %vm1468, %v1609, 0
        %v1616 = vsel %vm1468, %v1611, 0
        %1618 = vmatpush.bf16.xpose.msra.mxu0 0
        %1619 = vmatpush.bf16.xpose.msra.mxu0 0
        %1620 = vmatpush.bf16.xpose.msra.mxu0 0
        %1621 = vmatpush.bf16.xpose.msra.mxu0 0
        %1622 = vmatpush.bf16.xpose.msra.mxu0 0
        %1623 = vmatpush.bf16.xpose.msra.mxu0 0
        %1624 = vmatpush.bf16.xpose.msra.mxu0 0
        %1625 = vmatpush.bf16.xpose.msra.mxu0 %v1616
        %1626 = vmatmul.bf16.gmra.mxu0 %v1613
        %v1627 = vpop.f32.mrf.mxu0
        %v1628 = vadd.f32 0.0, %v1627
        %v1629 = vpop.f32.mrf.mxu0
        %1630 = vdwg.mxu0
        %1631 = vrot.lane.b32.xlu0 %v1490, 124
        %v1632 = vpop.permute.xlu0 %1631
        %1633 = vrot.lane.b32.xlu0 %v1490, 92
        %v1634 = vpop.permute.xlu0 %1633
        %v1636 = vsel %vm1468, %v1632, 0
        %v1639 = vsel %vm1468, %v1634, 0
        %1641 = vmatpush.bf16.xpose.msra.mxu0 0
        %1642 = vmatpush.bf16.xpose.msra.mxu0 0
        %1643 = vmatpush.bf16.xpose.msra.mxu0 0
        %1644 = vmatpush.bf16.xpose.msra.mxu0 0
        %1645 = vmatpush.bf16.xpose.msra.mxu0 0
        %1646 = vmatpush.bf16.xpose.msra.mxu0 0
        %1647 = vmatpush.bf16.xpose.msra.mxu0 0
        %1648 = vmatpush.bf16.xpose.msra.mxu0 %v1639
        %1649 = vmatmul.bf16.gmra.mxu0 %v1636
        %v1650 = vpop.f32.mrf.mxu0
        %v1651 = vadd.f32 0.0, %v1650
        %v1652 = vpop.f32.mrf.mxu0
        %1653 = vdwg.mxu0
        %v1654 = vmul.f32 %v1628, 0.5
        %v1655 = vmul.f32 %v1651, 0.5
        %v1656 = vsel %vm1514, %v1654, -inf
        %1657 = vmax.xlane.f32.xlu0 %v1656
        %v1658 = vpop.xlane.xlu0 %1657
        %v1659 = vsel %vm1514, %v1655, -inf
        %1660 = vmax.xlane.f32.xlu0 %v1659
        %v1661 = vpop.xlane.xlu0 %1660
        %v1662 = vsub.f32 %v1654, %v1658
        %v1663 = vsub.f32 %v1655, %v1661
        %v1664 = vmul.f32 %v1662, 1.442695
        %v1665 = vpow.pop %v1664
        %v1666 = vmul.f32 %v1663, 1.442695
        %v1667 = vpow.pop %v1666
        %v1668 = vsel %vm1514, %v1665, 0.0
        %1669 = vadd.xlane.f32.xlu0 %v1668
        %v1670 = vpop.xlane.xlu0 %1669
        %v1671 = vsel %vm1514, %v1667, 0.0
        %1672 = vadd.xlane.f32.xlu0 %v1671
        %v1673 = vpop.xlane.xlu0 %1672
        %v1674 = vrcp.pop %v1670
        %v1675 = vmul.f32 %v1670, %v1674
        %v1676 = vsub.f32 1.0, %v1675
        %v1677 = vmul.f32 %v1674, %v1676
        %v1678 = vadd.f32 %v1674, %v1677
        %vm1679 = vweird.f32 %v1670
        %vm1680 = vweird.f32 %v1674
        %vm1681 = vmor %vm1679, %vm1680
        %v1682 = vsel %vm1681, %v1674, %v1678
        %v1683 = vand.u32 2147483647, %v1670
        %vm1684 = vcmp.eq.f32.partialorder %v1683, 8.507059e+37
        %v1685 = vand.u32 %v1670, 2147483648
        %v1686 = vor.u32 1.1754944e-38, %v1685
        %v1687 = vsel %vm1684, %v1686, %v1682
        %v1688 = vmul.f32 %v1665, %v1687
        %v1689 = vrcp.pop %v1673
        %v1690 = vmul.f32 %v1673, %v1689
        %v1691 = vsub.f32 1.0, %v1690
        %v1692 = vmul.f32 %v1689, %v1691
        %v1693 = vadd.f32 %v1689, %v1692
        %vm1694 = vweird.f32 %v1673
        %vm1695 = vweird.f32 %v1689
        %vm1696 = vmor %vm1694, %vm1695
        %v1697 = vsel %vm1696, %v1689, %v1693
        %v1698 = vand.u32 2147483647, %v1673
        %vm1699 = vcmp.eq.f32.partialorder %v1698, 8.507059e+37
        %v1700 = vand.u32 %v1673, 2147483648
        %v1701 = vor.u32 1.1754944e-38, %v1700
        %v1702 = vsel %vm1699, %v1701, %v1697
        %v1703 = vmul.f32 %v1667, %v1702
        %v1704 = vpack.c.bf16 %v1688, %v1688
        %v1705 = vpack.c.bf16 %v1703, %v1703
        %1706 = vrot.lane.b32.xlu0 %v1465, 60
        %v1707 = vpop.permute.xlu0 %1706
        %v1709 = vsel %vm1514, %v1704, 0
        %v1712 = vsel %vm1570, %v1707, 0
        %1714 = vmatpush.bf16.msra.mxu0 0
        %1715 = vmatpush.bf16.msra.mxu0 0
        %1716 = vmatpush.bf16.msra.mxu0 0
        %1717 = vmatpush.bf16.msra.mxu0 0
        %1718 = vmatpush.bf16.msra.mxu0 0
        %1719 = vmatpush.bf16.msra.mxu0 0
        %1720 = vmatpush.bf16.msra.mxu0 0
        %1721 = vmatpush.bf16.msra.mxu0 %v1712
        %1722 = vmatmul.bf16.gmra.mxu0 %v1709
        %v1723 = vpop.f32.mrf.mxu0
        %v1724 = vadd.f32 0.0, %v1723
        %v1725 = vpop.f32.mrf.mxu0
        %1726 = vdwg.mxu0
        %1727 = vrot.lane.b32.xlu0 %v1490, 60
        %v1728 = vpop.permute.xlu0 %1727
        %v1730 = vsel %vm1514, %v1705, 0
        %v1733 = vsel %vm1570, %v1728, 0
        %1735 = vmatpush.bf16.msra.mxu0 0
        %1736 = vmatpush.bf16.msra.mxu0 0
        %1737 = vmatpush.bf16.msra.mxu0 0
        %1738 = vmatpush.bf16.msra.mxu0 0
        %1739 = vmatpush.bf16.msra.mxu0 0
        %1740 = vmatpush.bf16.msra.mxu0 0
        %1741 = vmatpush.bf16.msra.mxu0 0
        %1742 = vmatpush.bf16.msra.mxu0 %v1733
        %1743 = vmatmul.bf16.gmra.mxu0 %v1730
        %v1744 = vpop.f32.mrf.mxu0
        %v1745 = vadd.f32 0.0, %v1744
        %v1746 = vpop.f32.mrf.mxu0
        %1747 = vdwg.mxu0
        %1748 = vrot.lane.b32.xlu0 %v1465, 120
        %v1749 = vpop.permute.xlu0 %1748
        %1750 = vrot.lane.b32.xlu0 %v1465, 88
        %v1751 = vpop.permute.xlu0 %1750
        %v1753 = vsel %vm1468, %v1749, 0
        %v1756 = vsel %vm1468, %v1751, 0
        %1758 = vmatpush.bf16.xpose.msra.mxu0 0
        %1759 = vmatpush.bf16.xpose.msra.mxu0 0
        %1760 = vmatpush.bf16.xpose.msra.mxu0 0
        %1761 = vmatpush.bf16.xpose.msra.mxu0 0
        %1762 = vmatpush.bf16.xpose.msra.mxu0 0
        %1763 = vmatpush.bf16.xpose.msra.mxu0 0
        %1764 = vmatpush.bf16.xpose.msra.mxu0 0
        %1765 = vmatpush.bf16.xpose.msra.mxu0 %v1756
        %1766 = vmatmul.bf16.gmra.mxu0 %v1753
        %v1767 = vpop.f32.mrf.mxu0
        %v1768 = vadd.f32 0.0, %v1767
        %v1769 = vpop.f32.mrf.mxu0
        %1770 = vdwg.mxu0
        %1771 = vrot.lane.b32.xlu0 %v1490, 120
        %v1772 = vpop.permute.xlu0 %1771
        %1773 = vrot.lane.b32.xlu0 %v1490, 88
        %v1774 = vpop.permute.xlu0 %1773
        %v1776 = vsel %vm1468, %v1772, 0
        %v1779 = vsel %vm1468, %v1774, 0
        %1781 = vmatpush.bf16.xpose.msra.mxu0 0
        %1782 = vmatpush.bf16.xpose.msra.mxu0 0
        %1783 = vmatpush.bf16.xpose.msra.mxu0 0
        %1784 = vmatpush.bf16.xpose.msra.mxu0 0
        %1785 = vmatpush.bf16.xpose.msra.mxu0 0
        %1786 = vmatpush.bf16.xpose.msra.mxu0 0
        %1787 = vmatpush.bf16.xpose.msra.mxu0 0
        %1788 = vmatpush.bf16.xpose.msra.mxu0 %v1779
        %1789 = vmatmul.bf16.gmra.mxu0 %v1776
        %v1790 = vpop.f32.mrf.mxu0
        %v1791 = vadd.f32 0.0, %v1790
        %v1792 = vpop.f32.mrf.mxu0
        %1793 = vdwg.mxu0
        %v1794 = vmul.f32 %v1768, 0.5
        %v1795 = vmul.f32 %v1791, 0.5
        %v1796 = vsel %vm1514, %v1794, -inf
        %1797 = vmax.xlane.f32.xlu0 %v1796
        %v1798 = vpop.xlane.xlu0 %1797
        %v1799 = vsel %vm1514, %v1795, -inf
        %1800 = vmax.xlane.f32.xlu0 %v1799
        %v1801 = vpop.xlane.xlu0 %1800
        %v1802 = vsub.f32 %v1794, %v1798
        %v1803 = vsub.f32 %v1795, %v1801
        %v1804 = vmul.f32 %v1802, 1.442695
        %v1805 = vpow.pop %v1804
        %v1806 = vmul.f32 %v1803, 1.442695
        %v1807 = vpow.pop %v1806
        %v1808 = vsel %vm1514, %v1805, 0.0
        %1809 = vadd.xlane.f32.xlu0 %v1808
        %v1810 = vpop.xlane.xlu0 %1809
        %v1811 = vsel %vm1514, %v1807, 0.0
        %1812 = vadd.xlane.f32.xlu0 %v1811
        %v1813 = vpop.xlane.xlu0 %1812
        %v1814 = vrcp.pop %v1810
        %v1815 = vmul.f32 %v1810, %v1814
        %v1816 = vsub.f32 1.0, %v1815
        %v1817 = vmul.f32 %v1814, %v1816
        %v1818 = vadd.f32 %v1814, %v1817
        %vm1819 = vweird.f32 %v1810
        %vm1820 = vweird.f32 %v1814
        %vm1821 = vmor %vm1819, %vm1820
        %v1822 = vsel %vm1821, %v1814, %v1818
        %v1823 = vand.u32 2147483647, %v1810
        %vm1824 = vcmp.eq.f32.partialorder %v1823, 8.507059e+37
        %v1825 = vand.u32 %v1810, 2147483648
        %v1826 = vor.u32 1.1754944e-38, %v1825
        %v1827 = vsel %vm1824, %v1826, %v1822
        %v1828 = vmul.f32 %v1805, %v1827
        %v1829 = vrcp.pop %v1813
        %v1830 = vmul.f32 %v1813, %v1829
        %v1831 = vsub.f32 1.0, %v1830
        %v1832 = vmul.f32 %v1829, %v1831
        %v1833 = vadd.f32 %v1829, %v1832
        %vm1834 = vweird.f32 %v1813
        %vm1835 = vweird.f32 %v1829
        %vm1836 = vmor %vm1834, %vm1835
        %v1837 = vsel %vm1836, %v1829, %v1833
        %v1838 = vand.u32 2147483647, %v1813
        %vm1839 = vcmp.eq.f32.partialorder %v1838, 8.507059e+37
        %v1840 = vand.u32 %v1813, 2147483648
        %v1841 = vor.u32 1.1754944e-38, %v1840
        %v1842 = vsel %vm1839, %v1841, %v1837
        %v1843 = vmul.f32 %v1807, %v1842
        %v1844 = vpack.c.bf16 %v1828, %v1828
        %v1845 = vpack.c.bf16 %v1843, %v1843
        %1846 = vrot.lane.b32.xlu0 %v1465, 56
        %v1847 = vpop.permute.xlu0 %1846
        %v1849 = vsel %vm1514, %v1844, 0
        %v1852 = vsel %vm1570, %v1847, 0
        %1854 = vmatpush.bf16.msra.mxu0 0
        %1855 = vmatpush.bf16.msra.mxu0 0
        %1856 = vmatpush.bf16.msra.mxu0 0
        %1857 = vmatpush.bf16.msra.mxu0 0
        %1858 = vmatpush.bf16.msra.mxu0 0
        %1859 = vmatpush.bf16.msra.mxu0 0
        %1860 = vmatpush.bf16.msra.mxu0 0
        %1861 = vmatpush.bf16.msra.mxu0 %v1852
        %1862 = vmatmul.bf16.gmra.mxu0 %v1849
        %v1863 = vpop.f32.mrf.mxu0
        %v1864 = vadd.f32 0.0, %v1863
        %v1865 = vpop.f32.mrf.mxu0
        %1866 = vdwg.mxu0
        %1867 = vrot.lane.b32.xlu0 %v1490, 56
        %v1868 = vpop.permute.xlu0 %1867
        %v1870 = vsel %vm1514, %v1845, 0
        %v1873 = vsel %vm1570, %v1868, 0
        %1875 = vmatpush.bf16.msra.mxu0 0
        %1876 = vmatpush.bf16.msra.mxu0 0
        %1877 = vmatpush.bf16.msra.mxu0 0
        %1878 = vmatpush.bf16.msra.mxu0 0
        %1879 = vmatpush.bf16.msra.mxu0 0
        %1880 = vmatpush.bf16.msra.mxu0 0
        %1881 = vmatpush.bf16.msra.mxu0 0
        %1882 = vmatpush.bf16.msra.mxu0 %v1873
        %1883 = vmatmul.bf16.gmra.mxu0 %v1870
        %v1884 = vpop.f32.mrf.mxu0
        %v1885 = vadd.f32 0.0, %v1884
        %v1886 = vpop.f32.mrf.mxu0
        %1887 = vdwg.mxu0
        %1888 = vrot.lane.b32.xlu0 %v1465, 116
        %v1889 = vpop.permute.xlu0 %1888
        %1890 = vrot.lane.b32.xlu0 %v1465, 84
        %v1891 = vpop.permute.xlu0 %1890
        %v1893 = vsel %vm1468, %v1889, 0
        %v1896 = vsel %vm1468, %v1891, 0
        %1898 = vmatpush.bf16.xpose.msra.mxu0 0
        %1899 = vmatpush.bf16.xpose.msra.mxu0 0
        %1900 = vmatpush.bf16.xpose.msra.mxu0 0
        %1901 = vmatpush.bf16.xpose.msra.mxu0 0
        %1902 = vmatpush.bf16.xpose.msra.mxu0 0
        %1903 = vmatpush.bf16.xpose.msra.mxu0 0
        %1904 = vmatpush.bf16.xpose.msra.mxu0 0
        %1905 = vmatpush.bf16.xpose.msra.mxu0 %v1896
        %1906 = vmatmul.bf16.gmra.mxu0 %v1893
        %v1907 = vpop.f32.mrf.mxu0
        %v1908 = vadd.f32 0.0, %v1907
        %v1909 = vpop.f32.mrf.mxu0
        %1910 = vdwg.mxu0
        %1911 = vrot.lane.b32.xlu0 %v1490, 116
        %v1912 = vpop.permute.xlu0 %1911
        %1913 = vrot.lane.b32.xlu0 %v1490, 84
        %v1914 = vpop.permute.xlu0 %1913
        %v1916 = vsel %vm1468, %v1912, 0
        %v1919 = vsel %vm1468, %v1914, 0
        %1921 = vmatpush.bf16.xpose.msra.mxu0 0
        %1922 = vmatpush.bf16.xpose.msra.mxu0 0
        %1923 = vmatpush.bf16.xpose.msra.mxu0 0
        %1924 = vmatpush.bf16.xpose.msra.mxu0 0
        %1925 = vmatpush.bf16.xpose.msra.mxu0 0
        %1926 = vmatpush.bf16.xpose.msra.mxu0 0
        %1927 = vmatpush.bf16.xpose.msra.mxu0 0
        %1928 = vmatpush.bf16.xpose.msra.mxu0 %v1919
        %1929 = vmatmul.bf16.gmra.mxu0 %v1916
        %v1930 = vpop.f32.mrf.mxu0
        %v1931 = vadd.f32 0.0, %v1930
        %v1932 = vpop.f32.mrf.mxu0
        %1933 = vdwg.mxu0
        %v1934 = vmul.f32 %v1908, 0.5
        %v1935 = vmul.f32 %v1931, 0.5
        %v1936 = vsel %vm1514, %v1934, -inf
        %1937 = vmax.xlane.f32.xlu0 %v1936
        %v1938 = vpop.xlane.xlu0 %1937
        %v1939 = vsel %vm1514, %v1935, -inf
        %1940 = vmax.xlane.f32.xlu0 %v1939
        %v1941 = vpop.xlane.xlu0 %1940
        %v1942 = vsub.f32 %v1934, %v1938
        %v1943 = vsub.f32 %v1935, %v1941
        %v1944 = vmul.f32 %v1942, 1.442695
        %v1945 = vpow.pop %v1944
        %v1946 = vmul.f32 %v1943, 1.442695
        %v1947 = vpow.pop %v1946
        %v1948 = vsel %vm1514, %v1945, 0.0
        %1949 = vadd.xlane.f32.xlu0 %v1948
        %v1950 = vpop.xlane.xlu0 %1949
        %v1951 = vsel %vm1514, %v1947, 0.0
        %1952 = vadd.xlane.f32.xlu0 %v1951
        %v1953 = vpop.xlane.xlu0 %1952
        %v1954 = vrcp.pop %v1950
        %v1955 = vmul.f32 %v1950, %v1954
        %v1956 = vsub.f32 1.0, %v1955
        %v1957 = vmul.f32 %v1954, %v1956
        %v1958 = vadd.f32 %v1954, %v1957
        %vm1959 = vweird.f32 %v1950
        %vm1960 = vweird.f32 %v1954
        %vm1961 = vmor %vm1959, %vm1960
        %v1962 = vsel %vm1961, %v1954, %v1958
        %v1963 = vand.u32 2147483647, %v1950
        %vm1964 = vcmp.eq.f32.partialorder %v1963, 8.507059e+37
        %v1965 = vand.u32 %v1950, 2147483648
        %v1966 = vor.u32 1.1754944e-38, %v1965
        %v1967 = vsel %vm1964, %v1966, %v1962
        %v1968 = vmul.f32 %v1945, %v1967
        %v1969 = vrcp.pop %v1953
        %v1970 = vmul.f32 %v1953, %v1969
        %v1971 = vsub.f32 1.0, %v1970
        %v1972 = vmul.f32 %v1969, %v1971
        %v1973 = vadd.f32 %v1969, %v1972
        %vm1974 = vweird.f32 %v1953
        %vm1975 = vweird.f32 %v1969
        %vm1976 = vmor %vm1974, %vm1975
        %v1977 = vsel %vm1976, %v1969, %v1973
        %v1978 = vand.u32 2147483647, %v1953
        %vm1979 = vcmp.eq.f32.partialorder %v1978, 8.507059e+37
        %v1980 = vand.u32 %v1953, 2147483648
        %v1981 = vor.u32 1.1754944e-38, %v1980
        %v1982 = vsel %vm1979, %v1981, %v1977
        %v1983 = vmul.f32 %v1947, %v1982
        %v1984 = vpack.c.bf16 %v1968, %v1968
        %v1985 = vpack.c.bf16 %v1983, %v1983
        %1986 = vrot.lane.b32.xlu0 %v1465, 52
        %v1987 = vpop.permute.xlu0 %1986
        %v1989 = vsel %vm1514, %v1984, 0
        %v1992 = vsel %vm1570, %v1987, 0
        %1994 = vmatpush.bf16.msra.mxu0 0
        %1995 = vmatpush.bf16.msra.mxu0 0
        %1996 = vmatpush.bf16.msra.mxu0 0
        %1997 = vmatpush.bf16.msra.mxu0 0
        %1998 = vmatpush.bf16.msra.mxu0 0
        %1999 = vmatpush.bf16.msra.mxu0 0
        %2000 = vmatpush.bf16.msra.mxu0 0
        %2001 = vmatpush.bf16.msra.mxu0 %v1992
        %2002 = vmatmul.bf16.gmra.mxu0 %v1989
        %v2003 = vpop.f32.mrf.mxu0
        %v2004 = vadd.f32 0.0, %v2003
        %v2005 = vpop.f32.mrf.mxu0
        %2006 = vdwg.mxu0
        %2007 = vrot.lane.b32.xlu0 %v1490, 52
        %v2008 = vpop.permute.xlu0 %2007
        %v2010 = vsel %vm1514, %v1985, 0
        %v2013 = vsel %vm1570, %v2008, 0
        %2015 = vmatpush.bf16.msra.mxu0 0
        %2016 = vmatpush.bf16.msra.mxu0 0
        %2017 = vmatpush.bf16.msra.mxu0 0
        %2018 = vmatpush.bf16.msra.mxu0 0
        %2019 = vmatpush.bf16.msra.mxu0 0
        %2020 = vmatpush.bf16.msra.mxu0 0
        %2021 = vmatpush.bf16.msra.mxu0 0
        %2022 = vmatpush.bf16.msra.mxu0 %v2013
        %2023 = vmatmul.bf16.gmra.mxu0 %v2010
        %v2024 = vpop.f32.mrf.mxu0
        %v2025 = vadd.f32 0.0, %v2024
        %v2026 = vpop.f32.mrf.mxu0
        %2027 = vdwg.mxu0
        %2028 = vrot.lane.b32.xlu0 %v1465, 112
        %v2029 = vpop.permute.xlu0 %2028
        %2030 = vrot.lane.b32.xlu0 %v1465, 80
        %v2031 = vpop.permute.xlu0 %2030
        %v2033 = vsel %vm1468, %v2029, 0
        %v2036 = vsel %vm1468, %v2031, 0
        %2038 = vmatpush.bf16.xpose.msra.mxu0 0
        %2039 = vmatpush.bf16.xpose.msra.mxu0 0
        %2040 = vmatpush.bf16.xpose.msra.mxu0 0
        %2041 = vmatpush.bf16.xpose.msra.mxu0 0
        %2042 = vmatpush.bf16.xpose.msra.mxu0 0
        %2043 = vmatpush.bf16.xpose.msra.mxu0 0
        %2044 = vmatpush.bf16.xpose.msra.mxu0 0
        %2045 = vmatpush.bf16.xpose.msra.mxu0 %v2036
        %2046 = vmatmul.bf16.gmra.mxu0 %v2033
        %v2047 = vpop.f32.mrf.mxu0
        %v2048 = vadd.f32 0.0, %v2047
        %v2049 = vpop.f32.mrf.mxu0
        %2050 = vdwg.mxu0
        %2051 = vrot.lane.b32.xlu0 %v1490, 112
        %v2052 = vpop.permute.xlu0 %2051
        %2053 = vrot.lane.b32.xlu0 %v1490, 80
        %v2054 = vpop.permute.xlu0 %2053
        %v2056 = vsel %vm1468, %v2052, 0
        %v2059 = vsel %vm1468, %v2054, 0
        %2061 = vmatpush.bf16.xpose.msra.mxu0 0
        %2062 = vmatpush.bf16.xpose.msra.mxu0 0
        %2063 = vmatpush.bf16.xpose.msra.mxu0 0
        %2064 = vmatpush.bf16.xpose.msra.mxu0 0
        %2065 = vmatpush.bf16.xpose.msra.mxu0 0
        %2066 = vmatpush.bf16.xpose.msra.mxu0 0
        %2067 = vmatpush.bf16.xpose.msra.mxu0 0
        %2068 = vmatpush.bf16.xpose.msra.mxu0 %v2059
        %2069 = vmatmul.bf16.gmra.mxu0 %v2056
        %v2070 = vpop.f32.mrf.mxu0
        %v2071 = vadd.f32 0.0, %v2070
        %v2072 = vpop.f32.mrf.mxu0
        %2073 = vdwg.mxu0
        %v2074 = vmul.f32 %v2048, 0.5
        %v2075 = vmul.f32 %v2071, 0.5
        %v2076 = vsel %vm1514, %v2074, -inf
        %2077 = vmax.xlane.f32.xlu0 %v2076
        %v2078 = vpop.xlane.xlu0 %2077
        %v2079 = vsel %vm1514, %v2075, -inf
        %2080 = vmax.xlane.f32.xlu0 %v2079
        %v2081 = vpop.xlane.xlu0 %2080
        %v2082 = vsub.f32 %v2074, %v2078
        %v2083 = vsub.f32 %v2075, %v2081
        %v2084 = vmul.f32 %v2082, 1.442695
        %v2085 = vpow.pop %v2084
        %v2086 = vmul.f32 %v2083, 1.442695
        %v2087 = vpow.pop %v2086
        %v2088 = vsel %vm1514, %v2085, 0.0
        %2089 = vadd.xlane.f32.xlu0 %v2088
        %v2090 = vpop.xlane.xlu0 %2089
        %v2091 = vsel %vm1514, %v2087, 0.0
        %2092 = vadd.xlane.f32.xlu0 %v2091
        %v2093 = vpop.xlane.xlu0 %2092
        %v2094 = vrcp.pop %v2090
        %v2095 = vmul.f32 %v2090, %v2094
        %v2096 = vsub.f32 1.0, %v2095
        %v2097 = vmul.f32 %v2094, %v2096
        %v2098 = vadd.f32 %v2094, %v2097
        %vm2099 = vweird.f32 %v2090
        %vm2100 = vweird.f32 %v2094
        %vm2101 = vmor %vm2099, %vm2100
        %v2102 = vsel %vm2101, %v2094, %v2098
        %v2103 = vand.u32 2147483647, %v2090
        %vm2104 = vcmp.eq.f32.partialorder %v2103, 8.507059e+37
        %v2105 = vand.u32 %v2090, 2147483648
        %v2106 = vor.u32 1.1754944e-38, %v2105
        %v2107 = vsel %vm2104, %v2106, %v2102
        %v2108 = vmul.f32 %v2085, %v2107
        %v2109 = vrcp.pop %v2093
        %v2110 = vmul.f32 %v2093, %v2109
        %v2111 = vsub.f32 1.0, %v2110
        %v2112 = vmul.f32 %v2109, %v2111
        %v2113 = vadd.f32 %v2109, %v2112
        %vm2114 = vweird.f32 %v2093
        %vm2115 = vweird.f32 %v2109
        %vm2116 = vmor %vm2114, %vm2115
        %v2117 = vsel %vm2116, %v2109, %v2113
        %v2118 = vand.u32 2147483647, %v2093
        %vm2119 = vcmp.eq.f32.partialorder %v2118, 8.507059e+37
        %v2120 = vand.u32 %v2093, 2147483648
        %v2121 = vor.u32 1.1754944e-38, %v2120
        %v2122 = vsel %vm2119, %v2121, %v2117
        %v2123 = vmul.f32 %v2087, %v2122
        %v2124 = vpack.c.bf16 %v2108, %v2108
        %v2125 = vpack.c.bf16 %v2123, %v2123
        %2126 = vrot.lane.b32.xlu0 %v1465, 48
        %v2127 = vpop.permute.xlu0 %2126
        %v2129 = vsel %vm1514, %v2124, 0
        %v2132 = vsel %vm1570, %v2127, 0
        %2134 = vmatpush.bf16.msra.mxu0 0
        %2135 = vmatpush.bf16.msra.mxu0 0
        %2136 = vmatpush.bf16.msra.mxu0 0
        %2137 = vmatpush.bf16.msra.mxu0 0
        %2138 = vmatpush.bf16.msra.mxu0 0
        %2139 = vmatpush.bf16.msra.mxu0 0
        %2140 = vmatpush.bf16.msra.mxu0 0
        %2141 = vmatpush.bf16.msra.mxu0 %v2132
        %2142 = vmatmul.bf16.gmra.mxu0 %v2129
        %v2143 = vpop.f32.mrf.mxu0
        %v2144 = vadd.f32 0.0, %v2143
        %v2145 = vpop.f32.mrf.mxu0
        %2146 = vdwg.mxu0
        %2147 = vrot.lane.b32.xlu0 %v1490, 48
        %v2148 = vpop.permute.xlu0 %2147
        %v2150 = vsel %vm1514, %v2125, 0
        %v2153 = vsel %vm1570, %v2148, 0
        %2155 = vmatpush.bf16.msra.mxu0 0
        %2156 = vmatpush.bf16.msra.mxu0 0
        %2157 = vmatpush.bf16.msra.mxu0 0
        %2158 = vmatpush.bf16.msra.mxu0 0
        %2159 = vmatpush.bf16.msra.mxu0 0
        %2160 = vmatpush.bf16.msra.mxu0 0
        %2161 = vmatpush.bf16.msra.mxu0 0
        %2162 = vmatpush.bf16.msra.mxu0 %v2153
        %2163 = vmatmul.bf16.gmra.mxu0 %v2150
        %v2164 = vpop.f32.mrf.mxu0
        %v2165 = vadd.f32 0.0, %v2164
        %v2166 = vpop.f32.mrf.mxu0
        %2167 = vdwg.mxu0
        %2168 = vrot.lane.b32.xlu0 %v1465, 108
        %v2169 = vpop.permute.xlu0 %2168
        %2170 = vrot.lane.b32.xlu0 %v1465, 76
        %v2171 = vpop.permute.xlu0 %2170
        %v2173 = vsel %vm1468, %v2169, 0
        %v2176 = vsel %vm1468, %v2171, 0
        %2178 = vmatpush.bf16.xpose.msra.mxu0 0
        %2179 = vmatpush.bf16.xpose.msra.mxu0 0
        %2180 = vmatpush.bf16.xpose.msra.mxu0 0
        %2181 = vmatpush.bf16.xpose.msra.mxu0 0
        %2182 = vmatpush.bf16.xpose.msra.mxu0 0
        %2183 = vmatpush.bf16.xpose.msra.mxu0 0
        %2184 = vmatpush.bf16.xpose.msra.mxu0 0
        %2185 = vmatpush.bf16.xpose.msra.mxu0 %v2176
        %2186 = vmatmul.bf16.gmra.mxu0 %v2173
        %v2187 = vpop.f32.mrf.mxu0
        %v2188 = vadd.f32 0.0, %v2187
        %v2189 = vpop.f32.mrf.mxu0
        %2190 = vdwg.mxu0
        %2191 = vrot.lane.b32.xlu0 %v1490, 108
        %v2192 = vpop.permute.xlu0 %2191
        %2193 = vrot.lane.b32.xlu0 %v1490, 76
        %v2194 = vpop.permute.xlu0 %2193
        %v2196 = vsel %vm1468, %v2192, 0
        %v2199 = vsel %vm1468, %v2194, 0
        %2201 = vmatpush.bf16.xpose.msra.mxu0 0
        %2202 = vmatpush.bf16.xpose.msra.mxu0 0
        %2203 = vmatpush.bf16.xpose.msra.mxu0 0
        %2204 = vmatpush.bf16.xpose.msra.mxu0 0
        %2205 = vmatpush.bf16.xpose.msra.mxu0 0
        %2206 = vmatpush.bf16.xpose.msra.mxu0 0
        %2207 = vmatpush.bf16.xpose.msra.mxu0 0
        %2208 = vmatpush.bf16.xpose.msra.mxu0 %v2199
        %2209 = vmatmul.bf16.gmra.mxu0 %v2196
        %v2210 = vpop.f32.mrf.mxu0
        %v2211 = vadd.f32 0.0, %v2210
        %v2212 = vpop.f32.mrf.mxu0
        %2213 = vdwg.mxu0
        %v2214 = vmul.f32 %v2188, 0.5
        %v2215 = vmul.f32 %v2211, 0.5
        %v2216 = vsel %vm1514, %v2214, -inf
        %2217 = vmax.xlane.f32.xlu0 %v2216
        %v2218 = vpop.xlane.xlu0 %2217
        %v2219 = vsel %vm1514, %v2215, -inf
        %2220 = vmax.xlane.f32.xlu0 %v2219
        %v2221 = vpop.xlane.xlu0 %2220
        %v2222 = vsub.f32 %v2214, %v2218
        %v2223 = vsub.f32 %v2215, %v2221
        %v2224 = vmul.f32 %v2222, 1.442695
        %v2225 = vpow.pop %v2224
        %v2226 = vmul.f32 %v2223, 1.442695
        %v2227 = vpow.pop %v2226
        %v2228 = vsel %vm1514, %v2225, 0.0
        %2229 = vadd.xlane.f32.xlu0 %v2228
        %v2230 = vpop.xlane.xlu0 %2229
        %v2231 = vsel %vm1514, %v2227, 0.0
        %2232 = vadd.xlane.f32.xlu0 %v2231
        %v2233 = vpop.xlane.xlu0 %2232
        %v2234 = vrcp.pop %v2230
        %v2235 = vmul.f32 %v2230, %v2234
        %v2236 = vsub.f32 1.0, %v2235
        %v2237 = vmul.f32 %v2234, %v2236
        %v2238 = vadd.f32 %v2234, %v2237
        %vm2239 = vweird.f32 %v2230
        %vm2240 = vweird.f32 %v2234
        %vm2241 = vmor %vm2239, %vm2240
        %v2242 = vsel %vm2241, %v2234, %v2238
        %v2243 = vand.u32 2147483647, %v2230
        %vm2244 = vcmp.eq.f32.partialorder %v2243, 8.507059e+37
        %v2245 = vand.u32 %v2230, 2147483648
        %v2246 = vor.u32 1.1754944e-38, %v2245
        %v2247 = vsel %vm2244, %v2246, %v2242
        %v2248 = vmul.f32 %v2225, %v2247
        %v2249 = vrcp.pop %v2233
        %v2250 = vmul.f32 %v2233, %v2249
        %v2251 = vsub.f32 1.0, %v2250
        %v2252 = vmul.f32 %v2249, %v2251
        %v2253 = vadd.f32 %v2249, %v2252
        %vm2254 = vweird.f32 %v2233
        %vm2255 = vweird.f32 %v2249
        %vm2256 = vmor %vm2254, %vm2255
        %v2257 = vsel %vm2256, %v2249, %v2253
        %v2258 = vand.u32 2147483647, %v2233
        %vm2259 = vcmp.eq.f32.partialorder %v2258, 8.507059e+37
        %v2260 = vand.u32 %v2233, 2147483648
        %v2261 = vor.u32 1.1754944e-38, %v2260
        %v2262 = vsel %vm2259, %v2261, %v2257
        %v2263 = vmul.f32 %v2227, %v2262
        %v2264 = vpack.c.bf16 %v2248, %v2248
        %v2265 = vpack.c.bf16 %v2263, %v2263
        %2266 = vrot.lane.b32.xlu0 %v1465, 44
        %v2267 = vpop.permute.xlu0 %2266
        %v2269 = vsel %vm1514, %v2264, 0
        %v2272 = vsel %vm1570, %v2267, 0
        %2274 = vmatpush.bf16.msra.mxu0 0
        %2275 = vmatpush.bf16.msra.mxu0 0
        %2276 = vmatpush.bf16.msra.mxu0 0
        %2277 = vmatpush.bf16.msra.mxu0 0
        %2278 = vmatpush.bf16.msra.mxu0 0
        %2279 = vmatpush.bf16.msra.mxu0 0
        %2280 = vmatpush.bf16.msra.mxu0 0
        %2281 = vmatpush.bf16.msra.mxu0 %v2272
        %2282 = vmatmul.bf16.gmra.mxu0 %v2269
        %v2283 = vpop.f32.mrf.mxu0
        %v2284 = vadd.f32 0.0, %v2283
        %v2285 = vpop.f32.mrf.mxu0
        %2286 = vdwg.mxu0
        %2287 = vrot.lane.b32.xlu0 %v1490, 44
        %v2288 = vpop.permute.xlu0 %2287
        %v2290 = vsel %vm1514, %v2265, 0
        %v2293 = vsel %vm1570, %v2288, 0
        %2295 = vmatpush.bf16.msra.mxu0 0
        %2296 = vmatpush.bf16.msra.mxu0 0
        %2297 = vmatpush.bf16.msra.mxu0 0
        %2298 = vmatpush.bf16.msra.mxu0 0
        %2299 = vmatpush.bf16.msra.mxu0 0
        %2300 = vmatpush.bf16.msra.mxu0 0
        %2301 = vmatpush.bf16.msra.mxu0 0
        %2302 = vmatpush.bf16.msra.mxu0 %v2293
        %2303 = vmatmul.bf16.gmra.mxu0 %v2290
        %v2304 = vpop.f32.mrf.mxu0
        %v2305 = vadd.f32 0.0, %v2304
        %v2306 = vpop.f32.mrf.mxu0
        %2307 = vdwg.mxu0
        %2308 = vrot.lane.b32.xlu0 %v1465, 104
        %v2309 = vpop.permute.xlu0 %2308
        %2310 = vrot.lane.b32.xlu0 %v1465, 72
        %v2311 = vpop.permute.xlu0 %2310
        %v2313 = vsel %vm1468, %v2309, 0
        %v2316 = vsel %vm1468, %v2311, 0
        %2318 = vmatpush.bf16.xpose.msra.mxu0 0
        %2319 = vmatpush.bf16.xpose.msra.mxu0 0
        %2320 = vmatpush.bf16.xpose.msra.mxu0 0
        %2321 = vmatpush.bf16.xpose.msra.mxu0 0
        %2322 = vmatpush.bf16.xpose.msra.mxu0 0
        %2323 = vmatpush.bf16.xpose.msra.mxu0 0
        %2324 = vmatpush.bf16.xpose.msra.mxu0 0
        %2325 = vmatpush.bf16.xpose.msra.mxu0 %v2316
        %2326 = vmatmul.bf16.gmra.mxu0 %v2313
        %v2327 = vpop.f32.mrf.mxu0
        %v2328 = vadd.f32 0.0, %v2327
        %v2329 = vpop.f32.mrf.mxu0
        %2330 = vdwg.mxu0
        %2331 = vrot.lane.b32.xlu0 %v1490, 104
        %v2332 = vpop.permute.xlu0 %2331
        %2333 = vrot.lane.b32.xlu0 %v1490, 72
        %v2334 = vpop.permute.xlu0 %2333
        %v2336 = vsel %vm1468, %v2332, 0
        %v2339 = vsel %vm1468, %v2334, 0
        %2341 = vmatpush.bf16.xpose.msra.mxu0 0
        %2342 = vmatpush.bf16.xpose.msra.mxu0 0
        %2343 = vmatpush.bf16.xpose.msra.mxu0 0
        %2344 = vmatpush.bf16.xpose.msra.mxu0 0
        %2345 = vmatpush.bf16.xpose.msra.mxu0 0
        %2346 = vmatpush.bf16.xpose.msra.mxu0 0
        %2347 = vmatpush.bf16.xpose.msra.mxu0 0
        %2348 = vmatpush.bf16.xpose.msra.mxu0 %v2339
        %2349 = vmatmul.bf16.gmra.mxu0 %v2336
        %v2350 = vpop.f32.mrf.mxu0
        %v2351 = vadd.f32 0.0, %v2350
        %v2352 = vpop.f32.mrf.mxu0
        %2353 = vdwg.mxu0
        %v2354 = vmul.f32 %v2328, 0.5
        %v2355 = vmul.f32 %v2351, 0.5
        %v2356 = vsel %vm1514, %v2354, -inf
        %2357 = vmax.xlane.f32.xlu0 %v2356
        %v2358 = vpop.xlane.xlu0 %2357
        %v2359 = vsel %vm1514, %v2355, -inf
        %2360 = vmax.xlane.f32.xlu0 %v2359
        %v2361 = vpop.xlane.xlu0 %2360
        %v2362 = vsub.f32 %v2354, %v2358
        %v2363 = vsub.f32 %v2355, %v2361
        %v2364 = vmul.f32 %v2362, 1.442695
        %v2365 = vpow.pop %v2364
        %v2366 = vmul.f32 %v2363, 1.442695
        %v2367 = vpow.pop %v2366
        %v2368 = vsel %vm1514, %v2365, 0.0
        %2369 = vadd.xlane.f32.xlu0 %v2368
        %v2370 = vpop.xlane.xlu0 %2369
        %v2371 = vsel %vm1514, %v2367, 0.0
        %2372 = vadd.xlane.f32.xlu0 %v2371
        %v2373 = vpop.xlane.xlu0 %2372
        %v2374 = vrcp.pop %v2370
        %v2375 = vmul.f32 %v2370, %v2374
        %v2376 = vsub.f32 1.0, %v2375
        %v2377 = vmul.f32 %v2374, %v2376
        %v2378 = vadd.f32 %v2374, %v2377
        %vm2379 = vweird.f32 %v2370
        %vm2380 = vweird.f32 %v2374
        %vm2381 = vmor %vm2379, %vm2380
        %v2382 = vsel %vm2381, %v2374, %v2378
        %v2383 = vand.u32 2147483647, %v2370
        %vm2384 = vcmp.eq.f32.partialorder %v2383, 8.507059e+37
        %v2385 = vand.u32 %v2370, 2147483648
        %v2386 = vor.u32 1.1754944e-38, %v2385
        %v2387 = vsel %vm2384, %v2386, %v2382
        %v2388 = vmul.f32 %v2365, %v2387
        %v2389 = vrcp.pop %v2373
        %v2390 = vmul.f32 %v2373, %v2389
        %v2391 = vsub.f32 1.0, %v2390
        %v2392 = vmul.f32 %v2389, %v2391
        %v2393 = vadd.f32 %v2389, %v2392
        %vm2394 = vweird.f32 %v2373
        %vm2395 = vweird.f32 %v2389
        %vm2396 = vmor %vm2394, %vm2395
        %v2397 = vsel %vm2396, %v2389, %v2393
        %v2398 = vand.u32 2147483647, %v2373
        %vm2399 = vcmp.eq.f32.partialorder %v2398, 8.507059e+37
        %v2400 = vand.u32 %v2373, 2147483648
        %v2401 = vor.u32 1.1754944e-38, %v2400
        %v2402 = vsel %vm2399, %v2401, %v2397
        %v2403 = vmul.f32 %v2367, %v2402
        %v2404 = vpack.c.bf16 %v2388, %v2388
        %v2405 = vpack.c.bf16 %v2403, %v2403
        %2406 = vrot.lane.b32.xlu0 %v1465, 40
        %v2407 = vpop.permute.xlu0 %2406
        %v2409 = vsel %vm1514, %v2404, 0
        %v2412 = vsel %vm1570, %v2407, 0
        %2414 = vmatpush.bf16.msra.mxu0 0
        %2415 = vmatpush.bf16.msra.mxu0 0
        %2416 = vmatpush.bf16.msra.mxu0 0
        %2417 = vmatpush.bf16.msra.mxu0 0
        %2418 = vmatpush.bf16.msra.mxu0 0
        %2419 = vmatpush.bf16.msra.mxu0 0
        %2420 = vmatpush.bf16.msra.mxu0 0
        %2421 = vmatpush.bf16.msra.mxu0 %v2412
        %2422 = vmatmul.bf16.gmra.mxu0 %v2409
        %v2423 = vpop.f32.mrf.mxu0
        %v2424 = vadd.f32 0.0, %v2423
        %v2425 = vpop.f32.mrf.mxu0
        %2426 = vdwg.mxu0
        %2427 = vrot.lane.b32.xlu0 %v1490, 40
        %v2428 = vpop.permute.xlu0 %2427
        %v2430 = vsel %vm1514, %v2405, 0
        %v2433 = vsel %vm1570, %v2428, 0
        %2435 = vmatpush.bf16.msra.mxu0 0
        %2436 = vmatpush.bf16.msra.mxu0 0
        %2437 = vmatpush.bf16.msra.mxu0 0
        %2438 = vmatpush.bf16.msra.mxu0 0
        %2439 = vmatpush.bf16.msra.mxu0 0
        %2440 = vmatpush.bf16.msra.mxu0 0
        %2441 = vmatpush.bf16.msra.mxu0 0
        %2442 = vmatpush.bf16.msra.mxu0 %v2433
        %2443 = vmatmul.bf16.gmra.mxu0 %v2430
        %v2444 = vpop.f32.mrf.mxu0
        %v2445 = vadd.f32 0.0, %v2444
        %v2446 = vpop.f32.mrf.mxu0
        %2447 = vdwg.mxu0
        %2448 = vrot.lane.b32.xlu0 %v1465, 100
        %v2449 = vpop.permute.xlu0 %2448
        %2450 = vrot.lane.b32.xlu0 %v1465, 68
        %v2451 = vpop.permute.xlu0 %2450
        %v2453 = vsel %vm1468, %v2449, 0
        %v2456 = vsel %vm1468, %v2451, 0
        %2458 = vmatpush.bf16.xpose.msra.mxu0 0
        %2459 = vmatpush.bf16.xpose.msra.mxu0 0
        %2460 = vmatpush.bf16.xpose.msra.mxu0 0
        %2461 = vmatpush.bf16.xpose.msra.mxu0 0
        %2462 = vmatpush.bf16.xpose.msra.mxu0 0
        %2463 = vmatpush.bf16.xpose.msra.mxu0 0
        %2464 = vmatpush.bf16.xpose.msra.mxu0 0
        %2465 = vmatpush.bf16.xpose.msra.mxu0 %v2456
        %2466 = vmatmul.bf16.gmra.mxu0 %v2453
        %v2467 = vpop.f32.mrf.mxu0
        %v2468 = vadd.f32 0.0, %v2467
        %v2469 = vpop.f32.mrf.mxu0
        %2470 = vdwg.mxu0
        %2471 = vrot.lane.b32.xlu0 %v1490, 100
        %v2472 = vpop.permute.xlu0 %2471
        %2473 = vrot.lane.b32.xlu0 %v1490, 68
        %v2474 = vpop.permute.xlu0 %2473
        %v2476 = vsel %vm1468, %v2472, 0
        %v2479 = vsel %vm1468, %v2474, 0
        %2481 = vmatpush.bf16.xpose.msra.mxu0 0
        %2482 = vmatpush.bf16.xpose.msra.mxu0 0
        %2483 = vmatpush.bf16.xpose.msra.mxu0 0
        %2484 = vmatpush.bf16.xpose.msra.mxu0 0
        %2485 = vmatpush.bf16.xpose.msra.mxu0 0
        %2486 = vmatpush.bf16.xpose.msra.mxu0 0
        %2487 = vmatpush.bf16.xpose.msra.mxu0 0
        %2488 = vmatpush.bf16.xpose.msra.mxu0 %v2479
        %2489 = vmatmul.bf16.gmra.mxu0 %v2476
        %v2490 = vpop.f32.mrf.mxu0
        %v2491 = vadd.f32 0.0, %v2490
        %v2492 = vpop.f32.mrf.mxu0
        %2493 = vdwg.mxu0
        %v2494 = vmul.f32 %v2468, 0.5
        %v2495 = vmul.f32 %v2491, 0.5
        %v2496 = vsel %vm1514, %v2494, -inf
        %2497 = vmax.xlane.f32.xlu0 %v2496
        %v2498 = vpop.xlane.xlu0 %2497
        %v2499 = vsel %vm1514, %v2495, -inf
        %2500 = vmax.xlane.f32.xlu0 %v2499
        %v2501 = vpop.xlane.xlu0 %2500
        %v2502 = vsub.f32 %v2494, %v2498
        %v2503 = vsub.f32 %v2495, %v2501
        %v2504 = vmul.f32 %v2502, 1.442695
        %v2505 = vpow.pop %v2504
        %v2506 = vmul.f32 %v2503, 1.442695
        %v2507 = vpow.pop %v2506
        %v2508 = vsel %vm1514, %v2505, 0.0
        %2509 = vadd.xlane.f32.xlu0 %v2508
        %v2510 = vpop.xlane.xlu0 %2509
        %v2511 = vsel %vm1514, %v2507, 0.0
        %2512 = vadd.xlane.f32.xlu0 %v2511
        %v2513 = vpop.xlane.xlu0 %2512
        %v2514 = vrcp.pop %v2510
        %v2515 = vmul.f32 %v2510, %v2514
        %v2516 = vsub.f32 1.0, %v2515
        %v2517 = vmul.f32 %v2514, %v2516
        %v2518 = vadd.f32 %v2514, %v2517
        %vm2519 = vweird.f32 %v2510
        %vm2520 = vweird.f32 %v2514
        %vm2521 = vmor %vm2519, %vm2520
        %v2522 = vsel %vm2521, %v2514, %v2518
        %v2523 = vand.u32 2147483647, %v2510
        %vm2524 = vcmp.eq.f32.partialorder %v2523, 8.507059e+37
        %v2525 = vand.u32 %v2510, 2147483648
        %v2526 = vor.u32 1.1754944e-38, %v2525
        %v2527 = vsel %vm2524, %v2526, %v2522
        %v2528 = vmul.f32 %v2505, %v2527
        %v2529 = vrcp.pop %v2513
        %v2530 = vmul.f32 %v2513, %v2529
        %v2531 = vsub.f32 1.0, %v2530
        %v2532 = vmul.f32 %v2529, %v2531
        %v2533 = vadd.f32 %v2529, %v2532
        %vm2534 = vweird.f32 %v2513
        %vm2535 = vweird.f32 %v2529
        %vm2536 = vmor %vm2534, %vm2535
        %v2537 = vsel %vm2536, %v2529, %v2533
        %v2538 = vand.u32 2147483647, %v2513
        %vm2539 = vcmp.eq.f32.partialorder %v2538, 8.507059e+37
        %v2540 = vand.u32 %v2513, 2147483648
        %v2541 = vor.u32 1.1754944e-38, %v2540
        %v2542 = vsel %vm2539, %v2541, %v2537
        %v2543 = vmul.f32 %v2507, %v2542
        %v2544 = vpack.c.bf16 %v2528, %v2528
        %v2545 = vpack.c.bf16 %v2543, %v2543
        %2546 = vrot.lane.b32.xlu0 %v1465, 36
        %v2547 = vpop.permute.xlu0 %2546
        %v2549 = vsel %vm1514, %v2544, 0
        %v2552 = vsel %vm1570, %v2547, 0
        %2554 = vmatpush.bf16.msra.mxu0 0
        %2555 = vmatpush.bf16.msra.mxu0 0
        %2556 = vmatpush.bf16.msra.mxu0 0
        %2557 = vmatpush.bf16.msra.mxu0 0
        %2558 = vmatpush.bf16.msra.mxu0 0
        %2559 = vmatpush.bf16.msra.mxu0 0
        %2560 = vmatpush.bf16.msra.mxu0 0
        %2561 = vmatpush.bf16.msra.mxu0 %v2552
        %2562 = vmatmul.bf16.gmra.mxu0 %v2549
        %v2563 = vpop.f32.mrf.mxu0
        %v2564 = vadd.f32 0.0, %v2563
        %v2565 = vpop.f32.mrf.mxu0
        %2566 = vdwg.mxu0
        %2567 = vrot.lane.b32.xlu0 %v1490, 36
        %v2568 = vpop.permute.xlu0 %2567
        %v2570 = vsel %vm1514, %v2545, 0
        %v2573 = vsel %vm1570, %v2568, 0
        %2575 = vmatpush.bf16.msra.mxu0 0
        %2576 = vmatpush.bf16.msra.mxu0 0
        %2577 = vmatpush.bf16.msra.mxu0 0
        %2578 = vmatpush.bf16.msra.mxu0 0
        %2579 = vmatpush.bf16.msra.mxu0 0
        %2580 = vmatpush.bf16.msra.mxu0 0
        %2581 = vmatpush.bf16.msra.mxu0 0
        %2582 = vmatpush.bf16.msra.mxu0 %v2573
        %2583 = vmatmul.bf16.gmra.mxu0 %v2570
        %v2584 = vpop.f32.mrf.mxu0
        %v2585 = vadd.f32 0.0, %v2584
        %v2586 = vpop.f32.mrf.mxu0
        %2587 = vdwg.mxu0
        %2590 = vrot.lane.b32.xlu0 %v1724, 4
        %v2591 = vpop.permute.xlu0 %2590
        %2592 = vrot.lane.b32.xlu0 %v1745, 4
        %v2593 = vpop.permute.xlu0 %2592
        %2598 = vrot.lane.b32.xlu0 %v1864, 8
        %v2599 = vpop.permute.xlu0 %2598
        %2600 = vrot.lane.b32.xlu0 %v1885, 8
        %v2601 = vpop.permute.xlu0 %2600
        %2606 = vrot.lane.b32.xlu0 %v2004, 12
        %v2607 = vpop.permute.xlu0 %2606
        %2608 = vrot.lane.b32.xlu0 %v2025, 12
        %v2609 = vpop.permute.xlu0 %2608
        %2614 = vrot.lane.b32.xlu0 %v2144, 16
        %v2615 = vpop.permute.xlu0 %2614
        %2616 = vrot.lane.b32.xlu0 %v2165, 16
        %v2617 = vpop.permute.xlu0 %2616
        %2622 = vrot.lane.b32.xlu0 %v2284, 20
        %v2623 = vpop.permute.xlu0 %2622
        %2624 = vrot.lane.b32.xlu0 %v2305, 20
        %v2625 = vpop.permute.xlu0 %2624
        %2630 = vrot.lane.b32.xlu0 %v2424, 24
        %v2631 = vpop.permute.xlu0 %2630
        %2632 = vrot.lane.b32.xlu0 %v2445, 24
        %v2633 = vpop.permute.xlu0 %2632
        %2638 = vrot.lane.b32.xlu0 %v2564, 28
        %v2639 = vpop.permute.xlu0 %2638
        %2640 = vrot.lane.b32.xlu0 %v2585, 28
        %v2641 = vpop.permute.xlu0 %2640
        %v2644 = vsel %vm1468, %v1584, %v2591
        %v2645 = vsel %vm1468, %v1605, %v2593
        %v2646 = vsel %vm1514, %v2644, %v2599
        %v2647 = vsel %vm1514, %v2645, %v2601
        %vm2648 = vcmask 97280
        %v2649 = vsel %vm2648, %v2646, %v2607
        %v2650 = vsel %vm2648, %v2647, %v2609
        %vm2651 = vcmask 130048
        %v2652 = vsel %vm2651, %v2649, %v2615
        %v2653 = vsel %vm2651, %v2650, %v2617
        %vm2654 = vcmask 162816
        %v2655 = vsel %vm2654, %v2652, %v2623
        %v2656 = vsel %vm2654, %v2653, %v2625
        %vm2657 = vcmask 195584
        %v2658 = vsel %vm2657, %v2655, %v2631
        %v2659 = vsel %vm2657, %v2656, %v2633
        %vm2660 = vcmask 228352
        %v2661 = vsel %vm2660, %v2658, %v2639
        %v2662 = vsel %vm2660, %v2659, %v2641
        %v2663 = vld [vmem:[%s1380] sm:$0xf]
        %v2664 = vld [vmem:[%s1380 + $0x4] sm:$0xf]
        %v2665 = vld [vmem:[%s1380 + $0x8] sm:$0xf]
        %v2666 = vld [vmem:[%s1380 + $0xc] sm:$0xf]
        %v2667 = vld [vmem:[%s1111] sm:$0x1]
        %v2668 = vpack.c.bf16 %v2662, %v2661
        %v2670 = vperm.slane %v2667, 0
        %v2676 = vunpack.c.l.b16 %v2663
        %v2677 = vunpack.c.l.b16 %v2664
        %v2678 = vunpack.c.l.b16 %v2665
        %v2679 = vunpack.c.l.b16 %v2666
        %v2680 = vpack.c.b16 %v2677, %v2676
        %v2681 = vpack.c.b16 %v2679, %v2678
        %v2685 = vsel %vm1443, %v2668, 0
        %2687 = vmatpush.bf16.msra.mxu0 0
        %2688 = vmatpush.bf16.msra.mxu0 0
        %2689 = vmatpush.bf16.msra.mxu0 0
        %2690 = vmatpush.bf16.msra.mxu0 0
        %2691 = vmatpush.bf16.msra.mxu0 0
        %2692 = vmatpush.bf16.msra.mxu0 0
        %2693 = vmatpush.bf16.msra.mxu0 %v2681
        %2694 = vmatpush.bf16.msra.mxu0 %v2680
        %2695 = vmatmul.bf16.gmra.mxu0 %v2685
        %v2696 = vpop.f32.mrf.mxu0
        %v2697 = vadd.f32 %v2670, %v2696
        %v2698 = vpop.f32.mrf.mxu0
        %v2699 = vadd.f32 %v2670, %v2698
        %2700 = vdwg.mxu0
        %v2701 = vadd.f32 %v1416, %v2697
        %v2702 = vadd.f32 %v1417, %v2699
        %v2703 = vld [vmem:[%s1175] sm:$0x1]
        %v2704 = vld [vmem:[%s1184] sm:$0x1]
        %v2705 = vsel %vm1443, %v2701, 0.0
        %2706 = vadd.xlane.f32.xlu0 %v2705
        %v2707 = vpop.xlane.xlu0 %2706
        %v2708 = vsel %vm1443, %v2702, 0.0
        %2709 = vadd.xlane.f32.xlu0 %v2708
        %v2710 = vpop.xlane.xlu0 %2709
        %v2711 = vrcp.pop 32.0
        %v2712 = vmul.f32 32.0, %v2711
        %v2713 = vsub.f32 1.0, %v2712
        %v2714 = vmul.f32 %v2711, %v2713
        %v2715 = vadd.f32 %v2711, %v2714
        %vm2716 = vweird.f32 %v2711
        %v2717 = vsel %vm2716, %v2711, %v2715
        %v2718 = vmul.f32 %v2707, %v2717
        %v2719 = vmul.f32 %v2710, %v2717
        %v2720 = vsub.f32 %v2701, %v2718
        %v2721 = vsub.f32 %v2702, %v2719
        %v2722 = vmul.f32 %v2720, %v2720
        %v2723 = vmul.f32 %v2721, %v2721
        %v2724 = vsel %vm1443, %v2722, 0.0
        %2725 = vadd.xlane.f32.xlu0 %v2724
        %v2726 = vpop.xlane.xlu0 %2725
        %v2727 = vsel %vm1443, %v2723, 0.0
        %2728 = vadd.xlane.f32.xlu0 %v2727
        %v2729 = vpop.xlane.xlu0 %2728
        %v2730 = vmul.f32 %v2726, %v2717
        %v2731 = vmul.f32 %v2729, %v2717
        %v2732 = vadd.f32 %v2730, 1e-05
        %v2733 = vadd.f32 %v2731, 1e-05
        %v2734 = vrsqrt.pop %v2732
        %v2735 = vmul.f32 %v2734, %v2732
        %v2736 = vmul.f32 %v2735, %v2734
        %v2737 = vmul.f32 0.5, %v2736
        %v2738 = vsub.f32 1.5, %v2737
        %v2739 = vmul.f32 %v2734, %v2738
        %vm2740 = vweird.f32 %v2732
        %vm2741 = vweird.f32 %v2734
        %vm2742 = vmor %vm2740, %vm2741
        %v2743 = vsel %vm2742, %v2734, %v2739
        %v2744 = vrsqrt.pop %v2733
        %v2745 = vmul.f32 %v2744, %v2733
        %v2746 = vmul.f32 %v2745, %v2744
        %v2747 = vmul.f32 0.5, %v2746
        %v2748 = vsub.f32 1.5, %v2747
        %v2749 = vmul.f32 %v2744, %v2748
        %vm2750 = vweird.f32 %v2733
        %vm2751 = vweird.f32 %v2744
        %vm2752 = vmor %vm2750, %vm2751
        %v2753 = vsel %vm2752, %v2744, %v2749
        %v2754 = vmul.f32 %v2720, %v2743
        %v2755 = vmul.f32 %v2721, %v2753
        %v2757 = vperm.slane %v2703, 0
        %v2759 = vmul.f32 %v2754, %v2757
        %v2760 = vmul.f32 %v2755, %v2757
        %v2762 = vperm.slane %v2704, 0
        %v2764 = vadd.f32 %v2759, %v2762
        %v2765 = vadd.f32 %v2760, %v2762
        %v2766 = vld [vmem:[%s1385] sm:$0xf]
        %v2767 = vld [vmem:[%s1385 + $0x4] sm:$0xf]
        %v2768 = vld [vmem:[%s1385 + $0x8] sm:$0xf]
        %v2769 = vld [vmem:[%s1385 + $0xc] sm:$0xf]
        %v2770 = vld [vmem:[%s1120] sm:$0x1]
        %v2771 = vpack.c.bf16 %v2765, %v2764
        %v2773 = vperm.slane %v2770, 0
        %v2779 = vunpack.c.l.b16 %v2766
        %v2780 = vunpack.c.l.b16 %v2767
        %v2781 = vunpack.c.l.b16 %v2768
        %v2782 = vunpack.c.l.b16 %v2769
        %v2783 = vpack.c.b16 %v2780, %v2779
        %v2784 = vpack.c.b16 %v2782, %v2781
        %v2788 = vsel %vm1443, %v2771, 0
        %2790 = vmatpush.bf16.msra.mxu0 0
        %2791 = vmatpush.bf16.msra.mxu0 0
        %2792 = vmatpush.bf16.msra.mxu0 0
        %2793 = vmatpush.bf16.msra.mxu0 0
        %2794 = vmatpush.bf16.msra.mxu0 0
        %2795 = vmatpush.bf16.msra.mxu0 0
        %2796 = vmatpush.bf16.msra.mxu0 %v2784
        %2797 = vmatpush.bf16.msra.mxu0 %v2783
        %2798 = vmatmul.bf16.gmra.mxu0 %v2788
        %v2799 = vpop.f32.mrf.mxu0
        %v2800 = vadd.f32 %v2773, %v2799
        %v2801 = vpop.f32.mrf.mxu0
        %v2802 = vadd.f32 %v2773, %v2801
        %2803 = vdwg.mxu0
        %v2804 = vld [vmem:[%s1390] sm:$0xf]
        %v2805 = vld [vmem:[%s1390 + $0x4] sm:$0xf]
        %v2806 = vld [vmem:[%s1390 + $0x8] sm:$0xf]
        %v2807 = vld [vmem:[%s1390 + $0xc] sm:$0xf]
        %v2808 = vld [vmem:[%s1129] sm:$0x1]
        %v2810 = vperm.slane %v2808, 0
        %v2816 = vunpack.c.l.b16 %v1418
        %v2817 = vunpack.c.l.b16 %v1419
        %v2818 = vunpack.c.l.b16 %v1420
        %v2819 = vunpack.c.l.b16 %v1421
        %v2820 = vpack.c.b16 %v2817, %v2816
        %v2821 = vpack.c.b16 %v2819, %v2818
        %v2826 = vunpack.c.l.b16 %v2804
        %v2827 = vunpack.c.l.b16 %v2805
        %v2828 = vunpack.c.l.b16 %v2806
        %v2829 = vunpack.c.l.b16 %v2807
        %v2830 = vpack.c.b16 %v2827, %v2826
        %v2831 = vpack.c.b16 %v2829, %v2828
        %v2835 = vsel %vm1443, %v2820, 0
        %v2838 = vsel %vm1443, %v2821, 0
        %2840 = vmatpush.bf16.msra.mxu0 0
        %2841 = vmatpush.bf16.msra.mxu0 0
        %2842 = vmatpush.bf16.msra.mxu0 0
        %2843 = vmatpush.bf16.msra.mxu0 0
        %2844 = vmatpush.bf16.msra.mxu0 0
        %2845 = vmatpush.bf16.msra.mxu0 0
        %2846 = vmatpush.bf16.msra.mxu0 %v2831
        %2847 = vmatpush.bf16.msra.mxu0 %v2830
        %2848 = vmatmul.bf16.gmra.mxu0 %v2835
        %v2849 = vpop.f32.mrf.mxu0
        %v2850 = vadd.f32 %v2810, %v2849
        %v2851 = vpop.f32.mrf.mxu0
        %v2852 = vadd.f32 %v2810, %v2851
        %2853 = vmatmul.bf16.gmra.mxu0 %v2838
        %v2854 = vpop.f32.mrf.mxu0
        %v2855 = vadd.f32 %v2810, %v2854
        %v2856 = vpop.f32.mrf.mxu0
        %v2857 = vadd.f32 %v2810, %v2856
        %2858 = vdwg.mxu0
        %v2859 = vpack.c.bf16 %v2800, %v2800
        %v2860 = vpack.c.bf16 %v2802, %v2802
        %v2861 = vpack.c.bf16 %v2850, %v2850
        %v2862 = vpack.c.bf16 %v2852, %v2852
        %v2863 = vpack.c.bf16 %v2855, %v2855
        %v2864 = vpack.c.bf16 %v2857, %v2857
        %v2867 = vunpack.c.l.b16 %v2861
        %v2868 = vunpack.c.l.b16 %v2862
        %v2869 = vpack.c.b16 %v2868, %v2867
        %v2871 = vsel %vm1468, %v2859, 0
        %v2874 = vsel %vm1468, %v2869, 0
        %2876 = vmatpush.bf16.xpose.msra.mxu0 0
        %2877 = vmatpush.bf16.xpose.msra.mxu0 0
        %2878 = vmatpush.bf16.xpose.msra.mxu0 0
        %2879 = vmatpush.bf16.xpose.msra.mxu0 0
        %2880 = vmatpush.bf16.xpose.msra.mxu0 0
        %2881 = vmatpush.bf16.xpose.msra.mxu0 0
        %2882 = vmatpush.bf16.xpose.msra.mxu0 0
        %2883 = vmatpush.bf16.xpose.msra.mxu0 %v2874
        %2884 = vmatmul.bf16.gmra.mxu0 %v2871
        %v2885 = vpop.f32.mrf.mxu0
        %v2886 = vadd.f32 0.0, %v2885
        %v2887 = vpop.f32.mrf.mxu0
        %2888 = vdwg.mxu0
        %v2891 = vunpack.c.l.b16 %v2863
        %v2892 = vunpack.c.l.b16 %v2864
        %v2893 = vpack.c.b16 %v2892, %v2891
        %v2895 = vsel %vm1468, %v2860, 0
        %v2898 = vsel %vm1468, %v2893, 0
        %2900 = vmatpush.bf16.xpose.msra.mxu0 0
        %2901 = vmatpush.bf16.xpose.msra.mxu0 0
        %2902 = vmatpush.bf16.xpose.msra.mxu0 0
        %2903 = vmatpush.bf16.xpose.msra.mxu0 0
        %2904 = vmatpush.bf16.xpose.msra.mxu0 0
        %2905 = vmatpush.bf16.xpose.msra.mxu0 0
        %2906 = vmatpush.bf16.xpose.msra.mxu0 0
        %2907 = vmatpush.bf16.xpose.msra.mxu0 %v2898
        %2908 = vmatmul.bf16.gmra.mxu0 %v2895
        %v2909 = vpop.f32.mrf.mxu0
        %v2910 = vadd.f32 0.0, %v2909
        %v2911 = vpop.f32.mrf.mxu0
        %2912 = vdwg.mxu0
        %v2913 = vmul.f32 %v2886, 0.5
        %v2914 = vmul.f32 %v2910, 0.5
        %v2915 = vsel %vm2651, %v2913, -inf
        %2916 = vmax.xlane.f32.xlu0 %v2915
        %v2917 = vpop.xlane.xlu0 %2916
        %v2918 = vsel %vm2651, %v2914, -inf
        %2919 = vmax.xlane.f32.xlu0 %v2918
        %v2920 = vpop.xlane.xlu0 %2919
        %v2921 = vsub.f32 %v2913, %v2917
        %v2922 = vsub.f32 %v2914, %v2920
        %v2923 = vmul.f32 %v2921, 1.442695
        %v2924 = vpow.pop %v2923
        %v2925 = vmul.f32 %v2922, 1.442695
        %v2926 = vpow.pop %v2925
        %v2927 = vsel %vm2651, %v2924, 0.0
        %2928 = vadd.xlane.f32.xlu0 %v2927
        %v2929 = vpop.xlane.xlu0 %2928
        %v2930 = vsel %vm2651, %v2926, 0.0
        %2931 = vadd.xlane.f32.xlu0 %v2930
        %v2932 = vpop.xlane.xlu0 %2931
        %v2933 = vrcp.pop %v2929
        %v2934 = vmul.f32 %v2929, %v2933
        %v2935 = vsub.f32 1.0, %v2934
        %v2936 = vmul.f32 %v2933, %v2935
        %v2937 = vadd.f32 %v2933, %v2936
        %vm2938 = vweird.f32 %v2929
        %vm2939 = vweird.f32 %v2933
        %vm2940 = vmor %vm2938, %vm2939
        %v2941 = vsel %vm2940, %v2933, %v2937
        %v2942 = vand.u32 2147483647, %v2929
        %vm2943 = vcmp.eq.f32.partialorder %v2942, 8.507059e+37
        %v2944 = vand.u32 %v2929, 2147483648
        %v2945 = vor.u32 1.1754944e-38, %v2944
        %v2946 = vsel %vm2943, %v2945, %v2941
        %v2947 = vmul.f32 %v2924, %v2946
        %v2948 = vrcp.pop %v2932
        %v2949 = vmul.f32 %v2932, %v2948
        %v2950 = vsub.f32 1.0, %v2949
        %v2951 = vmul.f32 %v2948, %v2950
        %v2952 = vadd.f32 %v2948, %v2951
        %vm2953 = vweird.f32 %v2932
        %vm2954 = vweird.f32 %v2948
        %vm2955 = vmor %vm2953, %vm2954
        %v2956 = vsel %vm2955, %v2948, %v2952
        %v2957 = vand.u32 2147483647, %v2932
        %vm2958 = vcmp.eq.f32.partialorder %v2957, 8.507059e+37
        %v2959 = vand.u32 %v2932, 2147483648
        %v2960 = vor.u32 1.1754944e-38, %v2959
        %v2961 = vsel %vm2958, %v2960, %v2956
        %v2962 = vmul.f32 %v2926, %v2961
        %v2963 = vpack.c.bf16 %v2947, %v2947
        %v2964 = vpack.c.bf16 %v2962, %v2962
        %2965 = vrot.lane.b32.xlu0 %v2869, 96
        %v2966 = vpop.permute.xlu0 %2965
        %v2969 = vsel %vm2651, %v2963, 0
        %2971 = vmatpush.bf16.msra.mxu0 0
        %2972 = vmatpush.bf16.msra.mxu0 0
        %2973 = vmatpush.bf16.msra.mxu0 0
        %2974 = vmatpush.bf16.msra.mxu0 0
        %2975 = vmatpush.bf16.msra.mxu0 0
        %2976 = vmatpush.bf16.msra.mxu0 0
        %2977 = vmatpush.bf16.msra.mxu0 0
        %2978 = vmatpush.bf16.msra.mxu0 %v2966
        %2979 = vmatmul.bf16.gmra.mxu0 %v2969
        %v2980 = vpop.f32.mrf.mxu0
        %v2981 = vadd.f32 0.0, %v2980
        %v2982 = vpop.f32.mrf.mxu0
        %2983 = vdwg.mxu0
        %2984 = vrot.lane.b32.xlu0 %v2893, 96
        %v2985 = vpop.permute.xlu0 %2984
        %v2988 = vsel %vm2651, %v2964, 0
        %2990 = vmatpush.bf16.msra.mxu0 0
        %2991 = vmatpush.bf16.msra.mxu0 0
        %2992 = vmatpush.bf16.msra.mxu0 0
        %2993 = vmatpush.bf16.msra.mxu0 0
        %2994 = vmatpush.bf16.msra.mxu0 0
        %2995 = vmatpush.bf16.msra.mxu0 0
        %2996 = vmatpush.bf16.msra.mxu0 0
        %2997 = vmatpush.bf16.msra.mxu0 %v2985
        %2998 = vmatmul.bf16.gmra.mxu0 %v2988
        %v2999 = vpop.f32.mrf.mxu0
        %v3000 = vadd.f32 0.0, %v2999
        %v3001 = vpop.f32.mrf.mxu0
        %3002 = vdwg.mxu0
        %v3004 = vunpack.c.l.b16 %v2859
        %v3005 = vpack.c.b16 %v3004, %v3004
        %3006 = vrot.lane.b32.xlu0 %v3005, 124
        %v3007 = vpop.permute.xlu0 %3006
        %3008 = vrot.lane.b32.xlu0 %v2869, 124
        %v3009 = vpop.permute.xlu0 %3008
        %v3011 = vsel %vm1468, %v3007, 0
        %v3014 = vsel %vm1468, %v3009, 0
        %3016 = vmatpush.bf16.xpose.msra.mxu0 0
        %3017 = vmatpush.bf16.xpose.msra.mxu0 0
        %3018 = vmatpush.bf16.xpose.msra.mxu0 0
        %3019 = vmatpush.bf16.xpose.msra.mxu0 0
        %3020 = vmatpush.bf16.xpose.msra.mxu0 0
        %3021 = vmatpush.bf16.xpose.msra.mxu0 0
        %3022 = vmatpush.bf16.xpose.msra.mxu0 0
        %3023 = vmatpush.bf16.xpose.msra.mxu0 %v3014
        %3024 = vmatmul.bf16.gmra.mxu0 %v3011
        %v3025 = vpop.f32.mrf.mxu0
        %v3026 = vadd.f32 0.0, %v3025
        %v3027 = vpop.f32.mrf.mxu0
        %3028 = vdwg.mxu0
        %v3030 = vunpack.c.l.b16 %v2860
        %v3031 = vpack.c.b16 %v3030, %v3030
        %3032 = vrot.lane.b32.xlu0 %v3031, 124
        %v3033 = vpop.permute.xlu0 %3032
        %3034 = vrot.lane.b32.xlu0 %v2893, 124
        %v3035 = vpop.permute.xlu0 %3034
        %v3037 = vsel %vm1468, %v3033, 0
        %v3040 = vsel %vm1468, %v3035, 0
        %3042 = vmatpush.bf16.xpose.msra.mxu0 0
        %3043 = vmatpush.bf16.xpose.msra.mxu0 0
        %3044 = vmatpush.bf16.xpose.msra.mxu0 0
        %3045 = vmatpush.bf16.xpose.msra.mxu0 0
        %3046 = vmatpush.bf16.xpose.msra.mxu0 0
        %3047 = vmatpush.bf16.xpose.msra.mxu0 0
        %3048 = vmatpush.bf16.xpose.msra.mxu0 0
        %3049 = vmatpush.bf16.xpose.msra.mxu0 %v3040
        %3050 = vmatmul.bf16.gmra.mxu0 %v3037
        %v3051 = vpop.f32.mrf.mxu0
        %v3052 = vadd.f32 0.0, %v3051
        %v3053 = vpop.f32.mrf.mxu0
        %3054 = vdwg.mxu0
        %v3055 = vmul.f32 %v3026, 0.5
        %v3056 = vmul.f32 %v3052, 0.5
        %v3057 = vsel %vm2651, %v3055, -inf
        %3058 = vmax.xlane.f32.xlu0 %v3057
        %v3059 = vpop.xlane.xlu0 %3058
        %v3060 = vsel %vm2651, %v3056, -inf
        %3061 = vmax.xlane.f32.xlu0 %v3060
        %v3062 = vpop.xlane.xlu0 %3061
        %v3063 = vsub.f32 %v3055, %v3059
        %v3064 = vsub.f32 %v3056, %v3062
        %v3065 = vmul.f32 %v3063, 1.442695
        %v3066 = vpow.pop %v3065
        %v3067 = vmul.f32 %v3064, 1.442695
        %v3068 = vpow.pop %v3067
        %v3069 = vsel %vm2651, %v3066, 0.0
        %3070 = vadd.xlane.f32.xlu0 %v3069
        %v3071 = vpop.xlane.xlu0 %3070
        %v3072 = vsel %vm2651, %v3068, 0.0
        %3073 = vadd.xlane.f32.xlu0 %v3072
        %v3074 = vpop.xlane.xlu0 %3073
        %v3075 = vrcp.pop %v3071
        %v3076 = vmul.f32 %v3071, %v3075
        %v3077 = vsub.f32 1.0, %v3076
        %v3078 = vmul.f32 %v3075, %v3077
        %v3079 = vadd.f32 %v3075, %v3078
        %vm3080 = vweird.f32 %v3071
        %vm3081 = vweird.f32 %v3075
        %vm3082 = vmor %vm3080, %vm3081
        %v3083 = vsel %vm3082, %v3075, %v3079
        %v3084 = vand.u32 2147483647, %v3071
        %vm3085 = vcmp.eq.f32.partialorder %v3084, 8.507059e+37
        %v3086 = vand.u32 %v3071, 2147483648
        %v3087 = vor.u32 1.1754944e-38, %v3086
        %v3088 = vsel %vm3085, %v3087, %v3083
        %v3089 = vmul.f32 %v3066, %v3088
        %v3090 = vrcp.pop %v3074
        %v3091 = vmul.f32 %v3074, %v3090
        %v3092 = vsub.f32 1.0, %v3091
        %v3093 = vmul.f32 %v3090, %v3092
        %v3094 = vadd.f32 %v3090, %v3093
        %vm3095 = vweird.f32 %v3074
        %vm3096 = vweird.f32 %v3090
        %vm3097 = vmor %vm3095, %vm3096
        %v3098 = vsel %vm3097, %v3090, %v3094
        %v3099 = vand.u32 2147483647, %v3074
        %vm3100 = vcmp.eq.f32.partialorder %v3099, 8.507059e+37
        %v3101 = vand.u32 %v3074, 2147483648
        %v3102 = vor.u32 1.1754944e-38, %v3101
        %v3103 = vsel %vm3100, %v3102, %v3098
        %v3104 = vmul.f32 %v3068, %v3103
        %v3105 = vpack.c.bf16 %v3089, %v3089
        %v3106 = vpack.c.bf16 %v3104, %v3104
        %3107 = vrot.lane.b32.xlu0 %v2869, 92
        %v3108 = vpop.permute.xlu0 %3107
        %v3111 = vsel %vm2651, %v3105, 0
        %3113 = vmatpush.bf16.msra.mxu0 0
        %3114 = vmatpush.bf16.msra.mxu0 0
        %3115 = vmatpush.bf16.msra.mxu0 0
        %3116 = vmatpush.bf16.msra.mxu0 0
        %3117 = vmatpush.bf16.msra.mxu0 0
        %3118 = vmatpush.bf16.msra.mxu0 0
        %3119 = vmatpush.bf16.msra.mxu0 0
        %3120 = vmatpush.bf16.msra.mxu0 %v3108
        %3121 = vmatmul.bf16.gmra.mxu0 %v3111
        %v3122 = vpop.f32.mrf.mxu0
        %v3123 = vadd.f32 0.0, %v3122
        %v3124 = vpop.f32.mrf.mxu0
        %3125 = vdwg.mxu0
        %3126 = vrot.lane.b32.xlu0 %v2893, 92
        %v3127 = vpop.permute.xlu0 %3126
        %v3130 = vsel %vm2651, %v3106, 0
        %3132 = vmatpush.bf16.msra.mxu0 0
        %3133 = vmatpush.bf16.msra.mxu0 0
        %3134 = vmatpush.bf16.msra.mxu0 0
        %3135 = vmatpush.bf16.msra.mxu0 0
        %3136 = vmatpush.bf16.msra.mxu0 0
        %3137 = vmatpush.bf16.msra.mxu0 0
        %3138 = vmatpush.bf16.msra.mxu0 0
        %3139 = vmatpush.bf16.msra.mxu0 %v3127
        %3140 = vmatmul.bf16.gmra.mxu0 %v3130
        %v3141 = vpop.f32.mrf.mxu0
        %v3142 = vadd.f32 0.0, %v3141
        %v3143 = vpop.f32.mrf.mxu0
        %3144 = vdwg.mxu0
        %3145 = vrot.lane.b32.xlu0 %v3005, 120
        %v3146 = vpop.permute.xlu0 %3145
        %3147 = vrot.lane.b32.xlu0 %v2869, 120
        %v3148 = vpop.permute.xlu0 %3147
        %v3150 = vsel %vm1468, %v3146, 0
        %v3153 = vsel %vm1468, %v3148, 0
        %3155 = vmatpush.bf16.xpose.msra.mxu0 0
        %3156 = vmatpush.bf16.xpose.msra.mxu0 0
        %3157 = vmatpush.bf16.xpose.msra.mxu0 0
        %3158 = vmatpush.bf16.xpose.msra.mxu0 0
        %3159 = vmatpush.bf16.xpose.msra.mxu0 0
        %3160 = vmatpush.bf16.xpose.msra.mxu0 0
        %3161 = vmatpush.bf16.xpose.msra.mxu0 0
        %3162 = vmatpush.bf16.xpose.msra.mxu0 %v3153
        %3163 = vmatmul.bf16.gmra.mxu0 %v3150
        %v3164 = vpop.f32.mrf.mxu0
        %v3165 = vadd.f32 0.0, %v3164
        %v3166 = vpop.f32.mrf.mxu0
        %3167 = vdwg.mxu0
        %3168 = vrot.lane.b32.xlu0 %v3031, 120
        %v3169 = vpop.permute.xlu0 %3168
        %3170 = vrot.lane.b32.xlu0 %v2893, 120
        %v3171 = vpop.permute.xlu0 %3170
        %v3173 = vsel %vm1468, %v3169, 0
        %v3176 = vsel %vm1468, %v3171, 0
        %3178 = vmatpush.bf16.xpose.msra.mxu0 0
        %3179 = vmatpush.bf16.xpose.msra.mxu0 0
        %3180 = vmatpush.bf16.xpose.msra.mxu0 0
        %3181 = vmatpush.bf16.xpose.msra.mxu0 0
        %3182 = vmatpush.bf16.xpose.msra.mxu0 0
        %3183 = vmatpush.bf16.xpose.msra.mxu0 0
        %3184 = vmatpush.bf16.xpose.msra.mxu0 0
        %3185 = vmatpush.bf16.xpose.msra.mxu0 %v3176
        %3186 = vmatmul.bf16.gmra.mxu0 %v3173
        %v3187 = vpop.f32.mrf.mxu0
        %v3188 = vadd.f32 0.0, %v3187
        %v3189 = vpop.f32.mrf.mxu0
        %3190 = vdwg.mxu0
        %v3191 = vmul.f32 %v3165, 0.5
        %v3192 = vmul.f32 %v3188, 0.5
        %v3193 = vsel %vm2651, %v3191, -inf
        %3194 = vmax.xlane.f32.xlu0 %v3193
        %v3195 = vpop.xlane.xlu0 %3194
        %v3196 = vsel %vm2651, %v3192, -inf
        %3197 = vmax.xlane.f32.xlu0 %v3196
        %v3198 = vpop.xlane.xlu0 %3197
        %v3199 = vsub.f32 %v3191, %v3195
        %v3200 = vsub.f32 %v3192, %v3198
        %v3201 = vmul.f32 %v3199, 1.442695
        %v3202 = vpow.pop %v3201
        %v3203 = vmul.f32 %v3200, 1.442695
        %v3204 = vpow.pop %v3203
        %v3205 = vsel %vm2651, %v3202, 0.0
        %3206 = vadd.xlane.f32.xlu0 %v3205
        %v3207 = vpop.xlane.xlu0 %3206
        %v3208 = vsel %vm2651, %v3204, 0.0
        %3209 = vadd.xlane.f32.xlu0 %v3208
        %v3210 = vpop.xlane.xlu0 %3209
        %v3211 = vrcp.pop %v3207
        %v3212 = vmul.f32 %v3207, %v3211
        %v3213 = vsub.f32 1.0, %v3212
        %v3214 = vmul.f32 %v3211, %v3213
        %v3215 = vadd.f32 %v3211, %v3214
        %vm3216 = vweird.f32 %v3207
        %vm3217 = vweird.f32 %v3211
        %vm3218 = vmor %vm3216, %vm3217
        %v3219 = vsel %vm3218, %v3211, %v3215
        %v3220 = vand.u32 2147483647, %v3207
        %vm3221 = vcmp.eq.f32.partialorder %v3220, 8.507059e+37
        %v3222 = vand.u32 %v3207, 2147483648
        %v3223 = vor.u32 1.1754944e-38, %v3222
        %v3224 = vsel %vm3221, %v3223, %v3219
        %v3225 = vmul.f32 %v3202, %v3224
        %v3226 = vrcp.pop %v3210
        %v3227 = vmul.f32 %v3210, %v3226
        %v3228 = vsub.f32 1.0, %v3227
        %v3229 = vmul.f32 %v3226, %v3228
        %v3230 = vadd.f32 %v3226, %v3229
        %vm3231 = vweird.f32 %v3210
        %vm3232 = vweird.f32 %v3226
        %vm3233 = vmor %vm3231, %vm3232
        %v3234 = vsel %vm3233, %v3226, %v3230
        %v3235 = vand.u32 2147483647, %v3210
        %vm3236 = vcmp.eq.f32.partialorder %v3235, 8.507059e+37
        %v3237 = vand.u32 %v3210, 2147483648
        %v3238 = vor.u32 1.1754944e-38, %v3237
        %v3239 = vsel %vm3236, %v3238, %v3234
        %v3240 = vmul.f32 %v3204, %v3239
        %v3241 = vpack.c.bf16 %v3225, %v3225
        %v3242 = vpack.c.bf16 %v3240, %v3240
        %3243 = vrot.lane.b32.xlu0 %v2869, 88
        %v3244 = vpop.permute.xlu0 %3243
        %v3247 = vsel %vm2651, %v3241, 0
        %3249 = vmatpush.bf16.msra.mxu0 0
        %3250 = vmatpush.bf16.msra.mxu0 0
        %3251 = vmatpush.bf16.msra.mxu0 0
        %3252 = vmatpush.bf16.msra.mxu0 0
        %3253 = vmatpush.bf16.msra.mxu0 0
        %3254 = vmatpush.bf16.msra.mxu0 0
        %3255 = vmatpush.bf16.msra.mxu0 0
        %3256 = vmatpush.bf16.msra.mxu0 %v3244
        %3257 = vmatmul.bf16.gmra.mxu0 %v3247
        %v3258 = vpop.f32.mrf.mxu0
        %v3259 = vadd.f32 0.0, %v3258
        %v3260 = vpop.f32.mrf.mxu0
        %3261 = vdwg.mxu0
        %3262 = vrot.lane.b32.xlu0 %v2893, 88
        %v3263 = vpop.permute.xlu0 %3262
        %v3266 = vsel %vm2651, %v3242, 0
        %3268 = vmatpush.bf16.msra.mxu0 0
        %3269 = vmatpush.bf16.msra.mxu0 0
        %3270 = vmatpush.bf16.msra.mxu0 0
        %3271 = vmatpush.bf16.msra.mxu0 0
        %3272 = vmatpush.bf16.msra.mxu0 0
        %3273 = vmatpush.bf16.msra.mxu0 0
        %3274 = vmatpush.bf16.msra.mxu0 0
        %3275 = vmatpush.bf16.msra.mxu0 %v3263
        %3276 = vmatmul.bf16.gmra.mxu0 %v3266
        %v3277 = vpop.f32.mrf.mxu0
        %v3278 = vadd.f32 0.0, %v3277
        %v3279 = vpop.f32.mrf.mxu0
        %3280 = vdwg.mxu0
        %3281 = vrot.lane.b32.xlu0 %v3005, 116
        %v3282 = vpop.permute.xlu0 %3281
        %3283 = vrot.lane.b32.xlu0 %v2869, 116
        %v3284 = vpop.permute.xlu0 %3283
        %v3286 = vsel %vm1468, %v3282, 0
        %v3289 = vsel %vm1468, %v3284, 0
        %3291 = vmatpush.bf16.xpose.msra.mxu0 0
        %3292 = vmatpush.bf16.xpose.msra.mxu0 0
        %3293 = vmatpush.bf16.xpose.msra.mxu0 0
        %3294 = vmatpush.bf16.xpose.msra.mxu0 0
        %3295 = vmatpush.bf16.xpose.msra.mxu0 0
        %3296 = vmatpush.bf16.xpose.msra.mxu0 0
        %3297 = vmatpush.bf16.xpose.msra.mxu0 0
        %3298 = vmatpush.bf16.xpose.msra.mxu0 %v3289
        %3299 = vmatmul.bf16.gmra.mxu0 %v3286
        %v3300 = vpop.f32.mrf.mxu0
        %v3301 = vadd.f32 0.0, %v3300
        %v3302 = vpop.f32.mrf.mxu0
        %3303 = vdwg.mxu0
        %3304 = vrot.lane.b32.xlu0 %v3031, 116
        %v3305 = vpop.permute.xlu0 %3304
        %3306 = vrot.lane.b32.xlu0 %v2893, 116
        %v3307 = vpop.permute.xlu0 %3306
        %v3309 = vsel %vm1468, %v3305, 0
        %v3312 = vsel %vm1468, %v3307, 0
        %3314 = vmatpush.bf16.xpose.msra.mxu0 0
        %3315 = vmatpush.bf16.xpose.msra.mxu0 0
        %3316 = vmatpush.bf16.xpose.msra.mxu0 0
        %3317 = vmatpush.bf16.xpose.msra.mxu0 0
        %3318 = vmatpush.bf16.xpose.msra.mxu0 0
        %3319 = vmatpush.bf16.xpose.msra.mxu0 0
        %3320 = vmatpush.bf16.xpose.msra.mxu0 0
        %3321 = vmatpush.bf16.xpose.msra.mxu0 %v3312
        %3322 = vmatmul.bf16.gmra.mxu0 %v3309
        %v3323 = vpop.f32.mrf.mxu0
        %v3324 = vadd.f32 0.0, %v3323
        %v3325 = vpop.f32.mrf.mxu0
        %3326 = vdwg.mxu0
        %v3327 = vmul.f32 %v3301, 0.5
        %v3328 = vmul.f32 %v3324, 0.5
        %v3329 = vsel %vm2651, %v3327, -inf
        %3330 = vmax.xlane.f32.xlu0 %v3329
        %v3331 = vpop.xlane.xlu0 %3330
        %v3332 = vsel %vm2651, %v3328, -inf
        %3333 = vmax.xlane.f32.xlu0 %v3332
        %v3334 = vpop.xlane.xlu0 %3333
        %v3335 = vsub.f32 %v3327, %v3331
        %v3336 = vsub.f32 %v3328, %v3334
        %v3337 = vmul.f32 %v3335, 1.442695
        %v3338 = vpow.pop %v3337
        %v3339 = vmul.f32 %v3336, 1.442695
        %v3340 = vpow.pop %v3339
        %v3341 = vsel %vm2651, %v3338, 0.0
        %3342 = vadd.xlane.f32.xlu0 %v3341
        %v3343 = vpop.xlane.xlu0 %3342
        %v3344 = vsel %vm2651, %v3340, 0.0
        %3345 = vadd.xlane.f32.xlu0 %v3344
        %v3346 = vpop.xlane.xlu0 %3345
        %v3347 = vrcp.pop %v3343
        %v3348 = vmul.f32 %v3343, %v3347
        %v3349 = vsub.f32 1.0, %v3348
        %v3350 = vmul.f32 %v3347, %v3349
        %v3351 = vadd.f32 %v3347, %v3350
        %vm3352 = vweird.f32 %v3343
        %vm3353 = vweird.f32 %v3347
        %vm3354 = vmor %vm3352, %vm3353
        %v3355 = vsel %vm3354, %v3347, %v3351
        %v3356 = vand.u32 2147483647, %v3343
        %vm3357 = vcmp.eq.f32.partialorder %v3356, 8.507059e+37
        %v3358 = vand.u32 %v3343, 2147483648
        %v3359 = vor.u32 1.1754944e-38, %v3358
        %v3360 = vsel %vm3357, %v3359, %v3355
        %v3361 = vmul.f32 %v3338, %v3360
        %v3362 = vrcp.pop %v3346
        %v3363 = vmul.f32 %v3346, %v3362
        %v3364 = vsub.f32 1.0, %v3363
        %v3365 = vmul.f32 %v3362, %v3364
        %v3366 = vadd.f32 %v3362, %v3365
        %vm3367 = vweird.f32 %v3346
        %vm3368 = vweird.f32 %v3362
        %vm3369 = vmor %vm3367, %vm3368
        %v3370 = vsel %vm3369, %v3362, %v3366
        %v3371 = vand.u32 2147483647, %v3346
        %vm3372 = vcmp.eq.f32.partialorder %v3371, 8.507059e+37
        %v3373 = vand.u32 %v3346, 2147483648
        %v3374 = vor.u32 1.1754944e-38, %v3373
        %v3375 = vsel %vm3372, %v3374, %v3370
        %v3376 = vmul.f32 %v3340, %v3375
        %v3377 = vpack.c.bf16 %v3361, %v3361
        %v3378 = vpack.c.bf16 %v3376, %v3376
        %3379 = vrot.lane.b32.xlu0 %v2869, 84
        %v3380 = vpop.permute.xlu0 %3379
        %v3383 = vsel %vm2651, %v3377, 0
        %3385 = vmatpush.bf16.msra.mxu0 0
        %3386 = vmatpush.bf16.msra.mxu0 0
        %3387 = vmatpush.bf16.msra.mxu0 0
        %3388 = vmatpush.bf16.msra.mxu0 0
        %3389 = vmatpush.bf16.msra.mxu0 0
        %3390 = vmatpush.bf16.msra.mxu0 0
        %3391 = vmatpush.bf16.msra.mxu0 0
        %3392 = vmatpush.bf16.msra.mxu0 %v3380
        %3393 = vmatmul.bf16.gmra.mxu0 %v3383
        %v3394 = vpop.f32.mrf.mxu0
        %v3395 = vadd.f32 0.0, %v3394
        %v3396 = vpop.f32.mrf.mxu0
        %3397 = vdwg.mxu0
        %3398 = vrot.lane.b32.xlu0 %v2893, 84
        %v3399 = vpop.permute.xlu0 %3398
        %v3402 = vsel %vm2651, %v3378, 0
        %3404 = vmatpush.bf16.msra.mxu0 0
        %3405 = vmatpush.bf16.msra.mxu0 0
        %3406 = vmatpush.bf16.msra.mxu0 0
        %3407 = vmatpush.bf16.msra.mxu0 0
        %3408 = vmatpush.bf16.msra.mxu0 0
        %3409 = vmatpush.bf16.msra.mxu0 0
        %3410 = vmatpush.bf16.msra.mxu0 0
        %3411 = vmatpush.bf16.msra.mxu0 %v3399
        %3412 = vmatmul.bf16.gmra.mxu0 %v3402
        %v3413 = vpop.f32.mrf.mxu0
        %v3414 = vadd.f32 0.0, %v3413
        %v3415 = vpop.f32.mrf.mxu0
        %3416 = vdwg.mxu0
        %3417 = vrot.lane.b32.xlu0 %v3005, 112
        %v3418 = vpop.permute.xlu0 %3417
        %3419 = vrot.lane.b32.xlu0 %v2869, 112
        %v3420 = vpop.permute.xlu0 %3419
        %v3422 = vsel %vm1468, %v3418, 0
        %v3425 = vsel %vm1468, %v3420, 0
        %3427 = vmatpush.bf16.xpose.msra.mxu0 0
        %3428 = vmatpush.bf16.xpose.msra.mxu0 0
        %3429 = vmatpush.bf16.xpose.msra.mxu0 0
        %3430 = vmatpush.bf16.xpose.msra.mxu0 0
        %3431 = vmatpush.bf16.xpose.msra.mxu0 0
        %3432 = vmatpush.bf16.xpose.msra.mxu0 0
        %3433 = vmatpush.bf16.xpose.msra.mxu0 0
        %3434 = vmatpush.bf16.xpose.msra.mxu0 %v3425
        %3435 = vmatmul.bf16.gmra.mxu0 %v3422
        %v3436 = vpop.f32.mrf.mxu0
        %v3437 = vadd.f32 0.0, %v3436
        %v3438 = vpop.f32.mrf.mxu0
        %3439 = vdwg.mxu0
        %3440 = vrot.lane.b32.xlu0 %v3031, 112
        %v3441 = vpop.permute.xlu0 %3440
        %3442 = vrot.lane.b32.xlu0 %v2893, 112
        %v3443 = vpop.permute.xlu0 %3442
        %v3445 = vsel %vm1468, %v3441, 0
        %v3448 = vsel %vm1468, %v3443, 0
        %3450 = vmatpush.bf16.xpose.msra.mxu0 0
        %3451 = vmatpush.bf16.xpose.msra.mxu0 0
        %3452 = vmatpush.bf16.xpose.msra.mxu0 0
        %3453 = vmatpush.bf16.xpose.msra.mxu0 0
        %3454 = vmatpush.bf16.xpose.msra.mxu0 0
        %3455 = vmatpush.bf16.xpose.msra.mxu0 0
        %3456 = vmatpush.bf16.xpose.msra.mxu0 0
        %3457 = vmatpush.bf16.xpose.msra.mxu0 %v3448
        %3458 = vmatmul.bf16.gmra.mxu0 %v3445
        %v3459 = vpop.f32.mrf.mxu0
        %v3460 = vadd.f32 0.0, %v3459
        %v3461 = vpop.f32.mrf.mxu0
        %3462 = vdwg.mxu0
        %v3463 = vmul.f32 %v3437, 0.5
        %v3464 = vmul.f32 %v3460, 0.5
        %v3465 = vsel %vm2651, %v3463, -inf
        %3466 = vmax.xlane.f32.xlu0 %v3465
        %v3467 = vpop.xlane.xlu0 %3466
        %v3468 = vsel %vm2651, %v3464, -inf
        %3469 = vmax.xlane.f32.xlu0 %v3468
        %v3470 = vpop.xlane.xlu0 %3469
        %v3471 = vsub.f32 %v3463, %v3467
        %v3472 = vsub.f32 %v3464, %v3470
        %v3473 = vmul.f32 %v3471, 1.442695
        %v3474 = vpow.pop %v3473
        %v3475 = vmul.f32 %v3472, 1.442695
        %v3476 = vpow.pop %v3475
        %v3477 = vsel %vm2651, %v3474, 0.0
        %3478 = vadd.xlane.f32.xlu0 %v3477
        %v3479 = vpop.xlane.xlu0 %3478
        %v3480 = vsel %vm2651, %v3476, 0.0
        %3481 = vadd.xlane.f32.xlu0 %v3480
        %v3482 = vpop.xlane.xlu0 %3481
        %v3483 = vrcp.pop %v3479
        %v3484 = vmul.f32 %v3479, %v3483
        %v3485 = vsub.f32 1.0, %v3484
        %v3486 = vmul.f32 %v3483, %v3485
        %v3487 = vadd.f32 %v3483, %v3486
        %vm3488 = vweird.f32 %v3479
        %vm3489 = vweird.f32 %v3483
        %vm3490 = vmor %vm3488, %vm3489
        %v3491 = vsel %vm3490, %v3483, %v3487
        %v3492 = vand.u32 2147483647, %v3479
        %vm3493 = vcmp.eq.f32.partialorder %v3492, 8.507059e+37
        %v3494 = vand.u32 %v3479, 2147483648
        %v3495 = vor.u32 1.1754944e-38, %v3494
        %v3496 = vsel %vm3493, %v3495, %v3491
        %v3497 = vmul.f32 %v3474, %v3496
        %v3498 = vrcp.pop %v3482
        %v3499 = vmul.f32 %v3482, %v3498
        %v3500 = vsub.f32 1.0, %v3499
        %v3501 = vmul.f32 %v3498, %v3500
        %v3502 = vadd.f32 %v3498, %v3501
        %vm3503 = vweird.f32 %v3482
        %vm3504 = vweird.f32 %v3498
        %vm3505 = vmor %vm3503, %vm3504
        %v3506 = vsel %vm3505, %v3498, %v3502
        %v3507 = vand.u32 2147483647, %v3482
        %vm3508 = vcmp.eq.f32.partialorder %v3507, 8.507059e+37
        %v3509 = vand.u32 %v3482, 2147483648
        %v3510 = vor.u32 1.1754944e-38, %v3509
        %v3511 = vsel %vm3508, %v3510, %v3506
        %v3512 = vmul.f32 %v3476, %v3511
        %v3513 = vpack.c.bf16 %v3497, %v3497
        %v3514 = vpack.c.bf16 %v3512, %v3512
        %3515 = vrot.lane.b32.xlu0 %v2869, 80
        %v3516 = vpop.permute.xlu0 %3515
        %v3519 = vsel %vm2651, %v3513, 0
        %3521 = vmatpush.bf16.msra.mxu0 0
        %3522 = vmatpush.bf16.msra.mxu0 0
        %3523 = vmatpush.bf16.msra.mxu0 0
        %3524 = vmatpush.bf16.msra.mxu0 0
        %3525 = vmatpush.bf16.msra.mxu0 0
        %3526 = vmatpush.bf16.msra.mxu0 0
        %3527 = vmatpush.bf16.msra.mxu0 0
        %3528 = vmatpush.bf16.msra.mxu0 %v3516
        %3529 = vmatmul.bf16.gmra.mxu0 %v3519
        %v3530 = vpop.f32.mrf.mxu0
        %v3531 = vadd.f32 0.0, %v3530
        %v3532 = vpop.f32.mrf.mxu0
        %3533 = vdwg.mxu0
        %3534 = vrot.lane.b32.xlu0 %v2893, 80
        %v3535 = vpop.permute.xlu0 %3534
        %v3538 = vsel %vm2651, %v3514, 0
        %3540 = vmatpush.bf16.msra.mxu0 0
        %3541 = vmatpush.bf16.msra.mxu0 0
        %3542 = vmatpush.bf16.msra.mxu0 0
        %3543 = vmatpush.bf16.msra.mxu0 0
        %3544 = vmatpush.bf16.msra.mxu0 0
        %3545 = vmatpush.bf16.msra.mxu0 0
        %3546 = vmatpush.bf16.msra.mxu0 0
        %3547 = vmatpush.bf16.msra.mxu0 %v3535
        %3548 = vmatmul.bf16.gmra.mxu0 %v3538
        %v3549 = vpop.f32.mrf.mxu0
        %v3550 = vadd.f32 0.0, %v3549
        %v3551 = vpop.f32.mrf.mxu0
        %3552 = vdwg.mxu0
        %3553 = vrot.lane.b32.xlu0 %v3005, 108
        %v3554 = vpop.permute.xlu0 %3553
        %3555 = vrot.lane.b32.xlu0 %v2869, 108
        %v3556 = vpop.permute.xlu0 %3555
        %v3558 = vsel %vm1468, %v3554, 0
        %v3561 = vsel %vm1468, %v3556, 0
        %3563 = vmatpush.bf16.xpose.msra.mxu0 0
        %3564 = vmatpush.bf16.xpose.msra.mxu0 0
        %3565 = vmatpush.bf16.xpose.msra.mxu0 0
        %3566 = vmatpush.bf16.xpose.msra.mxu0 0
        %3567 = vmatpush.bf16.xpose.msra.mxu0 0
        %3568 = vmatpush.bf16.xpose.msra.mxu0 0
        %3569 = vmatpush.bf16.xpose.msra.mxu0 0
        %3570 = vmatpush.bf16.xpose.msra.mxu0 %v3561
        %3571 = vmatmul.bf16.gmra.mxu0 %v3558
        %v3572 = vpop.f32.mrf.mxu0
        %v3573 = vadd.f32 0.0, %v3572
        %v3574 = vpop.f32.mrf.mxu0
        %3575 = vdwg.mxu0
        %3576 = vrot.lane.b32.xlu0 %v3031, 108
        %v3577 = vpop.permute.xlu0 %3576
        %3578 = vrot.lane.b32.xlu0 %v2893, 108
        %v3579 = vpop.permute.xlu0 %3578
        %v3581 = vsel %vm1468, %v3577, 0
        %v3584 = vsel %vm1468, %v3579, 0
        %3586 = vmatpush.bf16.xpose.msra.mxu0 0
        %3587 = vmatpush.bf16.xpose.msra.mxu0 0
        %3588 = vmatpush.bf16.xpose.msra.mxu0 0
        %3589 = vmatpush.bf16.xpose.msra.mxu0 0
        %3590 = vmatpush.bf16.xpose.msra.mxu0 0
        %3591 = vmatpush.bf16.xpose.msra.mxu0 0
        %3592 = vmatpush.bf16.xpose.msra.mxu0 0
        %3593 = vmatpush.bf16.xpose.msra.mxu0 %v3584
        %3594 = vmatmul.bf16.gmra.mxu0 %v3581
        %v3595 = vpop.f32.mrf.mxu0
        %v3596 = vadd.f32 0.0, %v3595
        %v3597 = vpop.f32.mrf.mxu0
        %3598 = vdwg.mxu0
        %v3599 = vmul.f32 %v3573, 0.5
        %v3600 = vmul.f32 %v3596, 0.5
        %v3601 = vsel %vm2651, %v3599, -inf
        %3602 = vmax.xlane.f32.xlu0 %v3601
        %v3603 = vpop.xlane.xlu0 %3602
        %v3604 = vsel %vm2651, %v3600, -inf
        %3605 = vmax.xlane.f32.xlu0 %v3604
        %v3606 = vpop.xlane.xlu0 %3605
        %v3607 = vsub.f32 %v3599, %v3603
        %v3608 = vsub.f32 %v3600, %v3606
        %v3609 = vmul.f32 %v3607, 1.442695
        %v3610 = vpow.pop %v3609
        %v3611 = vmul.f32 %v3608, 1.442695
        %v3612 = vpow.pop %v3611
        %v3613 = vsel %vm2651, %v3610, 0.0
        %3614 = vadd.xlane.f32.xlu0 %v3613
        %v3615 = vpop.xlane.xlu0 %3614
        %v3616 = vsel %vm2651, %v3612, 0.0
        %3617 = vadd.xlane.f32.xlu0 %v3616
        %v3618 = vpop.xlane.xlu0 %3617
        %v3619 = vrcp.pop %v3615
        %v3620 = vmul.f32 %v3615, %v3619
        %v3621 = vsub.f32 1.0, %v3620
        %v3622 = vmul.f32 %v3619, %v3621
        %v3623 = vadd.f32 %v3619, %v3622
        %vm3624 = vweird.f32 %v3615
        %vm3625 = vweird.f32 %v3619
        %vm3626 = vmor %vm3624, %vm3625
        %v3627 = vsel %vm3626, %v3619, %v3623
        %v3628 = vand.u32 2147483647, %v3615
        %vm3629 = vcmp.eq.f32.partialorder %v3628, 8.507059e+37
        %v3630 = vand.u32 %v3615, 2147483648
        %v3631 = vor.u32 1.1754944e-38, %v3630
        %v3632 = vsel %vm3629, %v3631, %v3627
        %v3633 = vmul.f32 %v3610, %v3632
        %v3634 = vrcp.pop %v3618
        %v3635 = vmul.f32 %v3618, %v3634
        %v3636 = vsub.f32 1.0, %v3635
        %v3637 = vmul.f32 %v3634, %v3636
        %v3638 = vadd.f32 %v3634, %v3637
        %vm3639 = vweird.f32 %v3618
        %vm3640 = vweird.f32 %v3634
        %vm3641 = vmor %vm3639, %vm3640
        %v3642 = vsel %vm3641, %v3634, %v3638
        %v3643 = vand.u32 2147483647, %v3618
        %vm3644 = vcmp.eq.f32.partialorder %v3643, 8.507059e+37
        %v3645 = vand.u32 %v3618, 2147483648
        %v3646 = vor.u32 1.1754944e-38, %v3645
        %v3647 = vsel %vm3644, %v3646, %v3642
        %v3648 = vmul.f32 %v3612, %v3647
        %v3649 = vpack.c.bf16 %v3633, %v3633
        %v3650 = vpack.c.bf16 %v3648, %v3648
        %3651 = vrot.lane.b32.xlu0 %v2869, 76
        %v3652 = vpop.permute.xlu0 %3651
        %v3655 = vsel %vm2651, %v3649, 0
        %3657 = vmatpush.bf16.msra.mxu0 0
        %3658 = vmatpush.bf16.msra.mxu0 0
        %3659 = vmatpush.bf16.msra.mxu0 0
        %3660 = vmatpush.bf16.msra.mxu0 0
        %3661 = vmatpush.bf16.msra.mxu0 0
        %3662 = vmatpush.bf16.msra.mxu0 0
        %3663 = vmatpush.bf16.msra.mxu0 0
        %3664 = vmatpush.bf16.msra.mxu0 %v3652
        %3665 = vmatmul.bf16.gmra.mxu0 %v3655
        %v3666 = vpop.f32.mrf.mxu0
        %v3667 = vadd.f32 0.0, %v3666
        %v3668 = vpop.f32.mrf.mxu0
        %3669 = vdwg.mxu0
        %3670 = vrot.lane.b32.xlu0 %v2893, 76
        %v3671 = vpop.permute.xlu0 %3670
        %v3674 = vsel %vm2651, %v3650, 0
        %3676 = vmatpush.bf16.msra.mxu0 0
        %3677 = vmatpush.bf16.msra.mxu0 0
        %3678 = vmatpush.bf16.msra.mxu0 0
        %3679 = vmatpush.bf16.msra.mxu0 0
        %3680 = vmatpush.bf16.msra.mxu0 0
        %3681 = vmatpush.bf16.msra.mxu0 0
        %3682 = vmatpush.bf16.msra.mxu0 0
        %3683 = vmatpush.bf16.msra.mxu0 %v3671
        %3684 = vmatmul.bf16.gmra.mxu0 %v3674
        %v3685 = vpop.f32.mrf.mxu0
        %v3686 = vadd.f32 0.0, %v3685
        %v3687 = vpop.f32.mrf.mxu0
        %3688 = vdwg.mxu0
        %3689 = vrot.lane.b32.xlu0 %v3005, 104
        %v3690 = vpop.permute.xlu0 %3689
        %3691 = vrot.lane.b32.xlu0 %v2869, 104
        %v3692 = vpop.permute.xlu0 %3691
        %v3694 = vsel %vm1468, %v3690, 0
        %v3697 = vsel %vm1468, %v3692, 0
        %3699 = vmatpush.bf16.xpose.msra.mxu0 0
        %3700 = vmatpush.bf16.xpose.msra.mxu0 0
        %3701 = vmatpush.bf16.xpose.msra.mxu0 0
        %3702 = vmatpush.bf16.xpose.msra.mxu0 0
        %3703 = vmatpush.bf16.xpose.msra.mxu0 0
        %3704 = vmatpush.bf16.xpose.msra.mxu0 0
        %3705 = vmatpush.bf16.xpose.msra.mxu0 0
        %3706 = vmatpush.bf16.xpose.msra.mxu0 %v3697
        %3707 = vmatmul.bf16.gmra.mxu0 %v3694
        %v3708 = vpop.f32.mrf.mxu0
        %v3709 = vadd.f32 0.0, %v3708
        %v3710 = vpop.f32.mrf.mxu0
        %3711 = vdwg.mxu0
        %3712 = vrot.lane.b32.xlu0 %v3031, 104
        %v3713 = vpop.permute.xlu0 %3712
        %3714 = vrot.lane.b32.xlu0 %v2893, 104
        %v3715 = vpop.permute.xlu0 %3714
        %v3717 = vsel %vm1468, %v3713, 0
        %v3720 = vsel %vm1468, %v3715, 0
        %3722 = vmatpush.bf16.xpose.msra.mxu0 0
        %3723 = vmatpush.bf16.xpose.msra.mxu0 0
        %3724 = vmatpush.bf16.xpose.msra.mxu0 0
        %3725 = vmatpush.bf16.xpose.msra.mxu0 0
        %3726 = vmatpush.bf16.xpose.msra.mxu0 0
        %3727 = vmatpush.bf16.xpose.msra.mxu0 0
        %3728 = vmatpush.bf16.xpose.msra.mxu0 0
        %3729 = vmatpush.bf16.xpose.msra.mxu0 %v3720
        %3730 = vmatmul.bf16.gmra.mxu0 %v3717
        %v3731 = vpop.f32.mrf.mxu0
        %v3732 = vadd.f32 0.0, %v3731
        %v3733 = vpop.f32.mrf.mxu0
        %3734 = vdwg.mxu0
        %v3735 = vmul.f32 %v3709, 0.5
        %v3736 = vmul.f32 %v3732, 0.5
        %v3737 = vsel %vm2651, %v3735, -inf
        %3738 = vmax.xlane.f32.xlu0 %v3737
        %v3739 = vpop.xlane.xlu0 %3738
        %v3740 = vsel %vm2651, %v3736, -inf
        %3741 = vmax.xlane.f32.xlu0 %v3740
        %v3742 = vpop.xlane.xlu0 %3741
        %v3743 = vsub.f32 %v3735, %v3739
        %v3744 = vsub.f32 %v3736, %v3742
        %v3745 = vmul.f32 %v3743, 1.442695
        %v3746 = vpow.pop %v3745
        %v3747 = vmul.f32 %v3744, 1.442695
        %v3748 = vpow.pop %v3747
        %v3749 = vsel %vm2651, %v3746, 0.0
        %3750 = vadd.xlane.f32.xlu0 %v3749
        %v3751 = vpop.xlane.xlu0 %3750
        %v3752 = vsel %vm2651, %v3748, 0.0
        %3753 = vadd.xlane.f32.xlu0 %v3752
        %v3754 = vpop.xlane.xlu0 %3753
        %v3755 = vrcp.pop %v3751
        %v3756 = vmul.f32 %v3751, %v3755
        %v3757 = vsub.f32 1.0, %v3756
        %v3758 = vmul.f32 %v3755, %v3757
        %v3759 = vadd.f32 %v3755, %v3758
        %vm3760 = vweird.f32 %v3751
        %vm3761 = vweird.f32 %v3755
        %vm3762 = vmor %vm3760, %vm3761
        %v3763 = vsel %vm3762, %v3755, %v3759
        %v3764 = vand.u32 2147483647, %v3751
        %vm3765 = vcmp.eq.f32.partialorder %v3764, 8.507059e+37
        %v3766 = vand.u32 %v3751, 2147483648
        %v3767 = vor.u32 1.1754944e-38, %v3766
        %v3768 = vsel %vm3765, %v3767, %v3763
        %v3769 = vmul.f32 %v3746, %v3768
        %v3770 = vrcp.pop %v3754
        %v3771 = vmul.f32 %v3754, %v3770
        %v3772 = vsub.f32 1.0, %v3771
        %v3773 = vmul.f32 %v3770, %v3772
        %v3774 = vadd.f32 %v3770, %v3773
        %vm3775 = vweird.f32 %v3754
        %vm3776 = vweird.f32 %v3770
        %vm3777 = vmor %vm3775, %vm3776
        %v3778 = vsel %vm3777, %v3770, %v3774
        %v3779 = vand.u32 2147483647, %v3754
        %vm3780 = vcmp.eq.f32.partialorder %v3779, 8.507059e+37
        %v3781 = vand.u32 %v3754, 2147483648
        %v3782 = vor.u32 1.1754944e-38, %v3781
        %v3783 = vsel %vm3780, %v3782, %v3778
        %v3784 = vmul.f32 %v3748, %v3783
        %v3785 = vpack.c.bf16 %v3769, %v3769
        %v3786 = vpack.c.bf16 %v3784, %v3784
        %3787 = vrot.lane.b32.xlu0 %v2869, 72
        %v3788 = vpop.permute.xlu0 %3787
        %v3791 = vsel %vm2651, %v3785, 0
        %3793 = vmatpush.bf16.msra.mxu0 0
        %3794 = vmatpush.bf16.msra.mxu0 0
        %3795 = vmatpush.bf16.msra.mxu0 0
        %3796 = vmatpush.bf16.msra.mxu0 0
        %3797 = vmatpush.bf16.msra.mxu0 0
        %3798 = vmatpush.bf16.msra.mxu0 0
        %3799 = vmatpush.bf16.msra.mxu0 0
        %3800 = vmatpush.bf16.msra.mxu0 %v3788
        %3801 = vmatmul.bf16.gmra.mxu0 %v3791
        %v3802 = vpop.f32.mrf.mxu0
        %v3803 = vadd.f32 0.0, %v3802
        %v3804 = vpop.f32.mrf.mxu0
        %3805 = vdwg.mxu0
        %3806 = vrot.lane.b32.xlu0 %v2893, 72
        %v3807 = vpop.permute.xlu0 %3806
        %v3810 = vsel %vm2651, %v3786, 0
        %3812 = vmatpush.bf16.msra.mxu0 0
        %3813 = vmatpush.bf16.msra.mxu0 0
        %3814 = vmatpush.bf16.msra.mxu0 0
        %3815 = vmatpush.bf16.msra.mxu0 0
        %3816 = vmatpush.bf16.msra.mxu0 0
        %3817 = vmatpush.bf16.msra.mxu0 0
        %3818 = vmatpush.bf16.msra.mxu0 0
        %3819 = vmatpush.bf16.msra.mxu0 %v3807
        %3820 = vmatmul.bf16.gmra.mxu0 %v3810
        %v3821 = vpop.f32.mrf.mxu0
        %v3822 = vadd.f32 0.0, %v3821
        %v3823 = vpop.f32.mrf.mxu0
        %3824 = vdwg.mxu0
        %3825 = vrot.lane.b32.xlu0 %v3005, 100
        %v3826 = vpop.permute.xlu0 %3825
        %3827 = vrot.lane.b32.xlu0 %v2869, 100
        %v3828 = vpop.permute.xlu0 %3827
        %v3830 = vsel %vm1468, %v3826, 0
        %v3833 = vsel %vm1468, %v3828, 0
        %3835 = vmatpush.bf16.xpose.msra.mxu0 0
        %3836 = vmatpush.bf16.xpose.msra.mxu0 0
        %3837 = vmatpush.bf16.xpose.msra.mxu0 0
        %3838 = vmatpush.bf16.xpose.msra.mxu0 0
        %3839 = vmatpush.bf16.xpose.msra.mxu0 0
        %3840 = vmatpush.bf16.xpose.msra.mxu0 0
        %3841 = vmatpush.bf16.xpose.msra.mxu0 0
        %3842 = vmatpush.bf16.xpose.msra.mxu0 %v3833
        %3843 = vmatmul.bf16.gmra.mxu0 %v3830
        %v3844 = vpop.f32.mrf.mxu0
        %v3845 = vadd.f32 0.0, %v3844
        %v3846 = vpop.f32.mrf.mxu0
        %3847 = vdwg.mxu0
        %3848 = vrot.lane.b32.xlu0 %v3031, 100
        %v3849 = vpop.permute.xlu0 %3848
        %3850 = vrot.lane.b32.xlu0 %v2893, 100
        %v3851 = vpop.permute.xlu0 %3850
        %v3853 = vsel %vm1468, %v3849, 0
        %v3856 = vsel %vm1468, %v3851, 0
        %3858 = vmatpush.bf16.xpose.msra.mxu0 0
        %3859 = vmatpush.bf16.xpose.msra.mxu0 0
        %3860 = vmatpush.bf16.xpose.msra.mxu0 0
        %3861 = vmatpush.bf16.xpose.msra.mxu0 0
        %3862 = vmatpush.bf16.xpose.msra.mxu0 0
        %3863 = vmatpush.bf16.xpose.msra.mxu0 0
        %3864 = vmatpush.bf16.xpose.msra.mxu0 0
        %3865 = vmatpush.bf16.xpose.msra.mxu0 %v3856
        %3866 = vmatmul.bf16.gmra.mxu0 %v3853
        %v3867 = vpop.f32.mrf.mxu0
        %v3868 = vadd.f32 0.0, %v3867
        %v3869 = vpop.f32.mrf.mxu0
        %3870 = vdwg.mxu0
        %v3871 = vmul.f32 %v3845, 0.5
        %v3872 = vmul.f32 %v3868, 0.5
        %v3873 = vsel %vm2651, %v3871, -inf
        %3874 = vmax.xlane.f32.xlu0 %v3873
        %v3875 = vpop.xlane.xlu0 %3874
        %v3876 = vsel %vm2651, %v3872, -inf
        %3877 = vmax.xlane.f32.xlu0 %v3876
        %v3878 = vpop.xlane.xlu0 %3877
        %v3879 = vsub.f32 %v3871, %v3875
        %v3880 = vsub.f32 %v3872, %v3878
        %v3881 = vmul.f32 %v3879, 1.442695
        %v3882 = vpow.pop %v3881
        %v3883 = vmul.f32 %v3880, 1.442695
        %v3884 = vpow.pop %v3883
        %v3885 = vsel %vm2651, %v3882, 0.0
        %3886 = vadd.xlane.f32.xlu0 %v3885
        %v3887 = vpop.xlane.xlu0 %3886
        %v3888 = vsel %vm2651, %v3884, 0.0
        %3889 = vadd.xlane.f32.xlu0 %v3888
        %v3890 = vpop.xlane.xlu0 %3889
        %v3891 = vrcp.pop %v3887
        %v3892 = vmul.f32 %v3887, %v3891
        %v3893 = vsub.f32 1.0, %v3892
        %v3894 = vmul.f32 %v3891, %v3893
        %v3895 = vadd.f32 %v3891, %v3894
        %vm3896 = vweird.f32 %v3887
        %vm3897 = vweird.f32 %v3891
        %vm3898 = vmor %vm3896, %vm3897
        %v3899 = vsel %vm3898, %v3891, %v3895
        %v3900 = vand.u32 2147483647, %v3887
        %vm3901 = vcmp.eq.f32.partialorder %v3900, 8.507059e+37
        %v3902 = vand.u32 %v3887, 2147483648
        %v3903 = vor.u32 1.1754944e-38, %v3902
        %v3904 = vsel %vm3901, %v3903, %v3899
        %v3905 = vmul.f32 %v3882, %v3904
        %v3906 = vrcp.pop %v3890
        %v3907 = vmul.f32 %v3890, %v3906
        %v3908 = vsub.f32 1.0, %v3907
        %v3909 = vmul.f32 %v3906, %v3908
        %v3910 = vadd.f32 %v3906, %v3909
        %vm3911 = vweird.f32 %v3890
        %vm3912 = vweird.f32 %v3906
        %vm3913 = vmor %vm3911, %vm3912
        %v3914 = vsel %vm3913, %v3906, %v3910
        %v3915 = vand.u32 2147483647, %v3890
        %vm3916 = vcmp.eq.f32.partialorder %v3915, 8.507059e+37
        %v3917 = vand.u32 %v3890, 2147483648
        %v3918 = vor.u32 1.1754944e-38, %v3917
        %v3919 = vsel %vm3916, %v3918, %v3914
        %v3920 = vmul.f32 %v3884, %v3919
        %v3921 = vpack.c.bf16 %v3905, %v3905
        %v3922 = vpack.c.bf16 %v3920, %v3920
        %3923 = vrot.lane.b32.xlu0 %v2869, 68
        %v3924 = vpop.permute.xlu0 %3923
        %v3927 = vsel %vm2651, %v3921, 0
        %3929 = vmatpush.bf16.msra.mxu0 0
        %3930 = vmatpush.bf16.msra.mxu0 0
        %3931 = vmatpush.bf16.msra.mxu0 0
        %3932 = vmatpush.bf16.msra.mxu0 0
        %3933 = vmatpush.bf16.msra.mxu0 0
        %3934 = vmatpush.bf16.msra.mxu0 0
        %3935 = vmatpush.bf16.msra.mxu0 0
        %3936 = vmatpush.bf16.msra.mxu0 %v3924
        %3937 = vmatmul.bf16.gmra.mxu0 %v3927
        %v3938 = vpop.f32.mrf.mxu0
        %v3939 = vadd.f32 0.0, %v3938
        %v3940 = vpop.f32.mrf.mxu0
        %3941 = vdwg.mxu0
        %3942 = vrot.lane.b32.xlu0 %v2893, 68
        %v3943 = vpop.permute.xlu0 %3942
        %v3946 = vsel %vm2651, %v3922, 0
        %3948 = vmatpush.bf16.msra.mxu0 0
        %3949 = vmatpush.bf16.msra.mxu0 0
        %3950 = vmatpush.bf16.msra.mxu0 0
        %3951 = vmatpush.bf16.msra.mxu0 0
        %3952 = vmatpush.bf16.msra.mxu0 0
        %3953 = vmatpush.bf16.msra.mxu0 0
        %3954 = vmatpush.bf16.msra.mxu0 0
        %3955 = vmatpush.bf16.msra.mxu0 %v3943
        %3956 = vmatmul.bf16.gmra.mxu0 %v3946
        %v3957 = vpop.f32.mrf.mxu0
        %v3958 = vadd.f32 0.0, %v3957
        %v3959 = vpop.f32.mrf.mxu0
        %3960 = vdwg.mxu0
        %3963 = vrot.lane.b32.xlu0 %v3123, 4
        %v3964 = vpop.permute.xlu0 %3963
        %3965 = vrot.lane.b32.xlu0 %v3142, 4
        %v3966 = vpop.permute.xlu0 %3965
        %3971 = vrot.lane.b32.xlu0 %v3259, 8
        %v3972 = vpop.permute.xlu0 %3971
        %3973 = vrot.lane.b32.xlu0 %v3278, 8
        %v3974 = vpop.permute.xlu0 %3973
        %3979 = vrot.lane.b32.xlu0 %v3395, 12
        %v3980 = vpop.permute.xlu0 %3979
        %3981 = vrot.lane.b32.xlu0 %v3414, 12
        %v3982 = vpop.permute.xlu0 %3981
        %3987 = vrot.lane.b32.xlu0 %v3531, 16
        %v3988 = vpop.permute.xlu0 %3987
        %3989 = vrot.lane.b32.xlu0 %v3550, 16
        %v3990 = vpop.permute.xlu0 %3989
        %3995 = vrot.lane.b32.xlu0 %v3667, 20
        %v3996 = vpop.permute.xlu0 %3995
        %3997 = vrot.lane.b32.xlu0 %v3686, 20
        %v3998 = vpop.permute.xlu0 %3997
        %4003 = vrot.lane.b32.xlu0 %v3803, 24
        %v4004 = vpop.permute.xlu0 %4003
        %4005 = vrot.lane.b32.xlu0 %v3822, 24
        %v4006 = vpop.permute.xlu0 %4005
        %4011 = vrot.lane.b32.xlu0 %v3939, 28
        %v4012 = vpop.permute.xlu0 %4011
        %4013 = vrot.lane.b32.xlu0 %v3958, 28
        %v4014 = vpop.permute.xlu0 %4013
        %v4017 = vsel %vm1468, %v2981, %v3964
        %v4018 = vsel %vm1468, %v3000, %v3966
        %v4019 = vsel %vm1514, %v4017, %v3972
        %v4020 = vsel %vm1514, %v4018, %v3974
        %v4021 = vsel %vm2648, %v4019, %v3980
        %v4022 = vsel %vm2648, %v4020, %v3982
        %v4023 = vsel %vm2651, %v4021, %v3988
        %v4024 = vsel %vm2651, %v4022, %v3990
        %v4025 = vsel %vm2654, %v4023, %v3996
        %v4026 = vsel %vm2654, %v4024, %v3998
        %v4027 = vsel %vm2657, %v4025, %v4004
        %v4028 = vsel %vm2657, %v4026, %v4006
        %v4029 = vsel %vm2660, %v4027, %v4012
        %v4030 = vsel %vm2660, %v4028, %v4014
        %v4031 = vld [vmem:[%s1395] sm:$0xf]
        %v4032 = vld [vmem:[%s1395 + $0x4] sm:$0xf]
        %v4033 = vld [vmem:[%s1395 + $0x8] sm:$0xf]
        %v4034 = vld [vmem:[%s1395 + $0xc] sm:$0xf]
        %v4035 = vld [vmem:[%s1138] sm:$0x1]
        %v4036 = vpack.c.bf16 %v4030, %v4029
        %v4038 = vperm.slane %v4035, 0
        %v4044 = vunpack.c.l.b16 %v4031
        %v4045 = vunpack.c.l.b16 %v4032
        %v4046 = vunpack.c.l.b16 %v4033
        %v4047 = vunpack.c.l.b16 %v4034
        %v4048 = vpack.c.b16 %v4045, %v4044
        %v4049 = vpack.c.b16 %v4047, %v4046
        %v4053 = vsel %vm1443, %v4036, 0
        %4055 = vmatpush.bf16.msra.mxu0 0
        %4056 = vmatpush.bf16.msra.mxu0 0
        %4057 = vmatpush.bf16.msra.mxu0 0
        %4058 = vmatpush.bf16.msra.mxu0 0
        %4059 = vmatpush.bf16.msra.mxu0 0
        %4060 = vmatpush.bf16.msra.mxu0 0
        %4061 = vmatpush.bf16.msra.mxu0 %v4049
        %4062 = vmatpush.bf16.msra.mxu0 %v4048
        %4063 = vmatmul.bf16.gmra.mxu0 %v4053
        %v4064 = vpop.f32.mrf.mxu0
        %v4065 = vadd.f32 %v4038, %v4064
        %v4066 = vpop.f32.mrf.mxu0
        %v4067 = vadd.f32 %v4038, %v4066
        %4068 = vdwg.mxu0
        %v4069 = vadd.f32 %v2764, %v4065
        %v4070 = vadd.f32 %v2765, %v4067
        %v4071 = vld [vmem:[%s1193] sm:$0x1]
        %v4072 = vld [vmem:[%s1202] sm:$0x1]
        %v4073 = vsel %vm1443, %v4069, 0.0
        %4074 = vadd.xlane.f32.xlu0 %v4073
        %v4075 = vpop.xlane.xlu0 %4074
        %v4076 = vsel %vm1443, %v4070, 0.0
        %4077 = vadd.xlane.f32.xlu0 %v4076
        %v4078 = vpop.xlane.xlu0 %4077
        %v4079 = vmul.f32 %v4075, %v2717
        %v4080 = vmul.f32 %v4078, %v2717
        %v4081 = vsub.f32 %v4069, %v4079
        %v4082 = vsub.f32 %v4070, %v4080
        %v4083 = vmul.f32 %v4081, %v4081
        %v4084 = vmul.f32 %v4082, %v4082
        %v4085 = vsel %vm1443, %v4083, 0.0
        %4086 = vadd.xlane.f32.xlu0 %v4085
        %v4087 = vpop.xlane.xlu0 %4086
        %v4088 = vsel %vm1443, %v4084, 0.0
        %4089 = vadd.xlane.f32.xlu0 %v4088
        %v4090 = vpop.xlane.xlu0 %4089
        %v4091 = vmul.f32 %v4087, %v2717
        %v4092 = vmul.f32 %v4090, %v2717
        %v4093 = vadd.f32 %v4091, 1e-05
        %v4094 = vadd.f32 %v4092, 1e-05
        %v4095 = vrsqrt.pop %v4093
        %v4096 = vmul.f32 %v4095, %v4093
        %v4097 = vmul.f32 %v4096, %v4095
        %v4098 = vmul.f32 0.5, %v4097
        %v4099 = vsub.f32 1.5, %v4098
        %v4100 = vmul.f32 %v4095, %v4099
        %vm4101 = vweird.f32 %v4093
        %vm4102 = vweird.f32 %v4095
        %vm4103 = vmor %vm4101, %vm4102
        %v4104 = vsel %vm4103, %v4095, %v4100
        %v4105 = vrsqrt.pop %v4094
        %v4106 = vmul.f32 %v4105, %v4094
        %v4107 = vmul.f32 %v4106, %v4105
        %v4108 = vmul.f32 0.5, %v4107
        %v4109 = vsub.f32 1.5, %v4108
        %v4110 = vmul.f32 %v4105, %v4109
        %vm4111 = vweird.f32 %v4094
        %vm4112 = vweird.f32 %v4105
        %vm4113 = vmor %vm4111, %vm4112
        %v4114 = vsel %vm4113, %v4105, %v4110
        %v4115 = vmul.f32 %v4081, %v4104
        %v4116 = vmul.f32 %v4082, %v4114
        %v4118 = vperm.slane %v4071, 0
        %v4120 = vmul.f32 %v4115, %v4118
        %v4121 = vmul.f32 %v4116, %v4118
        %v4123 = vperm.slane %v4072, 0
        %v4125 = vadd.f32 %v4120, %v4123
        %v4126 = vadd.f32 %v4121, %v4123
        %v4127 = vld [vmem:[%s1148] sm:$0xf]
        %v4128 = vld [vmem:[%s1148 + $0x4] sm:$0xf]
        %v4129 = vld [vmem:[%s1148 + $0x8] sm:$0xf]
        %v4130 = vld [vmem:[%s1148 + $0xc] sm:$0xf]
        %v4131 = vld [vmem:[%s1157] sm:$0x1]
        %v4132 = vpack.c.bf16 %v4126, %v4125
        %v4134 = vperm.slane %v4131, 0
        %v4140 = vunpack.c.l.b16 %v4127
        %v4141 = vunpack.c.l.b16 %v4128
        %v4142 = vunpack.c.l.b16 %v4129
        %v4143 = vunpack.c.l.b16 %v4130
        %v4144 = vpack.c.b16 %v4141, %v4140
        %v4145 = vpack.c.b16 %v4143, %v4142
        %v4149 = vsel %vm1443, %v4132, 0
        %4151 = vmatpush.bf16.msra.mxu0 0
        %4152 = vmatpush.bf16.msra.mxu0 0
        %4153 = vmatpush.bf16.msra.mxu0 0
        %4154 = vmatpush.bf16.msra.mxu0 0
        %4155 = vmatpush.bf16.msra.mxu0 0
        %4156 = vmatpush.bf16.msra.mxu0 0
        %4157 = vmatpush.bf16.msra.mxu0 %v4145
        %4158 = vmatpush.bf16.msra.mxu0 %v4144
        %4159 = vmatmul.bf16.gmra.mxu0 %v4149
        %v4160 = vpop.f32.mrf.mxu0
        %v4161 = vadd.f32 %v4134, %v4160
        %v4162 = vpop.f32.mrf.mxu0
        %v4163 = vadd.f32 %v4134, %v4162
        %4164 = vdwg.mxu0
        %v4165 = vmax.f32 %v4161, 0.0
        %v4166 = vmax.f32 %v4163, 0.0
        %v4167 = vld [vmem:[%s1400] sm:$0xf]
        %v4168 = vld [vmem:[%s1400 + $0x4] sm:$0xf]
        %v4169 = vld [vmem:[%s1400 + $0x8] sm:$0xf]
        %v4170 = vld [vmem:[%s1400 + $0xc] sm:$0xf]
        %v4171 = vld [vmem:[%s1400 + $0x10] sm:$0xf]
        %v4172 = vld [vmem:[%s1400 + $0x14] sm:$0xf]
        %v4173 = vld [vmem:[%s1400 + $0x18] sm:$0xf]
        %v4174 = vld [vmem:[%s1400 + $0x1c] sm:$0xf]
        %v4175 = vld [vmem:[%s1400 + $0x20] sm:$0xf]
        %v4176 = vld [vmem:[%s1400 + $0x24] sm:$0xf]
        %v4177 = vld [vmem:[%s1400 + $0x28] sm:$0xf]
        %v4178 = vld [vmem:[%s1400 + $0x2c] sm:$0xf]
        %v4179 = vld [vmem:[%s1400 + $0x30] sm:$0xf]
        %v4180 = vld [vmem:[%s1400 + $0x34] sm:$0xf]
        %v4181 = vld [vmem:[%s1400 + $0x38] sm:$0xf]
        %v4182 = vld [vmem:[%s1400 + $0x3c] sm:$0xf]
        %v4183 = vld [vmem:[%s1166] sm:$0x1]
        %v4184 = vpack.c.bf16 %v4166, %v4165
        %v4186 = vperm.slane %v4183, 0
        %v4204 = vunpack.c.l.b16 %v4167
        %v4205 = vunpack.c.l.b16 %v4168
        %v4206 = vunpack.c.l.b16 %v4169
        %v4207 = vunpack.c.l.b16 %v4170
        %v4208 = vunpack.c.l.b16 %v4171
        %v4209 = vunpack.c.l.b16 %v4172
        %v4210 = vunpack.c.l.b16 %v4173
        %v4211 = vunpack.c.l.b16 %v4174
        %v4212 = vunpack.c.l.b16 %v4175
        %v4213 = vunpack.c.l.b16 %v4176
        %v4214 = vunpack.c.l.b16 %v4177
        %v4215 = vunpack.c.l.b16 %v4178
        %v4216 = vunpack.c.l.b16 %v4179
        %v4217 = vunpack.c.l.b16 %v4180
        %v4218 = vunpack.c.l.b16 %v4181
        %v4219 = vunpack.c.l.b16 %v4182
        %v4220 = vpack.c.b16 %v4205, %v4204
        %v4221 = vpack.c.b16 %v4207, %v4206
        %v4222 = vpack.c.b16 %v4209, %v4208
        %v4223 = vpack.c.b16 %v4211, %v4210
        %v4224 = vpack.c.b16 %v4213, %v4212
        %v4225 = vpack.c.b16 %v4215, %v4214
        %v4226 = vpack.c.b16 %v4217, %v4216
        %v4227 = vpack.c.b16 %v4219, %v4218
        %4236 = vmatpush.bf16.msra.mxu0 %v4227
        %4237 = vmatpush.bf16.msra.mxu0 %v4226
        %4238 = vmatpush.bf16.msra.mxu0 %v4225
        %4239 = vmatpush.bf16.msra.mxu0 %v4224
        %4240 = vmatpush.bf16.msra.mxu0 %v4223
        %4241 = vmatpush.bf16.msra.mxu0 %v4222
        %4242 = vmatpush.bf16.msra.mxu0 %v4221
        %4243 = vmatpush.bf16.msra.mxu0 %v4220
        %4244 = vmatmul.bf16.gmra.mxu0 %v4184
        %v4245 = vpop.f32.mrf.mxu0
        %v4246 = vadd.f32 %v4186, %v4245
        %v4247 = vpop.f32.mrf.mxu0
        %v4248 = vadd.f32 %v4186, %v4247
        %4249 = vdwg.mxu0
        %v4250 = vadd.f32 %v4125, %v4246
        %v4251 = vadd.f32 %v4126, %v4248
        %v4252 = vld [vmem:[%s1211] sm:$0x1]
        %v4253 = vld [vmem:[%s1403] sm:$0x1]
        %v4254 = vsel %vm1443, %v4250, 0.0
        %4255 = vadd.xlane.f32.xlu0 %v4254
        %v4256 = vpop.xlane.xlu0 %4255
        %v4257 = vsel %vm1443, %v4251, 0.0
        %4258 = vadd.xlane.f32.xlu0 %v4257
        %v4259 = vpop.xlane.xlu0 %4258
        %v4260 = vmul.f32 %v4256, %v2717
        %v4261 = vmul.f32 %v4259, %v2717
        %v4262 = vsub.f32 %v4250, %v4260
        %v4263 = vsub.f32 %v4251, %v4261
        %v4264 = vmul.f32 %v4262, %v4262
        %v4265 = vmul.f32 %v4263, %v4263
        %v4266 = vsel %vm1443, %v4264, 0.0
        %4267 = vadd.xlane.f32.xlu0 %v4266
        %v4268 = vpop.xlane.xlu0 %4267
        %v4269 = vsel %vm1443, %v4265, 0.0
        %4270 = vadd.xlane.f32.xlu0 %v4269
        %v4271 = vpop.xlane.xlu0 %4270
        %v4272 = vmul.f32 %v4268, %v2717
        %v4273 = vmul.f32 %v4271, %v2717
        %v4274 = vadd.f32 %v4272, 1e-05
        %v4275 = vadd.f32 %v4273, 1e-05
        %v4276 = vrsqrt.pop %v4274
        %v4277 = vmul.f32 %v4276, %v4274
        %v4278 = vmul.f32 %v4277, %v4276
        %v4279 = vmul.f32 0.5, %v4278
        %v4280 = vsub.f32 1.5, %v4279
        %v4281 = vmul.f32 %v4276, %v4280
        %vm4282 = vweird.f32 %v4274
        %vm4283 = vweird.f32 %v4276
        %vm4284 = vmor %vm4282, %vm4283
        %v4285 = vsel %vm4284, %v4276, %v4281
        %v4286 = vrsqrt.pop %v4275
        %v4287 = vmul.f32 %v4286, %v4275
        %v4288 = vmul.f32 %v4287, %v4286
        %v4289 = vmul.f32 0.5, %v4288
        %v4290 = vsub.f32 1.5, %v4289
        %v4291 = vmul.f32 %v4286, %v4290
        %vm4292 = vweird.f32 %v4275
        %vm4293 = vweird.f32 %v4286
        %vm4294 = vmor %vm4292, %vm4293
        %v4295 = vsel %vm4294, %v4286, %v4291
        %v4296 = vmul.f32 %v4262, %v4285
        %v4297 = vmul.f32 %v4263, %v4295
        %v4299 = vperm.slane %v4252, 0
        %v4301 = vmul.f32 %v4296, %v4299
        %v4302 = vmul.f32 %v4297, %v4299
        %v4304 = vperm.slane %v4253, 0
        %v4306 = vadd.f32 %v4301, %v4304
        %v4307 = vadd.f32 %v4302, %v4304
        %4308 = vst.msk [vmem:[#allocation2] sm:$0xff] %vm1443, %v4306
        %4309 = vst.msk [vmem:[#allocation2 + $0x8] sm:$0xff] %vm1443, %v4307
        %p4310 = scmp.eq.s32.totalorder %s65, 1
        // Predicated region
        $region185: #{tpu_custom_call.1} parent=123 // pred_check
          %p4311 = pneg %p4310
        $region186: #{tpu_custom_call.1} parent=123 // pred_check_branch
          %4313 = sbr.rel (%p4311) target = $region188
        $region187: #{tpu_custom_call.1} parent=123 // pred_region
          %v4314 = vld [vmem:[%s22] sm:$0xf]
          %v4315 = vld [vmem:[%s22 + $0x4] sm:$0xf]
          %v4316 = vld [vmem:[%s22 + $0x8] sm:$0xf]
          %v4317 = vld [vmem:[%s22 + $0xc] sm:$0xf]
          %v4318 = vld [vmem:[%s23] sm:$0x1]
          %v4319 = vpack.c.bf16 %v4306, %v4306
          %v4320 = vpack.c.bf16 %v4307, %v4307
          %v4322 = vperm.slane %v4318, 0
          %v4326 = vunpack.c.l.b16 %v4319
          %v4327 = vunpack.c.l.b16 %v4320
          %v4328 = vrot.slane %v4327, 7
          %vm4329 = vcmask 1041409
          %v4330 = vsel %vm4329, %v4328, %v4326
          %v4331 = vpack.c.b16 %v4330, %v4330
          %v4336 = vunpack.c.l.b16 %v4314
          %v4337 = vunpack.c.l.b16 %v4315
          %v4338 = vunpack.c.l.b16 %v4316
          %v4339 = vunpack.c.l.b16 %v4317
          %v4340 = vpack.c.b16 %v4337, %v4336
          %v4341 = vpack.c.b16 %v4339, %v4338
          %v4345 = vsel %vm1443, %v4331, 0
          %4347 = vmatpush.bf16.msra.mxu0 0
          %4348 = vmatpush.bf16.msra.mxu0 0
          %4349 = vmatpush.bf16.msra.mxu0 0
          %4350 = vmatpush.bf16.msra.mxu0 0
          %4351 = vmatpush.bf16.msra.mxu0 0
          %4352 = vmatpush.bf16.msra.mxu0 0
          %4353 = vmatpush.bf16.msra.mxu0 %v4341
          %4354 = vmatpush.bf16.msra.mxu0 %v4340
          %4355 = vmatmul.bf16.gmra.mxu0 %v4345
          %v4356 = vpop.f32.mrf.mxu0
          %v4357 = vadd.f32 %v4322, %v4356
          %v4358 = vpop.f32.mrf.mxu0
          %4359 = vdwg.mxu0
          %v4360 = vmax.f32 %v4357, 0.0
          %v4361 = vld [vmem:[%s24] sm:$0xf]
          %v4362 = vld [vmem:[%s24 + $0x4] sm:$0xf]
          %v4363 = vld [vmem:[%s24 + $0x8] sm:$0xf]
          %v4364 = vld [vmem:[%s24 + $0xc] sm:$0xf]
          %v4365 = vld [vmem:[%s25] sm:$0x1]
          %v4366 = vpack.c.bf16 %v4360, %v4360
          %v4368 = vperm.slane %v4365, 0
          %v4374 = vunpack.c.l.b16 %v4361
          %v4375 = vunpack.c.l.b16 %v4362
          %v4376 = vunpack.c.l.b16 %v4363
          %v4377 = vunpack.c.l.b16 %v4364
          %v4378 = vpack.c.b16 %v4375, %v4374
          %v4379 = vpack.c.b16 %v4377, %v4376
          %v4383 = vsel %vm1443, %v4366, 0
          %4385 = vmatpush.bf16.msra.mxu0 0
          %4386 = vmatpush.bf16.msra.mxu0 0
          %4387 = vmatpush.bf16.msra.mxu0 0
          %4388 = vmatpush.bf16.msra.mxu0 0
          %4389 = vmatpush.bf16.msra.mxu0 0
          %4390 = vmatpush.bf16.msra.mxu0 0
          %4391 = vmatpush.bf16.msra.mxu0 %v4379
          %4392 = vmatpush.bf16.msra.mxu0 %v4378
          %4393 = vmatmul.bf16.gmra.mxu0 %v4383
          %v4394 = vpop.f32.mrf.mxu0
          %v4395 = vadd.f32 %v4368, %v4394
          %v4396 = vpop.f32.mrf.mxu0
          %4397 = vdwg.mxu0
          %vm4398 = vcmask 9216
          %4399 = vst.msk [vmem:[#allocation26] sm:$0x3] %vm4398, %v4395
        $region188: #{tpu_custom_call.1} parent=123 // pred_fallthru
          _
        // Predicated region
        $region189: #{tpu_custom_call.1} parent=123 // pred_check
          %p4400 = pneg %p746
        $region190: #{tpu_custom_call.1} parent=123 // pred_check_branch
          %4402 = sbr.rel (%p4400) target = $region192
        $region191: #{tpu_custom_call.1} parent=123 // pred_region
          %4404 = vsyncadd [#allocation5], 0
          %s4405 = smul.addr %s64, 2
          %s4406 = scalar_lea.hbm %s26, %s4405
          %s4408 = sshll.u32 [#allocation26], 4
          %s4409 = int_to_ptr.vmem [resolvable:$true] %s4408
          %s4410 = sshll.u32 %s4406, 4
          %s4411 = int_to_ptr.hbm [resolvable:$true] %s4410
          %4413 = dma.vmem_to_hbm [thread:$0]  %s4409, 32, %s4411, [#allocation5]
        $region192: #{tpu_custom_call.1} parent=123 // pred_fallthru
          _
        // Predicated region
        $region193: #{tpu_custom_call.1} parent=123 // pred_check
          %p4414 = pneg %p746
        $region194: #{tpu_custom_call.1} parent=123 // pred_check_branch
          %4416 = sbr.rel (%p4414) target = $region196
        $region195: #{tpu_custom_call.1} parent=123 // pred_region
          %4418 = dma.done [#allocation5], 32
        $region196: #{tpu_custom_call.1} parent=123 // pred_fallthru
          _
      $region124: #{tpu_custom_call.1} parent=5 // pred_fallthru
        _
      %p4419 = scmp.le.s32.totalorder 2, %s55
      // Predicated region
      $region197: #{tpu_custom_call.1} parent=5 // pred_check
        %p4420 = pneg %p4419
      $region198: #{tpu_custom_call.1} parent=5 // pred_check_branch
        %4422 = sbr.rel (%p4420) target = $region200
      $region199: #{tpu_custom_call.1} parent=5 // pred_region
        %s4423 = ssub.s32 %s55, 2
      $region200: #{tpu_custom_call.1} parent=5 // pred_fallthru
        _
    $region6: #{tpu_custom_call.1} parent=1 // loop_footer
      %s59 = sadd.s32 1, %s55
    $region7: #{tpu_custom_call.1} parent=1 // loop_footer_branch
      %54 = sbr.rel target = $region3
    $region8: #{tpu_custom_call.1} parent=1 // loop_exit
      _
    %4424 = vsyncpa [#allocation4], 1
    %s4425 = scalar_lea.sflag [#allocation4], 1
    %4426 = vsyncpa %s4425, 1
    %4427 = vsyncpa [#allocation7], 1
    %s4428 = scalar_lea.sflag [#allocation7], 1
    %4429 = vsyncpa %s4428, 1
    %4430 = vsyncpa [#allocation10], 1
    %s4431 = scalar_lea.sflag [#allocation10], 1
    %4432 = vsyncpa %s4431, 1
    %4433 = vsyncpa [#allocation13], 1
    %s4434 = scalar_lea.sflag [#allocation13], 1
    %4435 = vsyncpa %s4434, 1
    %4436 = vsyncpa [#allocation16], 1
    %s4437 = scalar_lea.sflag [#allocation16], 1
    %4438 = vsyncpa %s4437, 1
    %4439 = vsyncpa [#allocation19], 1
    %s4440 = scalar_lea.sflag [#allocation19], 1
    %4441 = vsyncpa %s4440, 1
    %4442 = vsyncpa [#allocation22], 1
    %s4443 = scalar_lea.sflag [#allocation22], 1
    %4444 = vsyncpa %s4443, 1
    %4445 = vsyncpa [#allocation25], 1
    %s4446 = scalar_lea.sflag [#allocation25], 1
    %4447 = vsyncpa %s4446, 1
    %4448 = vsyncpa [#allocation5], 1
    %s4449 = scalar_lea.sflag [#allocation5], 1
    %4450 = vsyncpa %s4449, 1

</llo_original>
